<compile_context>
chip_gen: v7x
topology: tpu7x:2x2x1
jax: 0.10.0
libtpu: 0.0.40
codegen_flags: <defaults>
</compile_context>

<pallas_src>
import functools

import jax
import jax.numpy as jnp
from jax.experimental import pallas as pl
from jax.experimental.pallas import tpu as pltpu


_LANE = 128  # lane-dense padding for the single HBM output slab


def _full_spec(shape):
    nd = len(shape)
    return pl.BlockSpec(shape, lambda i, _nd=nd: (0,) * _nd)


def _b16(v):
    return v.astype(jnp.bfloat16)


def _bdot(p, q):
    # MXU matmul: bf16 inputs, f32 accumulation.
    return jnp.dot(_b16(p), _b16(q), preferred_element_type=jnp.float32)


# ----------------------------------------------------------------------------
# Single fused kernel: whole forward pass.
# ----------------------------------------------------------------------------
def _gin_topk_fused_kernel(
        x_ref, a_ref, member_ref, member_t_ref,
        c1w1, c1b1, c1w2, c1b2,
        c2w1, c2b1, c2w2, c2b2,
        c3w1, c3b1, c3w2, c3b2,
        c4w1, c4b1, c4w2, c4b2,
        p1w, p2w, p3w, p4w,
        l1w, l1b, l2w, l2b, l3w, l3b,
        o_ref, *, ratio):
    f32 = jnp.float32
    x = x_ref[...]                                   # (N, F) f32
    a_bf = _b16(a_ref[...])                          # (N, N) integer counts, exact in bf16
    member = member_ref[...]                         # (B, N) one-hot f32
    member_t = member_t_ref[...]                     # (N, B) one-hot f32
    n = x.shape[0]
    bsz = member.shape[0]
    nh = c1w2.shape[1]                               # hidden width

    # same-graph (N, N) mask built on the (idle) MXU instead of VPU compares
    same = jnp.dot(_b16(member_t), _b16(member),
                   preferred_element_type=f32) > 0.5

    # loop-invariant helpers hoisted out of the 4-layer loop
    row_i = jax.lax.broadcasted_iota(jnp.int32, (n, n), 0)
    col_j = jax.lax.broadcasted_iota(jnp.int32, (n, n), 1)
    tie_lt = col_j < row_i                           # deterministic tie-break
    iota_b = jax.lax.broadcasted_iota(jnp.int32, (bsz, 1), 0)
    onehots = tuple((iota_b == g).astype(f32) for g in range(bsz))  # (B,1) each

    convs = ((c1w1, c1b1, c1w2, c1b2), (c2w1, c2b1, c2w2, c2b2),
             (c3w1, c3b1, c3w2, c3b2), (c4w1, c4b1, c4w2, c4b2))
    pools = (p1w, p2w, p3w, p4w)

    mask = jnp.ones((n, 1), f32)                     # cumulative keep mask
    gmp_sum = jnp.zeros((bsz, nh), f32)              # sum of per-layer global max pools
    gap_sum = jnp.zeros((bsz, nh), f32)              # sum of per-layer global mean pools
    neg = jnp.float32(-3.0e38)

    for layer in range(4):
        w1r, b1r, w2r, b2r = convs[layer]

        # ---- GINConv (eps = 0) with the outer F.relu fused ------------------
        # Rows of x for dropped nodes are exactly zero, so A @ x equals the
        # aggregation over the filtered adjacency; A itself is never rewritten.
        agg = jnp.dot(a_bf, _b16(x), preferred_element_type=f32)
        h = x + agg
        h = _bdot(h, w1r[...]) + b1r[...]
        h = jnp.maximum(h, 0.0)
        h = _bdot(h, w2r[...]) + b2r[...]
        x = jnp.maximum(h, 0.0)

        # ---- TopKPooling(ratio) via the cumulative keep mask ----------------
        pw = pools[layer][...]                       # (1, H)
        wnorm = jnp.sqrt(jnp.sum(pw * pw))
        score = jnp.sum(x * pw, axis=1, keepdims=True) / wnorm     # (N, 1)
        score_row = jnp.transpose(score)                           # (1, N)
        mask_row = jnp.transpose(mask)                             # (1, N)
        valid = jnp.logical_and(same, mask_row > 0.5)              # (N, N)
        greater = jnp.logical_or(
            score_row > score,
            jnp.logical_and(score_row == score, tie_lt))           # det. ties
        rank = jnp.sum(jnp.where(jnp.logical_and(valid, greater), 1.0, 0.0),
                       axis=1, keepdims=True)                      # (N, 1)
        n_active = jnp.sum(jnp.where(valid, 1.0, 0.0),
                           axis=1, keepdims=True)                  # (N, 1)
        k = jnp.ceil(ratio * n_active)
        keep = jnp.logical_and(mask > 0.5, rank < k)
        keep_f = keep.astype(f32)
        # tanh is monotonic, so ranking on the raw score matches PyG's ranking
        # on tanh(score); the kept features are scaled by tanh(score).
        x = x * jnp.tanh(score) * keep_f             # dropped rows become exactly 0
        mask = keep_f

        # ---- global max / mean pool over surviving nodes --------------------
        mm = member * jnp.transpose(mask)            # (B, N) masked membership
        cnt = jnp.sum(mm, axis=1, keepdims=True)     # (B, 1)
        ssum = _bdot(mm, x)                          # (B, H) segment sums on MXU
        gap_sum = gap_sum + ssum / jnp.maximum(cnt, 1.0)   # empty-graph guard
        for g in range(bsz):                         # B is tiny & static
            selg = (member_t[:, g:g + 1] * mask) > 0.5      # (N, 1), no transpose
            xg = jnp.where(selg, x, neg)
            rmax = jnp.max(xg, axis=0, keepdims=True)       # (1, H)
            rmax = jnp.where(cnt[g:g + 1, :] > 0.5, rmax, 0.0)
            gmp_sum = gmp_sum + onehots[g] * rmax

    # ---- MLP head: relu(lin1) -> dropout -> relu(lin2) -> lin3 --------------
    # cat([gmp, gap]) @ W1 is done as a split matmul to avoid a lane concat.
    w1full = l1w[...]                                # (2H, H)
    h1 = (_bdot(gmp_sum, w1full[:nh, :]) + _bdot(gap_sum, w1full[nh:, :])
          + l1b[...])
    h1 = jnp.maximum(h1, 0.0)
    # TODO(synk): F.dropout(p=0.5, training=self.training) treated as identity
    # (eval mode); training-mode dropout would use pltpu.prng_seed/prng_random_bits.
    h2 = jnp.maximum(_bdot(h1, l2w[...]) + l2b[...], 0.0)
    # lin3 weights/bias are zero-padded to 128 output columns -> one lane-dense store.
    o_ref[...] = _bdot(h2, l3w[...]) + l3b[...]


# ----------------------------------------------------------------------------
# Wrapper: single pallas_call for the whole forward pass.
# ----------------------------------------------------------------------------
def gin_topk_forward(x, a, member, params, *, ratio=0.8):
    b = member.shape[0]
    member_t = jnp.transpose(member)

    # Pad lin3 to a lane-dense 128-wide output (zero columns), slice after.
    w3, b3 = params["lin3"]
    num_class = w3.shape[1]
    w3p = jnp.zeros((w3.shape[0], _LANE), jnp.float32).at[:, :num_class].set(w3)
    b3p = jnp.zeros((1, _LANE), jnp.float32).at[:, :num_class].set(b3)

    args = [x, a, member, member_t]
    for l in range(1, 5):
        args.extend(params[f"conv{l}"])
    for l in range(1, 5):
        args.append(params[f"pool{l}"])
    args.extend(params["lin1"])
    args.extend(params["lin2"])
    args.extend([w3p, b3p])

    kernel = functools.partial(_gin_topk_fused_kernel, ratio=ratio)
    out = pl.pallas_call(
        kernel,
        grid=(1,),
        in_specs=[_full_spec(arg.shape) for arg in args],
        out_specs=_full_spec((b, _LANE)),
        out_shape=jax.ShapeDtypeStruct((b, _LANE), jnp.float32),
        compiler_params=pltpu.CompilerParams(
            dimension_semantics=("arbitrary",),
            vmem_limit_bytes=32 * 1024 * 1024),
    )(*args)
    return out[:, :num_class]


def _linear_params(key, fan_in, fan_out):
    kw, kb = jax.random.split(key)
    bound = 1.0 / (fan_in ** 0.5)
    w = jax.random.uniform(kw, (fan_in, fan_out), jnp.float32, -bound, bound)
    b = jax.random.uniform(kb, (1, fan_out), jnp.float32, -bound, bound)
    return w, b


if __name__ == "__main__":
    num_feature, nhid, num_class = 8, 32, 3
    nodes_per_graph, num_graphs = 8, 2
    N = nodes_per_graph * num_graphs

    root = jax.random.PRNGKey(0)
    kx, kp = jax.random.split(root)
    keys = list(jax.random.split(kp, 15))
    ki = iter(keys)

    params = {}
    w1, b1 = _linear_params(next(ki), num_feature, nhid)
    w2, b2 = _linear_params(next(ki), nhid, nhid)
    params["conv1"] = (w1, b1, w2, b2)
    for l in (2, 3, 4):
        w1, b1 = _linear_params(next(ki), nhid, nhid)
        w2, b2 = _linear_params(next(ki), nhid, nhid)
        params[f"conv{l}"] = (w1, b1, w2, b2)
    for l in (1, 2, 3, 4):
        bound = 1.0 / (nhid ** 0.5)
        params[f"pool{l}"] = jax.random.uniform(next(ki), (1, nhid), jnp.float32,
                                                -bound, bound)
    params["lin1"] = _linear_params(next(ki), 2 * nhid, nhid)
    params["lin2"] = _linear_params(next(ki), nhid, nhid // 2)
    params["lin3"] = _linear_params(next(ki), nhid // 2, num_class)

    # node features
    x = jax.random.normal(kx, (N, num_feature), jnp.float32)

    # deterministic edges: bidirectional ring + one chord per graph
    src, dst = [], []
    for g in range(num_graphs):
        base = g * nodes_per_graph
        for i in range(nodes_per_graph):
            j = (i + 1) % nodes_per_graph
            src += [base + i, base + j]
            dst += [base + j, base + i]
        src += [base + 0, base + 3]
        dst += [base + 3, base + 0]
    edge_index = jnp.array([src, dst], dtype=jnp.int32)

    # dense adjacency: A[i, j] = #edges j -> i (GIN target-sum aggregation)
    A = jnp.zeros((N, N), jnp.float32).at[edge_index[1], edge_index[0]].add(1.0)

    batch_1d = jnp.repeat(jnp.arange(num_graphs, dtype=jnp.int32), nodes_per_graph)
    member = (batch_1d[None, :] ==
              jnp.arange(num_graphs, dtype=jnp.int32)[:, None]).astype(jnp.float32)

    out = gin_topk_forward(x, A, member, params)
    out = jax.block_until_ready(out)
    assert out.shape == (num_graphs, num_class)
    assert bool(jnp.all(jnp.isfinite(out)))
    print("KERNEL_OK")
</pallas_src>

<mosaic_0001>
module attributes {stable_mosaic.version = 11 : i64} {
  func.func @_gin_topk_fused_kernel(%arg0: i32, %arg1: memref<16x8xf32, #tpu.memory_space<vmem>>, %arg2: memref<16x16xf32, #tpu.memory_space<vmem>>, %arg3: memref<2x16xf32, #tpu.memory_space<vmem>>, %arg4: memref<16x2xf32, #tpu.memory_space<vmem>>, %arg5: memref<8x32xf32, #tpu.memory_space<vmem>>, %arg6: memref<1x32xf32, #tpu.memory_space<vmem>>, %arg7: memref<32x32xf32, #tpu.memory_space<vmem>>, %arg8: memref<1x32xf32, #tpu.memory_space<vmem>>, %arg9: memref<32x32xf32, #tpu.memory_space<vmem>>, %arg10: memref<1x32xf32, #tpu.memory_space<vmem>>, %arg11: memref<32x32xf32, #tpu.memory_space<vmem>>, %arg12: memref<1x32xf32, #tpu.memory_space<vmem>>, %arg13: memref<32x32xf32, #tpu.memory_space<vmem>>, %arg14: memref<1x32xf32, #tpu.memory_space<vmem>>, %arg15: memref<32x32xf32, #tpu.memory_space<vmem>>, %arg16: memref<1x32xf32, #tpu.memory_space<vmem>>, %arg17: memref<32x32xf32, #tpu.memory_space<vmem>>, %arg18: memref<1x32xf32, #tpu.memory_space<vmem>>, %arg19: memref<32x32xf32, #tpu.memory_space<vmem>>, %arg20: memref<1x32xf32, #tpu.memory_space<vmem>>, %arg21: memref<1x32xf32, #tpu.memory_space<vmem>>, %arg22: memref<1x32xf32, #tpu.memory_space<vmem>>, %arg23: memref<1x32xf32, #tpu.memory_space<vmem>>, %arg24: memref<1x32xf32, #tpu.memory_space<vmem>>, %arg25: memref<64x32xf32, #tpu.memory_space<vmem>>, %arg26: memref<1x32xf32, #tpu.memory_space<vmem>>, %arg27: memref<32x16xf32, #tpu.memory_space<vmem>>, %arg28: memref<1x16xf32, #tpu.memory_space<vmem>>, %arg29: memref<16x128xf32, #tpu.memory_space<vmem>>, %arg30: memref<1x128xf32, #tpu.memory_space<vmem>>, %arg31: memref<2x128xf32, #tpu.memory_space<vmem>>) attributes {dimension_semantics = [#tpu.dimension_semantics<arbitrary>], iteration_bounds = array<i64: 1>, scalar_prefetch = 0 : i64, scratch_operands = 0 : i64, tpu.core_type = #tpu.core_type<tc>, window_params = [{pipeline_mode = #tpu.pipeline_mode<synchronous>, transform_indices = @transform_0, window_bounds = array<i64: 16, 8>}, {pipeline_mode = #tpu.pipeline_mode<synchronous>, transform_indices = @transform_1, window_bounds = array<i64: 16, 16>}, {pipeline_mode = #tpu.pipeline_mode<synchronous>, transform_indices = @transform_2, window_bounds = array<i64: 2, 16>}, {pipeline_mode = #tpu.pipeline_mode<synchronous>, transform_indices = @transform_3, window_bounds = array<i64: 16, 2>}, {pipeline_mode = #tpu.pipeline_mode<synchronous>, transform_indices = @transform_4, window_bounds = array<i64: 8, 32>}, {pipeline_mode = #tpu.pipeline_mode<synchronous>, transform_indices = @transform_5, window_bounds = array<i64: 1, 32>}, {pipeline_mode = #tpu.pipeline_mode<synchronous>, transform_indices = @transform_6, window_bounds = array<i64: 32, 32>}, {pipeline_mode = #tpu.pipeline_mode<synchronous>, transform_indices = @transform_7, window_bounds = array<i64: 1, 32>}, {pipeline_mode = #tpu.pipeline_mode<synchronous>, transform_indices = @transform_8, window_bounds = array<i64: 32, 32>}, {pipeline_mode = #tpu.pipeline_mode<synchronous>, transform_indices = @transform_9, window_bounds = array<i64: 1, 32>}, {pipeline_mode = #tpu.pipeline_mode<synchronous>, transform_indices = @transform_10, window_bounds = array<i64: 32, 32>}, {pipeline_mode = #tpu.pipeline_mode<synchronous>, transform_indices = @transform_11, window_bounds = array<i64: 1, 32>}, {pipeline_mode = #tpu.pipeline_mode<synchronous>, transform_indices = @transform_12, window_bounds = array<i64: 32, 32>}, {pipeline_mode = #tpu.pipeline_mode<synchronous>, transform_indices = @transform_13, window_bounds = array<i64: 1, 32>}, {pipeline_mode = #tpu.pipeline_mode<synchronous>, transform_indices = @transform_14, window_bounds = array<i64: 32, 32>}, {pipeline_mode = #tpu.pipeline_mode<synchronous>, transform_indices = @transform_15, window_bounds = array<i64: 1, 32>}, {pipeline_mode = #tpu.pipeline_mode<synchronous>, transform_indices = @transform_16, window_bounds = array<i64: 32, 32>}, {pipeline_mode = #tpu.pipeline_mode<synchronous>, transform_indices = @transform_17, window_bounds = array<i64: 1, 32>}, {pipeline_mode = #tpu.pipeline_mode<synchronous>, transform_indices = @transform_18, window_bounds = array<i64: 32, 32>}, {pipeline_mode = #tpu.pipeline_mode<synchronous>, transform_indices = @transform_19, window_bounds = array<i64: 1, 32>}, {pipeline_mode = #tpu.pipeline_mode<synchronous>, transform_indices = @transform_20, window_bounds = array<i64: 1, 32>}, {pipeline_mode = #tpu.pipeline_mode<synchronous>, transform_indices = @transform_21, window_bounds = array<i64: 1, 32>}, {pipeline_mode = #tpu.pipeline_mode<synchronous>, transform_indices = @transform_22, window_bounds = array<i64: 1, 32>}, {pipeline_mode = #tpu.pipeline_mode<synchronous>, transform_indices = @transform_23, window_bounds = array<i64: 1, 32>}, {pipeline_mode = #tpu.pipeline_mode<synchronous>, transform_indices = @transform_24, window_bounds = array<i64: 64, 32>}, {pipeline_mode = #tpu.pipeline_mode<synchronous>, transform_indices = @transform_25, window_bounds = array<i64: 1, 32>}, {pipeline_mode = #tpu.pipeline_mode<synchronous>, transform_indices = @transform_26, window_bounds = array<i64: 32, 16>}, {pipeline_mode = #tpu.pipeline_mode<synchronous>, transform_indices = @transform_27, window_bounds = array<i64: 1, 16>}, {pipeline_mode = #tpu.pipeline_mode<synchronous>, transform_indices = @transform_28, window_bounds = array<i64: 16, 128>}, {pipeline_mode = #tpu.pipeline_mode<synchronous>, transform_indices = @transform_29, window_bounds = array<i64: 1, 128>}, {pipeline_mode = #tpu.pipeline_mode<synchronous>, transform_indices = @transform_30, window_bounds = array<i64: 2, 128>}]} {
    %c0 = arith.constant 0 : index
    %c0_0 = arith.constant 0 : index
    %0 = vector.load %arg1[%c0, %c0_0] : memref<16x8xf32, #tpu.memory_space<vmem>>, vector<16x8xf32>
    %c0_1 = arith.constant 0 : index
    %c0_2 = arith.constant 0 : index
    %1 = vector.load %arg2[%c0_1, %c0_2] : memref<16x16xf32, #tpu.memory_space<vmem>>, vector<16x16xf32>
    %2 = arith.truncf %1 : vector<16x16xf32> to vector<16x16xbf16>
    %c0_3 = arith.constant 0 : index
    %c0_4 = arith.constant 0 : index
    %3 = vector.load %arg3[%c0_3, %c0_4] : memref<2x16xf32, #tpu.memory_space<vmem>>, vector<2x16xf32>
    %c0_5 = arith.constant 0 : index
    %c0_6 = arith.constant 0 : index
    %4 = vector.load %arg4[%c0_5, %c0_6] : memref<16x2xf32, #tpu.memory_space<vmem>>, vector<16x2xf32>
    %5 = arith.truncf %4 : vector<16x2xf32> to vector<16x2xbf16>
    %6 = arith.truncf %3 : vector<2x16xf32> to vector<2x16xbf16>
    %cst = arith.constant dense<0.000000e+00> : vector<16x16xf32>
    %7 = tpu.matmul %5, %6, %cst {dimension_numbers = #tpu.dot_dimension_numbers<[1], [0], [0], [1], [0, 0, 1, 1], [], []>} : vector<16x2xbf16>, vector<2x16xbf16>, vector<16x16xf32> -> vector<16x16xf32>
    %cst_7 = arith.constant 5.000000e-01 : f32
    %8 = vector.broadcast %cst_7 : f32 to vector<16x16xf32>
    %9 = arith.cmpf ogt, %7, %8 : vector<16x16xf32>
    %10 = tpu.iota {dimensions = array<i32: 0>} : vector<16x16xi32>
    %11 = tpu.iota {dimensions = array<i32: 1>} : vector<16x16xi32>
    %12 = arith.cmpi slt, %11, %10 : vector<16x16xi32>
    %13 = tpu.iota {dimensions = array<i32: 0>} : vector<2x1xi32>
    %c0_i32 = arith.constant 0 : i32
    %14 = vector.broadcast %c0_i32 : i32 to vector<2x1xi32>
    %15 = arith.cmpi eq, %13, %14 : vector<2x1xi32>
    %16 = arith.extui %15 : vector<2x1xi1> to vector<2x1xi32>
    %17 = arith.sitofp %16 : vector<2x1xi32> to vector<2x1xf32>
    %c1_i32 = arith.constant 1 : i32
    %18 = vector.broadcast %c1_i32 : i32 to vector<2x1xi32>
    %19 = arith.cmpi eq, %13, %18 : vector<2x1xi32>
    %20 = arith.extui %19 : vector<2x1xi1> to vector<2x1xi32>
    %21 = arith.sitofp %20 : vector<2x1xi32> to vector<2x1xf32>
    %cst_8 = arith.constant 1.000000e+00 : f32
    %22 = vector.broadcast %cst_8 : f32 to vector<16x1xf32>
    %cst_9 = arith.constant 0.000000e+00 : f32
    %23 = vector.broadcast %cst_9 : f32 to vector<2x32xf32>
    %cst_10 = arith.constant 0.000000e+00 : f32
    %24 = vector.broadcast %cst_10 : f32 to vector<2x32xf32>
    %25 = arith.truncf %0 : vector<16x8xf32> to vector<16x8xbf16>
    %cst_11 = arith.constant dense<0.000000e+00> : vector<16x8xf32>
    %26 = tpu.matmul %2, %25, %cst_11 {dimension_numbers = #tpu.dot_dimension_numbers<[1], [0], [0], [1], [0, 0, 1, 1], [], []>} : vector<16x16xbf16>, vector<16x8xbf16>, vector<16x8xf32> -> vector<16x8xf32>
    %27 = arith.addf %0, %26 : vector<16x8xf32>
    %c0_12 = arith.constant 0 : index
    %c0_13 = arith.constant 0 : index
    %28 = vector.load %arg5[%c0_12, %c0_13] : memref<8x32xf32, #tpu.memory_space<vmem>>, vector<8x32xf32>
    %29 = arith.truncf %27 : vector<16x8xf32> to vector<16x8xbf16>
    %30 = arith.truncf %28 : vector<8x32xf32> to vector<8x32xbf16>
    %cst_14 = arith.constant dense<0.000000e+00> : vector<16x32xf32>
    %31 = tpu.matmul %29, %30, %cst_14 {dimension_numbers = #tpu.dot_dimension_numbers<[1], [0], [0], [1], [0, 0, 1, 1], [], []>} : vector<16x8xbf16>, vector<8x32xbf16>, vector<16x32xf32> -> vector<16x32xf32>
    %c0_15 = arith.constant 0 : index
    %c0_16 = arith.constant 0 : index
    %32 = vector.load %arg6[%c0_15, %c0_16] : memref<1x32xf32, #tpu.memory_space<vmem>>, vector<1x32xf32>
    %33 = vector.broadcast %32 : vector<1x32xf32> to vector<16x32xf32>
    %34 = arith.addf %31, %33 : vector<16x32xf32>
    %cst_17 = arith.constant 0.000000e+00 : f32
    %35 = vector.broadcast %cst_17 : f32 to vector<16x32xf32>
    %36 = arith.maximumf %34, %35 : vector<16x32xf32>
    %c0_18 = arith.constant 0 : index
    %c0_19 = arith.constant 0 : index
    %37 = vector.load %arg7[%c0_18, %c0_19] : memref<32x32xf32, #tpu.memory_space<vmem>>, vector<32x32xf32>
    %38 = arith.truncf %36 : vector<16x32xf32> to vector<16x32xbf16>
    %39 = arith.truncf %37 : vector<32x32xf32> to vector<32x32xbf16>
    %cst_20 = arith.constant dense<0.000000e+00> : vector<16x32xf32>
    %40 = tpu.matmul %38, %39, %cst_20 {dimension_numbers = #tpu.dot_dimension_numbers<[1], [0], [0], [1], [0, 0, 1, 1], [], []>} : vector<16x32xbf16>, vector<32x32xbf16>, vector<16x32xf32> -> vector<16x32xf32>
    %c0_21 = arith.constant 0 : index
    %c0_22 = arith.constant 0 : index
    %41 = vector.load %arg8[%c0_21, %c0_22] : memref<1x32xf32, #tpu.memory_space<vmem>>, vector<1x32xf32>
    %42 = vector.broadcast %41 : vector<1x32xf32> to vector<16x32xf32>
    %43 = arith.addf %40, %42 : vector<16x32xf32>
    %cst_23 = arith.constant 0.000000e+00 : f32
    %44 = vector.broadcast %cst_23 : f32 to vector<16x32xf32>
    %45 = arith.maximumf %43, %44 : vector<16x32xf32>
    %c0_24 = arith.constant 0 : index
    %c0_25 = arith.constant 0 : index
    %46 = vector.load %arg21[%c0_24, %c0_25] : memref<1x32xf32, #tpu.memory_space<vmem>>, vector<1x32xf32>
    %47 = arith.mulf %46, %46 : vector<1x32xf32>
    %48 = vector.shape_cast %47 : vector<1x32xf32> to vector<1x1x32xf32>
    %cst_26 = arith.constant dense<0.000000e+00> : vector<1xf32>
    %49 = vector.multi_reduction <add>, %48, %cst_26 [1, 2] : vector<1x1x32xf32> to vector<1xf32>
    %50 = vector.shape_cast %49 : vector<1xf32> to vector<1x1x1xf32>
    %51 = vector.extract %50[0, 0, 0] : f32 from vector<1x1x1xf32>
    %52 = math.sqrt %51 : f32
    %53 = vector.broadcast %46 : vector<1x32xf32> to vector<16x32xf32>
    %54 = arith.mulf %45, %53 : vector<16x32xf32>
    %cst_27 = arith.constant dense<0.000000e+00> : vector<16xf32>
    %55 = vector.multi_reduction <add>, %54, %cst_27 [1] : vector<16x32xf32> to vector<16xf32>
    %56 = vector.shape_cast %55 : vector<16xf32> to vector<16x1xf32>
    %57 = vector.broadcast %52 : f32 to vector<16x1xf32>
    %58 = arith.divf %56, %57 : vector<16x1xf32>
    %59 = tpu.transpose %58, [1, 0] : vector<16x1xf32> -> vector<1x16xf32>
    %60 = tpu.transpose %22, [1, 0] : vector<16x1xf32> -> vector<1x16xf32>
    %cst_28 = arith.constant 5.000000e-01 : f32
    %61 = vector.broadcast %cst_28 : f32 to vector<1x16xf32>
    %62 = arith.cmpf ogt, %60, %61 : vector<1x16xf32>
    %63 = vector.broadcast %62 : vector<1x16xi1> to vector<16x16xi1>
    %64 = arith.andi %9, %63 : vector<16x16xi1>
    %65 = vector.broadcast %59 : vector<1x16xf32> to vector<16x16xf32>
    %66 = vector.broadcast %58 : vector<16x1xf32> to vector<16x16xf32>
    %67 = arith.cmpf ogt, %65, %66 : vector<16x16xf32>
    %68 = vector.broadcast %59 : vector<1x16xf32> to vector<16x16xf32>
    %69 = vector.broadcast %58 : vector<16x1xf32> to vector<16x16xf32>
    %70 = arith.cmpf oeq, %68, %69 : vector<16x16xf32>
    %71 = arith.andi %70, %12 : vector<16x16xi1>
    %72 = arith.ori %67, %71 : vector<16x16xi1>
    %73 = arith.andi %64, %72 : vector<16x16xi1>
    %cst_29 = arith.constant 1.000000e+00 : f32
    %cst_30 = arith.constant 0.000000e+00 : f32
    %74 = vector.broadcast %cst_29 : f32 to vector<16x16xf32>
    %75 = vector.broadcast %cst_30 : f32 to vector<16x16xf32>
    %76 = arith.select %73, %74, %75 : vector<16x16xi1>, vector<16x16xf32>
    %cst_31 = arith.constant dense<0.000000e+00> : vector<16xf32>
    %77 = vector.multi_reduction <add>, %76, %cst_31 [1] : vector<16x16xf32> to vector<16xf32>
    %78 = vector.shape_cast %77 : vector<16xf32> to vector<16x1xf32>
    %cst_32 = arith.constant 1.000000e+00 : f32
    %cst_33 = arith.constant 0.000000e+00 : f32
    %79 = vector.broadcast %cst_32 : f32 to vector<16x16xf32>
    %80 = vector.broadcast %cst_33 : f32 to vector<16x16xf32>
    %81 = arith.select %64, %79, %80 : vector<16x16xi1>, vector<16x16xf32>
    %cst_34 = arith.constant dense<0.000000e+00> : vector<16xf32>
    %82 = vector.multi_reduction <add>, %81, %cst_34 [1] : vector<16x16xf32> to vector<16xf32>
    %83 = vector.shape_cast %82 : vector<16xf32> to vector<16x1xf32>
    %cst_35 = arith.constant 8.000000e-01 : f32
    %84 = vector.broadcast %cst_35 : f32 to vector<16x1xf32>
    %85 = arith.mulf %84, %83 : vector<16x1xf32>
    %86 = math.ceil %85 : vector<16x1xf32>
    %cst_36 = arith.constant 5.000000e-01 : f32
    %87 = vector.broadcast %cst_36 : f32 to vector<16x1xf32>
    %88 = arith.cmpf ogt, %22, %87 : vector<16x1xf32>
    %89 = arith.cmpf olt, %78, %86 : vector<16x1xf32>
    %90 = arith.andi %88, %89 : vector<16x1xi1>
    %91 = arith.extui %90 : vector<16x1xi1> to vector<16x1xi32>
    %92 = arith.sitofp %91 : vector<16x1xi32> to vector<16x1xf32>
    %93 = math.tanh %58 : vector<16x1xf32>
    %94 = vector.broadcast %93 : vector<16x1xf32> to vector<16x32xf32>
    %95 = arith.mulf %45, %94 : vector<16x32xf32>
    %96 = vector.broadcast %92 : vector<16x1xf32> to vector<16x32xf32>
    %97 = arith.mulf %95, %96 : vector<16x32xf32>
    %98 = tpu.transpose %92, [1, 0] : vector<16x1xf32> -> vector<1x16xf32>
    %99 = vector.broadcast %98 : vector<1x16xf32> to vector<2x16xf32>
    %100 = arith.mulf %3, %99 : vector<2x16xf32>
    %cst_37 = arith.constant dense<0.000000e+00> : vector<2xf32>
    %101 = vector.multi_reduction <add>, %100, %cst_37 [1] : vector<2x16xf32> to vector<2xf32>
    %102 = vector.shape_cast %101 : vector<2xf32> to vector<2x1xf32>
    %103 = arith.truncf %100 : vector<2x16xf32> to vector<2x16xbf16>
    %104 = arith.truncf %97 : vector<16x32xf32> to vector<16x32xbf16>
    %cst_38 = arith.constant dense<0.000000e+00> : vector<2x32xf32>
    %105 = tpu.matmul %103, %104, %cst_38 {dimension_numbers = #tpu.dot_dimension_numbers<[1], [0], [0], [1], [0, 0, 1, 1], [], []>} : vector<2x16xbf16>, vector<16x32xbf16>, vector<2x32xf32> -> vector<2x32xf32>
    %cst_39 = arith.constant 1.000000e+00 : f32
    %106 = vector.broadcast %cst_39 : f32 to vector<2x1xf32>
    %107 = arith.maximumf %102, %106 : vector<2x1xf32>
    %108 = vector.broadcast %107 : vector<2x1xf32> to vector<2x32xf32>
    %109 = arith.divf %105, %108 : vector<2x32xf32>
    %110 = arith.addf %24, %109 : vector<2x32xf32>
    %111 = vector.extract_strided_slice %4 {offsets = [0, 0], sizes = [16, 1], strides = [1, 1]} : vector<16x2xf32> to vector<16x1xf32>
    %112 = arith.mulf %111, %92 : vector<16x1xf32>
    %cst_40 = arith.constant 5.000000e-01 : f32
    %113 = vector.broadcast %cst_40 : f32 to vector<16x1xf32>
    %114 = arith.cmpf ogt, %112, %113 : vector<16x1xf32>
    %cst_41 = arith.constant -3.000000e+38 : f32
    %115 = vector.shape_cast %114 : vector<16x1xi1> to vector<16x1xi1>
    %116 = vector.broadcast %115 : vector<16x1xi1> to vector<16x32xi1>
    %117 = vector.broadcast %cst_41 : f32 to vector<16x32xf32>
    %118 = arith.select %116, %97, %117 : vector<16x32xi1>, vector<16x32xf32>
    %cst_42 = arith.constant dense<0xFF800000> : vector<32xf32>
    %119 = vector.multi_reduction <maximumf>, %118, %cst_42 [0] : vector<16x32xf32> to vector<32xf32>
    %120 = vector.shape_cast %119 : vector<32xf32> to vector<1x32xf32>
    %121 = vector.extract_strided_slice %102 {offsets = [0, 0], sizes = [1, 1], strides = [1, 1]} : vector<2x1xf32> to vector<1x1xf32>
    %cst_43 = arith.constant 5.000000e-01 : f32
    %122 = vector.broadcast %cst_43 : f32 to vector<1x1xf32>
    %123 = arith.cmpf ogt, %121, %122 : vector<1x1xf32>
    %cst_44 = arith.constant 0.000000e+00 : f32
    %124 = vector.shape_cast %123 : vector<1x1xi1> to vector<1x1xi1>
    %125 = vector.broadcast %124 : vector<1x1xi1> to vector<1x32xi1>
    %126 = vector.broadcast %cst_44 : f32 to vector<1x32xf32>
    %127 = arith.select %125, %120, %126 : vector<1x32xi1>, vector<1x32xf32>
    %128 = vector.broadcast %17 : vector<2x1xf32> to vector<2x32xf32>
    %129 = vector.broadcast %127 : vector<1x32xf32> to vector<2x32xf32>
    %130 = arith.mulf %128, %129 : vector<2x32xf32>
    %131 = arith.addf %23, %130 : vector<2x32xf32>
    %132 = vector.extract_strided_slice %4 {offsets = [0, 1], sizes = [16, 1], strides = [1, 1]} : vector<16x2xf32> to vector<16x1xf32>
    %133 = arith.mulf %132, %92 : vector<16x1xf32>
    %cst_45 = arith.constant 5.000000e-01 : f32
    %134 = vector.broadcast %cst_45 : f32 to vector<16x1xf32>
    %135 = arith.cmpf ogt, %133, %134 : vector<16x1xf32>
    %cst_46 = arith.constant -3.000000e+38 : f32
    %136 = vector.shape_cast %135 : vector<16x1xi1> to vector<16x1xi1>
    %137 = vector.broadcast %136 : vector<16x1xi1> to vector<16x32xi1>
    %138 = vector.broadcast %cst_46 : f32 to vector<16x32xf32>
    %139 = arith.select %137, %97, %138 : vector<16x32xi1>, vector<16x32xf32>
    %cst_47 = arith.constant dense<0xFF800000> : vector<32xf32>
    %140 = vector.multi_reduction <maximumf>, %139, %cst_47 [0] : vector<16x32xf32> to vector<32xf32>
    %141 = vector.shape_cast %140 : vector<32xf32> to vector<1x32xf32>
    %142 = vector.extract_strided_slice %102 {offsets = [1, 0], sizes = [1, 1], strides = [1, 1]} : vector<2x1xf32> to vector<1x1xf32>
    %cst_48 = arith.constant 5.000000e-01 : f32
    %143 = vector.broadcast %cst_48 : f32 to vector<1x1xf32>
    %144 = arith.cmpf ogt, %142, %143 : vector<1x1xf32>
    %cst_49 = arith.constant 0.000000e+00 : f32
    %145 = vector.shape_cast %144 : vector<1x1xi1> to vector<1x1xi1>
    %146 = vector.broadcast %145 : vector<1x1xi1> to vector<1x32xi1>
    %147 = vector.broadcast %cst_49 : f32 to vector<1x32xf32>
    %148 = arith.select %146, %141, %147 : vector<1x32xi1>, vector<1x32xf32>
    %149 = vector.broadcast %21 : vector<2x1xf32> to vector<2x32xf32>
    %150 = vector.broadcast %148 : vector<1x32xf32> to vector<2x32xf32>
    %151 = arith.mulf %149, %150 : vector<2x32xf32>
    %152 = arith.addf %131, %151 : vector<2x32xf32>
    %153 = arith.truncf %97 : vector<16x32xf32> to vector<16x32xbf16>
    %cst_50 = arith.constant dense<0.000000e+00> : vector<16x32xf32>
    %154 = tpu.matmul %2, %153, %cst_50 {dimension_numbers = #tpu.dot_dimension_numbers<[1], [0], [0], [1], [0, 0, 1, 1], [], []>} : vector<16x16xbf16>, vector<16x32xbf16>, vector<16x32xf32> -> vector<16x32xf32>
    %155 = arith.addf %97, %154 : vector<16x32xf32>
    %c0_51 = arith.constant 0 : index
    %c0_52 = arith.constant 0 : index
    %156 = vector.load %arg9[%c0_51, %c0_52] : memref<32x32xf32, #tpu.memory_space<vmem>>, vector<32x32xf32>
    %157 = arith.truncf %155 : vector<16x32xf32> to vector<16x32xbf16>
    %158 = arith.truncf %156 : vector<32x32xf32> to vector<32x32xbf16>
    %cst_53 = arith.constant dense<0.000000e+00> : vector<16x32xf32>
    %159 = tpu.matmul %157, %158, %cst_53 {dimension_numbers = #tpu.dot_dimension_numbers<[1], [0], [0], [1], [0, 0, 1, 1], [], []>} : vector<16x32xbf16>, vector<32x32xbf16>, vector<16x32xf32> -> vector<16x32xf32>
    %c0_54 = arith.constant 0 : index
    %c0_55 = arith.constant 0 : index
    %160 = vector.load %arg10[%c0_54, %c0_55] : memref<1x32xf32, #tpu.memory_space<vmem>>, vector<1x32xf32>
    %161 = vector.broadcast %160 : vector<1x32xf32> to vector<16x32xf32>
    %162 = arith.addf %159, %161 : vector<16x32xf32>
    %cst_56 = arith.constant 0.000000e+00 : f32
    %163 = vector.broadcast %cst_56 : f32 to vector<16x32xf32>
    %164 = arith.maximumf %162, %163 : vector<16x32xf32>
    %c0_57 = arith.constant 0 : index
    %c0_58 = arith.constant 0 : index
    %165 = vector.load %arg11[%c0_57, %c0_58] : memref<32x32xf32, #tpu.memory_space<vmem>>, vector<32x32xf32>
    %166 = arith.truncf %164 : vector<16x32xf32> to vector<16x32xbf16>
    %167 = arith.truncf %165 : vector<32x32xf32> to vector<32x32xbf16>
    %cst_59 = arith.constant dense<0.000000e+00> : vector<16x32xf32>
    %168 = tpu.matmul %166, %167, %cst_59 {dimension_numbers = #tpu.dot_dimension_numbers<[1], [0], [0], [1], [0, 0, 1, 1], [], []>} : vector<16x32xbf16>, vector<32x32xbf16>, vector<16x32xf32> -> vector<16x32xf32>
    %c0_60 = arith.constant 0 : index
    %c0_61 = arith.constant 0 : index
    %169 = vector.load %arg12[%c0_60, %c0_61] : memref<1x32xf32, #tpu.memory_space<vmem>>, vector<1x32xf32>
    %170 = vector.broadcast %169 : vector<1x32xf32> to vector<16x32xf32>
    %171 = arith.addf %168, %170 : vector<16x32xf32>
    %cst_62 = arith.constant 0.000000e+00 : f32
    %172 = vector.broadcast %cst_62 : f32 to vector<16x32xf32>
    %173 = arith.maximumf %171, %172 : vector<16x32xf32>
    %c0_63 = arith.constant 0 : index
    %c0_64 = arith.constant 0 : index
    %174 = vector.load %arg22[%c0_63, %c0_64] : memref<1x32xf32, #tpu.memory_space<vmem>>, vector<1x32xf32>
    %175 = arith.mulf %174, %174 : vector<1x32xf32>
    %176 = vector.shape_cast %175 : vector<1x32xf32> to vector<1x1x32xf32>
    %cst_65 = arith.constant dense<0.000000e+00> : vector<1xf32>
    %177 = vector.multi_reduction <add>, %176, %cst_65 [1, 2] : vector<1x1x32xf32> to vector<1xf32>
    %178 = vector.shape_cast %177 : vector<1xf32> to vector<1x1x1xf32>
    %179 = vector.extract %178[0, 0, 0] : f32 from vector<1x1x1xf32>
    %180 = math.sqrt %179 : f32
    %181 = vector.broadcast %174 : vector<1x32xf32> to vector<16x32xf32>
    %182 = arith.mulf %173, %181 : vector<16x32xf32>
    %cst_66 = arith.constant dense<0.000000e+00> : vector<16xf32>
    %183 = vector.multi_reduction <add>, %182, %cst_66 [1] : vector<16x32xf32> to vector<16xf32>
    %184 = vector.shape_cast %183 : vector<16xf32> to vector<16x1xf32>
    %185 = vector.broadcast %180 : f32 to vector<16x1xf32>
    %186 = arith.divf %184, %185 : vector<16x1xf32>
    %187 = tpu.transpose %186, [1, 0] : vector<16x1xf32> -> vector<1x16xf32>
    %188 = tpu.transpose %92, [1, 0] : vector<16x1xf32> -> vector<1x16xf32>
    %cst_67 = arith.constant 5.000000e-01 : f32
    %189 = vector.broadcast %cst_67 : f32 to vector<1x16xf32>
    %190 = arith.cmpf ogt, %188, %189 : vector<1x16xf32>
    %191 = vector.broadcast %190 : vector<1x16xi1> to vector<16x16xi1>
    %192 = arith.andi %9, %191 : vector<16x16xi1>
    %193 = vector.broadcast %187 : vector<1x16xf32> to vector<16x16xf32>
    %194 = vector.broadcast %186 : vector<16x1xf32> to vector<16x16xf32>
    %195 = arith.cmpf ogt, %193, %194 : vector<16x16xf32>
    %196 = vector.broadcast %187 : vector<1x16xf32> to vector<16x16xf32>
    %197 = vector.broadcast %186 : vector<16x1xf32> to vector<16x16xf32>
    %198 = arith.cmpf oeq, %196, %197 : vector<16x16xf32>
    %199 = arith.andi %198, %12 : vector<16x16xi1>
    %200 = arith.ori %195, %199 : vector<16x16xi1>
    %201 = arith.andi %192, %200 : vector<16x16xi1>
    %cst_68 = arith.constant 1.000000e+00 : f32
    %cst_69 = arith.constant 0.000000e+00 : f32
    %202 = vector.broadcast %cst_68 : f32 to vector<16x16xf32>
    %203 = vector.broadcast %cst_69 : f32 to vector<16x16xf32>
    %204 = arith.select %201, %202, %203 : vector<16x16xi1>, vector<16x16xf32>
    %cst_70 = arith.constant dense<0.000000e+00> : vector<16xf32>
    %205 = vector.multi_reduction <add>, %204, %cst_70 [1] : vector<16x16xf32> to vector<16xf32>
    %206 = vector.shape_cast %205 : vector<16xf32> to vector<16x1xf32>
    %cst_71 = arith.constant 1.000000e+00 : f32
    %cst_72 = arith.constant 0.000000e+00 : f32
    %207 = vector.broadcast %cst_71 : f32 to vector<16x16xf32>
    %208 = vector.broadcast %cst_72 : f32 to vector<16x16xf32>
    %209 = arith.select %192, %207, %208 : vector<16x16xi1>, vector<16x16xf32>
    %cst_73 = arith.constant dense<0.000000e+00> : vector<16xf32>
    %210 = vector.multi_reduction <add>, %209, %cst_73 [1] : vector<16x16xf32> to vector<16xf32>
    %211 = vector.shape_cast %210 : vector<16xf32> to vector<16x1xf32>
    %cst_74 = arith.constant 8.000000e-01 : f32
    %212 = vector.broadcast %cst_74 : f32 to vector<16x1xf32>
    %213 = arith.mulf %212, %211 : vector<16x1xf32>
    %214 = math.ceil %213 : vector<16x1xf32>
    %cst_75 = arith.constant 5.000000e-01 : f32
    %215 = vector.broadcast %cst_75 : f32 to vector<16x1xf32>
    %216 = arith.cmpf ogt, %92, %215 : vector<16x1xf32>
    %217 = arith.cmpf olt, %206, %214 : vector<16x1xf32>
    %218 = arith.andi %216, %217 : vector<16x1xi1>
    %219 = arith.extui %218 : vector<16x1xi1> to vector<16x1xi32>
    %220 = arith.sitofp %219 : vector<16x1xi32> to vector<16x1xf32>
    %221 = math.tanh %186 : vector<16x1xf32>
    %222 = vector.broadcast %221 : vector<16x1xf32> to vector<16x32xf32>
    %223 = arith.mulf %173, %222 : vector<16x32xf32>
    %224 = vector.broadcast %220 : vector<16x1xf32> to vector<16x32xf32>
    %225 = arith.mulf %223, %224 : vector<16x32xf32>
    %226 = tpu.transpose %220, [1, 0] : vector<16x1xf32> -> vector<1x16xf32>
    %227 = vector.broadcast %226 : vector<1x16xf32> to vector<2x16xf32>
    %228 = arith.mulf %3, %227 : vector<2x16xf32>
    %cst_76 = arith.constant dense<0.000000e+00> : vector<2xf32>
    %229 = vector.multi_reduction <add>, %228, %cst_76 [1] : vector<2x16xf32> to vector<2xf32>
    %230 = vector.shape_cast %229 : vector<2xf32> to vector<2x1xf32>
    %231 = arith.truncf %228 : vector<2x16xf32> to vector<2x16xbf16>
    %232 = arith.truncf %225 : vector<16x32xf32> to vector<16x32xbf16>
    %cst_77 = arith.constant dense<0.000000e+00> : vector<2x32xf32>
    %233 = tpu.matmul %231, %232, %cst_77 {dimension_numbers = #tpu.dot_dimension_numbers<[1], [0], [0], [1], [0, 0, 1, 1], [], []>} : vector<2x16xbf16>, vector<16x32xbf16>, vector<2x32xf32> -> vector<2x32xf32>
    %cst_78 = arith.constant 1.000000e+00 : f32
    %234 = vector.broadcast %cst_78 : f32 to vector<2x1xf32>
    %235 = arith.maximumf %230, %234 : vector<2x1xf32>
    %236 = vector.broadcast %235 : vector<2x1xf32> to vector<2x32xf32>
    %237 = arith.divf %233, %236 : vector<2x32xf32>
    %238 = arith.addf %110, %237 : vector<2x32xf32>
    %239 = vector.extract_strided_slice %4 {offsets = [0, 0], sizes = [16, 1], strides = [1, 1]} : vector<16x2xf32> to vector<16x1xf32>
    %240 = arith.mulf %239, %220 : vector<16x1xf32>
    %cst_79 = arith.constant 5.000000e-01 : f32
    %241 = vector.broadcast %cst_79 : f32 to vector<16x1xf32>
    %242 = arith.cmpf ogt, %240, %241 : vector<16x1xf32>
    %cst_80 = arith.constant -3.000000e+38 : f32
    %243 = vector.shape_cast %242 : vector<16x1xi1> to vector<16x1xi1>
    %244 = vector.broadcast %243 : vector<16x1xi1> to vector<16x32xi1>
    %245 = vector.broadcast %cst_80 : f32 to vector<16x32xf32>
    %246 = arith.select %244, %225, %245 : vector<16x32xi1>, vector<16x32xf32>
    %cst_81 = arith.constant dense<0xFF800000> : vector<32xf32>
    %247 = vector.multi_reduction <maximumf>, %246, %cst_81 [0] : vector<16x32xf32> to vector<32xf32>
    %248 = vector.shape_cast %247 : vector<32xf32> to vector<1x32xf32>
    %249 = vector.extract_strided_slice %230 {offsets = [0, 0], sizes = [1, 1], strides = [1, 1]} : vector<2x1xf32> to vector<1x1xf32>
    %cst_82 = arith.constant 5.000000e-01 : f32
    %250 = vector.broadcast %cst_82 : f32 to vector<1x1xf32>
    %251 = arith.cmpf ogt, %249, %250 : vector<1x1xf32>
    %cst_83 = arith.constant 0.000000e+00 : f32
    %252 = vector.shape_cast %251 : vector<1x1xi1> to vector<1x1xi1>
    %253 = vector.broadcast %252 : vector<1x1xi1> to vector<1x32xi1>
    %254 = vector.broadcast %cst_83 : f32 to vector<1x32xf32>
    %255 = arith.select %253, %248, %254 : vector<1x32xi1>, vector<1x32xf32>
    %256 = vector.broadcast %17 : vector<2x1xf32> to vector<2x32xf32>
    %257 = vector.broadcast %255 : vector<1x32xf32> to vector<2x32xf32>
    %258 = arith.mulf %256, %257 : vector<2x32xf32>
    %259 = arith.addf %152, %258 : vector<2x32xf32>
    %260 = vector.extract_strided_slice %4 {offsets = [0, 1], sizes = [16, 1], strides = [1, 1]} : vector<16x2xf32> to vector<16x1xf32>
    %261 = arith.mulf %260, %220 : vector<16x1xf32>
    %cst_84 = arith.constant 5.000000e-01 : f32
    %262 = vector.broadcast %cst_84 : f32 to vector<16x1xf32>
    %263 = arith.cmpf ogt, %261, %262 : vector<16x1xf32>
    %cst_85 = arith.constant -3.000000e+38 : f32
    %264 = vector.shape_cast %263 : vector<16x1xi1> to vector<16x1xi1>
    %265 = vector.broadcast %264 : vector<16x1xi1> to vector<16x32xi1>
    %266 = vector.broadcast %cst_85 : f32 to vector<16x32xf32>
    %267 = arith.select %265, %225, %266 : vector<16x32xi1>, vector<16x32xf32>
    %cst_86 = arith.constant dense<0xFF800000> : vector<32xf32>
    %268 = vector.multi_reduction <maximumf>, %267, %cst_86 [0] : vector<16x32xf32> to vector<32xf32>
    %269 = vector.shape_cast %268 : vector<32xf32> to vector<1x32xf32>
    %270 = vector.extract_strided_slice %230 {offsets = [1, 0], sizes = [1, 1], strides = [1, 1]} : vector<2x1xf32> to vector<1x1xf32>
    %cst_87 = arith.constant 5.000000e-01 : f32
    %271 = vector.broadcast %cst_87 : f32 to vector<1x1xf32>
    %272 = arith.cmpf ogt, %270, %271 : vector<1x1xf32>
    %cst_88 = arith.constant 0.000000e+00 : f32
    %273 = vector.shape_cast %272 : vector<1x1xi1> to vector<1x1xi1>
    %274 = vector.broadcast %273 : vector<1x1xi1> to vector<1x32xi1>
    %275 = vector.broadcast %cst_88 : f32 to vector<1x32xf32>
    %276 = arith.select %274, %269, %275 : vector<1x32xi1>, vector<1x32xf32>
    %277 = vector.broadcast %21 : vector<2x1xf32> to vector<2x32xf32>
    %278 = vector.broadcast %276 : vector<1x32xf32> to vector<2x32xf32>
    %279 = arith.mulf %277, %278 : vector<2x32xf32>
    %280 = arith.addf %259, %279 : vector<2x32xf32>
    %281 = arith.truncf %225 : vector<16x32xf32> to vector<16x32xbf16>
    %cst_89 = arith.constant dense<0.000000e+00> : vector<16x32xf32>
    %282 = tpu.matmul %2, %281, %cst_89 {dimension_numbers = #tpu.dot_dimension_numbers<[1], [0], [0], [1], [0, 0, 1, 1], [], []>} : vector<16x16xbf16>, vector<16x32xbf16>, vector<16x32xf32> -> vector<16x32xf32>
    %283 = arith.addf %225, %282 : vector<16x32xf32>
    %c0_90 = arith.constant 0 : index
    %c0_91 = arith.constant 0 : index
    %284 = vector.load %arg13[%c0_90, %c0_91] : memref<32x32xf32, #tpu.memory_space<vmem>>, vector<32x32xf32>
    %285 = arith.truncf %283 : vector<16x32xf32> to vector<16x32xbf16>
    %286 = arith.truncf %284 : vector<32x32xf32> to vector<32x32xbf16>
    %cst_92 = arith.constant dense<0.000000e+00> : vector<16x32xf32>
    %287 = tpu.matmul %285, %286, %cst_92 {dimension_numbers = #tpu.dot_dimension_numbers<[1], [0], [0], [1], [0, 0, 1, 1], [], []>} : vector<16x32xbf16>, vector<32x32xbf16>, vector<16x32xf32> -> vector<16x32xf32>
    %c0_93 = arith.constant 0 : index
    %c0_94 = arith.constant 0 : index
    %288 = vector.load %arg14[%c0_93, %c0_94] : memref<1x32xf32, #tpu.memory_space<vmem>>, vector<1x32xf32>
    %289 = vector.broadcast %288 : vector<1x32xf32> to vector<16x32xf32>
    %290 = arith.addf %287, %289 : vector<16x32xf32>
    %cst_95 = arith.constant 0.000000e+00 : f32
    %291 = vector.broadcast %cst_95 : f32 to vector<16x32xf32>
    %292 = arith.maximumf %290, %291 : vector<16x32xf32>
    %c0_96 = arith.constant 0 : index
    %c0_97 = arith.constant 0 : index
    %293 = vector.load %arg15[%c0_96, %c0_97] : memref<32x32xf32, #tpu.memory_space<vmem>>, vector<32x32xf32>
    %294 = arith.truncf %292 : vector<16x32xf32> to vector<16x32xbf16>
    %295 = arith.truncf %293 : vector<32x32xf32> to vector<32x32xbf16>
    %cst_98 = arith.constant dense<0.000000e+00> : vector<16x32xf32>
    %296 = tpu.matmul %294, %295, %cst_98 {dimension_numbers = #tpu.dot_dimension_numbers<[1], [0], [0], [1], [0, 0, 1, 1], [], []>} : vector<16x32xbf16>, vector<32x32xbf16>, vector<16x32xf32> -> vector<16x32xf32>
    %c0_99 = arith.constant 0 : index
    %c0_100 = arith.constant 0 : index
    %297 = vector.load %arg16[%c0_99, %c0_100] : memref<1x32xf32, #tpu.memory_space<vmem>>, vector<1x32xf32>
    %298 = vector.broadcast %297 : vector<1x32xf32> to vector<16x32xf32>
    %299 = arith.addf %296, %298 : vector<16x32xf32>
    %cst_101 = arith.constant 0.000000e+00 : f32
    %300 = vector.broadcast %cst_101 : f32 to vector<16x32xf32>
    %301 = arith.maximumf %299, %300 : vector<16x32xf32>
    %c0_102 = arith.constant 0 : index
    %c0_103 = arith.constant 0 : index
    %302 = vector.load %arg23[%c0_102, %c0_103] : memref<1x32xf32, #tpu.memory_space<vmem>>, vector<1x32xf32>
    %303 = arith.mulf %302, %302 : vector<1x32xf32>
    %304 = vector.shape_cast %303 : vector<1x32xf32> to vector<1x1x32xf32>
    %cst_104 = arith.constant dense<0.000000e+00> : vector<1xf32>
    %305 = vector.multi_reduction <add>, %304, %cst_104 [1, 2] : vector<1x1x32xf32> to vector<1xf32>
    %306 = vector.shape_cast %305 : vector<1xf32> to vector<1x1x1xf32>
    %307 = vector.extract %306[0, 0, 0] : f32 from vector<1x1x1xf32>
    %308 = math.sqrt %307 : f32
    %309 = vector.broadcast %302 : vector<1x32xf32> to vector<16x32xf32>
    %310 = arith.mulf %301, %309 : vector<16x32xf32>
    %cst_105 = arith.constant dense<0.000000e+00> : vector<16xf32>
    %311 = vector.multi_reduction <add>, %310, %cst_105 [1] : vector<16x32xf32> to vector<16xf32>
    %312 = vector.shape_cast %311 : vector<16xf32> to vector<16x1xf32>
    %313 = vector.broadcast %308 : f32 to vector<16x1xf32>
    %314 = arith.divf %312, %313 : vector<16x1xf32>
    %315 = tpu.transpose %314, [1, 0] : vector<16x1xf32> -> vector<1x16xf32>
    %316 = tpu.transpose %220, [1, 0] : vector<16x1xf32> -> vector<1x16xf32>
    %cst_106 = arith.constant 5.000000e-01 : f32
    %317 = vector.broadcast %cst_106 : f32 to vector<1x16xf32>
    %318 = arith.cmpf ogt, %316, %317 : vector<1x16xf32>
    %319 = vector.broadcast %318 : vector<1x16xi1> to vector<16x16xi1>
    %320 = arith.andi %9, %319 : vector<16x16xi1>
    %321 = vector.broadcast %315 : vector<1x16xf32> to vector<16x16xf32>
    %322 = vector.broadcast %314 : vector<16x1xf32> to vector<16x16xf32>
    %323 = arith.cmpf ogt, %321, %322 : vector<16x16xf32>
    %324 = vector.broadcast %315 : vector<1x16xf32> to vector<16x16xf32>
    %325 = vector.broadcast %314 : vector<16x1xf32> to vector<16x16xf32>
    %326 = arith.cmpf oeq, %324, %325 : vector<16x16xf32>
    %327 = arith.andi %326, %12 : vector<16x16xi1>
    %328 = arith.ori %323, %327 : vector<16x16xi1>
    %329 = arith.andi %320, %328 : vector<16x16xi1>
    %cst_107 = arith.constant 1.000000e+00 : f32
    %cst_108 = arith.constant 0.000000e+00 : f32
    %330 = vector.broadcast %cst_107 : f32 to vector<16x16xf32>
    %331 = vector.broadcast %cst_108 : f32 to vector<16x16xf32>
    %332 = arith.select %329, %330, %331 : vector<16x16xi1>, vector<16x16xf32>
    %cst_109 = arith.constant dense<0.000000e+00> : vector<16xf32>
    %333 = vector.multi_reduction <add>, %332, %cst_109 [1] : vector<16x16xf32> to vector<16xf32>
    %334 = vector.shape_cast %333 : vector<16xf32> to vector<16x1xf32>
    %cst_110 = arith.constant 1.000000e+00 : f32
    %cst_111 = arith.constant 0.000000e+00 : f32
    %335 = vector.broadcast %cst_110 : f32 to vector<16x16xf32>
    %336 = vector.broadcast %cst_111 : f32 to vector<16x16xf32>
    %337 = arith.select %320, %335, %336 : vector<16x16xi1>, vector<16x16xf32>
    %cst_112 = arith.constant dense<0.000000e+00> : vector<16xf32>
    %338 = vector.multi_reduction <add>, %337, %cst_112 [1] : vector<16x16xf32> to vector<16xf32>
    %339 = vector.shape_cast %338 : vector<16xf32> to vector<16x1xf32>
    %cst_113 = arith.constant 8.000000e-01 : f32
    %340 = vector.broadcast %cst_113 : f32 to vector<16x1xf32>
    %341 = arith.mulf %340, %339 : vector<16x1xf32>
    %342 = math.ceil %341 : vector<16x1xf32>
    %cst_114 = arith.constant 5.000000e-01 : f32
    %343 = vector.broadcast %cst_114 : f32 to vector<16x1xf32>
    %344 = arith.cmpf ogt, %220, %343 : vector<16x1xf32>
    %345 = arith.cmpf olt, %334, %342 : vector<16x1xf32>
    %346 = arith.andi %344, %345 : vector<16x1xi1>
    %347 = arith.extui %346 : vector<16x1xi1> to vector<16x1xi32>
    %348 = arith.sitofp %347 : vector<16x1xi32> to vector<16x1xf32>
    %349 = math.tanh %314 : vector<16x1xf32>
    %350 = vector.broadcast %349 : vector<16x1xf32> to vector<16x32xf32>
    %351 = arith.mulf %301, %350 : vector<16x32xf32>
    %352 = vector.broadcast %348 : vector<16x1xf32> to vector<16x32xf32>
    %353 = arith.mulf %351, %352 : vector<16x32xf32>
    %354 = tpu.transpose %348, [1, 0] : vector<16x1xf32> -> vector<1x16xf32>
    %355 = vector.broadcast %354 : vector<1x16xf32> to vector<2x16xf32>
    %356 = arith.mulf %3, %355 : vector<2x16xf32>
    %cst_115 = arith.constant dense<0.000000e+00> : vector<2xf32>
    %357 = vector.multi_reduction <add>, %356, %cst_115 [1] : vector<2x16xf32> to vector<2xf32>
    %358 = vector.shape_cast %357 : vector<2xf32> to vector<2x1xf32>
    %359 = arith.truncf %356 : vector<2x16xf32> to vector<2x16xbf16>
    %360 = arith.truncf %353 : vector<16x32xf32> to vector<16x32xbf16>
    %cst_116 = arith.constant dense<0.000000e+00> : vector<2x32xf32>
    %361 = tpu.matmul %359, %360, %cst_116 {dimension_numbers = #tpu.dot_dimension_numbers<[1], [0], [0], [1], [0, 0, 1, 1], [], []>} : vector<2x16xbf16>, vector<16x32xbf16>, vector<2x32xf32> -> vector<2x32xf32>
    %cst_117 = arith.constant 1.000000e+00 : f32
    %362 = vector.broadcast %cst_117 : f32 to vector<2x1xf32>
    %363 = arith.maximumf %358, %362 : vector<2x1xf32>
    %364 = vector.broadcast %363 : vector<2x1xf32> to vector<2x32xf32>
    %365 = arith.divf %361, %364 : vector<2x32xf32>
    %366 = arith.addf %238, %365 : vector<2x32xf32>
    %367 = vector.extract_strided_slice %4 {offsets = [0, 0], sizes = [16, 1], strides = [1, 1]} : vector<16x2xf32> to vector<16x1xf32>
    %368 = arith.mulf %367, %348 : vector<16x1xf32>
    %cst_118 = arith.constant 5.000000e-01 : f32
    %369 = vector.broadcast %cst_118 : f32 to vector<16x1xf32>
    %370 = arith.cmpf ogt, %368, %369 : vector<16x1xf32>
    %cst_119 = arith.constant -3.000000e+38 : f32
    %371 = vector.shape_cast %370 : vector<16x1xi1> to vector<16x1xi1>
    %372 = vector.broadcast %371 : vector<16x1xi1> to vector<16x32xi1>
    %373 = vector.broadcast %cst_119 : f32 to vector<16x32xf32>
    %374 = arith.select %372, %353, %373 : vector<16x32xi1>, vector<16x32xf32>
    %cst_120 = arith.constant dense<0xFF800000> : vector<32xf32>
    %375 = vector.multi_reduction <maximumf>, %374, %cst_120 [0] : vector<16x32xf32> to vector<32xf32>
    %376 = vector.shape_cast %375 : vector<32xf32> to vector<1x32xf32>
    %377 = vector.extract_strided_slice %358 {offsets = [0, 0], sizes = [1, 1], strides = [1, 1]} : vector<2x1xf32> to vector<1x1xf32>
    %cst_121 = arith.constant 5.000000e-01 : f32
    %378 = vector.broadcast %cst_121 : f32 to vector<1x1xf32>
    %379 = arith.cmpf ogt, %377, %378 : vector<1x1xf32>
    %cst_122 = arith.constant 0.000000e+00 : f32
    %380 = vector.shape_cast %379 : vector<1x1xi1> to vector<1x1xi1>
    %381 = vector.broadcast %380 : vector<1x1xi1> to vector<1x32xi1>
    %382 = vector.broadcast %cst_122 : f32 to vector<1x32xf32>
    %383 = arith.select %381, %376, %382 : vector<1x32xi1>, vector<1x32xf32>
    %384 = vector.broadcast %17 : vector<2x1xf32> to vector<2x32xf32>
    %385 = vector.broadcast %383 : vector<1x32xf32> to vector<2x32xf32>
    %386 = arith.mulf %384, %385 : vector<2x32xf32>
    %387 = arith.addf %280, %386 : vector<2x32xf32>
    %388 = vector.extract_strided_slice %4 {offsets = [0, 1], sizes = [16, 1], strides = [1, 1]} : vector<16x2xf32> to vector<16x1xf32>
    %389 = arith.mulf %388, %348 : vector<16x1xf32>
    %cst_123 = arith.constant 5.000000e-01 : f32
    %390 = vector.broadcast %cst_123 : f32 to vector<16x1xf32>
    %391 = arith.cmpf ogt, %389, %390 : vector<16x1xf32>
    %cst_124 = arith.constant -3.000000e+38 : f32
    %392 = vector.shape_cast %391 : vector<16x1xi1> to vector<16x1xi1>
    %393 = vector.broadcast %392 : vector<16x1xi1> to vector<16x32xi1>
    %394 = vector.broadcast %cst_124 : f32 to vector<16x32xf32>
    %395 = arith.select %393, %353, %394 : vector<16x32xi1>, vector<16x32xf32>
    %cst_125 = arith.constant dense<0xFF800000> : vector<32xf32>
    %396 = vector.multi_reduction <maximumf>, %395, %cst_125 [0] : vector<16x32xf32> to vector<32xf32>
    %397 = vector.shape_cast %396 : vector<32xf32> to vector<1x32xf32>
    %398 = vector.extract_strided_slice %358 {offsets = [1, 0], sizes = [1, 1], strides = [1, 1]} : vector<2x1xf32> to vector<1x1xf32>
    %cst_126 = arith.constant 5.000000e-01 : f32
    %399 = vector.broadcast %cst_126 : f32 to vector<1x1xf32>
    %400 = arith.cmpf ogt, %398, %399 : vector<1x1xf32>
    %cst_127 = arith.constant 0.000000e+00 : f32
    %401 = vector.shape_cast %400 : vector<1x1xi1> to vector<1x1xi1>
    %402 = vector.broadcast %401 : vector<1x1xi1> to vector<1x32xi1>
    %403 = vector.broadcast %cst_127 : f32 to vector<1x32xf32>
    %404 = arith.select %402, %397, %403 : vector<1x32xi1>, vector<1x32xf32>
    %405 = vector.broadcast %21 : vector<2x1xf32> to vector<2x32xf32>
    %406 = vector.broadcast %404 : vector<1x32xf32> to vector<2x32xf32>
    %407 = arith.mulf %405, %406 : vector<2x32xf32>
    %408 = arith.addf %387, %407 : vector<2x32xf32>
    %409 = arith.truncf %353 : vector<16x32xf32> to vector<16x32xbf16>
    %cst_128 = arith.constant dense<0.000000e+00> : vector<16x32xf32>
    %410 = tpu.matmul %2, %409, %cst_128 {dimension_numbers = #tpu.dot_dimension_numbers<[1], [0], [0], [1], [0, 0, 1, 1], [], []>} : vector<16x16xbf16>, vector<16x32xbf16>, vector<16x32xf32> -> vector<16x32xf32>
    %411 = arith.addf %353, %410 : vector<16x32xf32>
    %c0_129 = arith.constant 0 : index
    %c0_130 = arith.constant 0 : index
    %412 = vector.load %arg17[%c0_129, %c0_130] : memref<32x32xf32, #tpu.memory_space<vmem>>, vector<32x32xf32>
    %413 = arith.truncf %411 : vector<16x32xf32> to vector<16x32xbf16>
    %414 = arith.truncf %412 : vector<32x32xf32> to vector<32x32xbf16>
    %cst_131 = arith.constant dense<0.000000e+00> : vector<16x32xf32>
    %415 = tpu.matmul %413, %414, %cst_131 {dimension_numbers = #tpu.dot_dimension_numbers<[1], [0], [0], [1], [0, 0, 1, 1], [], []>} : vector<16x32xbf16>, vector<32x32xbf16>, vector<16x32xf32> -> vector<16x32xf32>
    %c0_132 = arith.constant 0 : index
    %c0_133 = arith.constant 0 : index
    %416 = vector.load %arg18[%c0_132, %c0_133] : memref<1x32xf32, #tpu.memory_space<vmem>>, vector<1x32xf32>
    %417 = vector.broadcast %416 : vector<1x32xf32> to vector<16x32xf32>
    %418 = arith.addf %415, %417 : vector<16x32xf32>
    %cst_134 = arith.constant 0.000000e+00 : f32
    %419 = vector.broadcast %cst_134 : f32 to vector<16x32xf32>
    %420 = arith.maximumf %418, %419 : vector<16x32xf32>
    %c0_135 = arith.constant 0 : index
    %c0_136 = arith.constant 0 : index
    %421 = vector.load %arg19[%c0_135, %c0_136] : memref<32x32xf32, #tpu.memory_space<vmem>>, vector<32x32xf32>
    %422 = arith.truncf %420 : vector<16x32xf32> to vector<16x32xbf16>
    %423 = arith.truncf %421 : vector<32x32xf32> to vector<32x32xbf16>
    %cst_137 = arith.constant dense<0.000000e+00> : vector<16x32xf32>
    %424 = tpu.matmul %422, %423, %cst_137 {dimension_numbers = #tpu.dot_dimension_numbers<[1], [0], [0], [1], [0, 0, 1, 1], [], []>} : vector<16x32xbf16>, vector<32x32xbf16>, vector<16x32xf32> -> vector<16x32xf32>
    %c0_138 = arith.constant 0 : index
    %c0_139 = arith.constant 0 : index
    %425 = vector.load %arg20[%c0_138, %c0_139] : memref<1x32xf32, #tpu.memory_space<vmem>>, vector<1x32xf32>
    %426 = vector.broadcast %425 : vector<1x32xf32> to vector<16x32xf32>
    %427 = arith.addf %424, %426 : vector<16x32xf32>
    %cst_140 = arith.constant 0.000000e+00 : f32
    %428 = vector.broadcast %cst_140 : f32 to vector<16x32xf32>
    %429 = arith.maximumf %427, %428 : vector<16x32xf32>
    %c0_141 = arith.constant 0 : index
    %c0_142 = arith.constant 0 : index
    %430 = vector.load %arg24[%c0_141, %c0_142] : memref<1x32xf32, #tpu.memory_space<vmem>>, vector<1x32xf32>
    %431 = arith.mulf %430, %430 : vector<1x32xf32>
    %432 = vector.shape_cast %431 : vector<1x32xf32> to vector<1x1x32xf32>
    %cst_143 = arith.constant dense<0.000000e+00> : vector<1xf32>
    %433 = vector.multi_reduction <add>, %432, %cst_143 [1, 2] : vector<1x1x32xf32> to vector<1xf32>
    %434 = vector.shape_cast %433 : vector<1xf32> to vector<1x1x1xf32>
    %435 = vector.extract %434[0, 0, 0] : f32 from vector<1x1x1xf32>
    %436 = math.sqrt %435 : f32
    %437 = vector.broadcast %430 : vector<1x32xf32> to vector<16x32xf32>
    %438 = arith.mulf %429, %437 : vector<16x32xf32>
    %cst_144 = arith.constant dense<0.000000e+00> : vector<16xf32>
    %439 = vector.multi_reduction <add>, %438, %cst_144 [1] : vector<16x32xf32> to vector<16xf32>
    %440 = vector.shape_cast %439 : vector<16xf32> to vector<16x1xf32>
    %441 = vector.broadcast %436 : f32 to vector<16x1xf32>
    %442 = arith.divf %440, %441 : vector<16x1xf32>
    %443 = tpu.transpose %442, [1, 0] : vector<16x1xf32> -> vector<1x16xf32>
    %444 = tpu.transpose %348, [1, 0] : vector<16x1xf32> -> vector<1x16xf32>
    %cst_145 = arith.constant 5.000000e-01 : f32
    %445 = vector.broadcast %cst_145 : f32 to vector<1x16xf32>
    %446 = arith.cmpf ogt, %444, %445 : vector<1x16xf32>
    %447 = vector.broadcast %446 : vector<1x16xi1> to vector<16x16xi1>
    %448 = arith.andi %9, %447 : vector<16x16xi1>
    %449 = vector.broadcast %443 : vector<1x16xf32> to vector<16x16xf32>
    %450 = vector.broadcast %442 : vector<16x1xf32> to vector<16x16xf32>
    %451 = arith.cmpf ogt, %449, %450 : vector<16x16xf32>
    %452 = vector.broadcast %443 : vector<1x16xf32> to vector<16x16xf32>
    %453 = vector.broadcast %442 : vector<16x1xf32> to vector<16x16xf32>
    %454 = arith.cmpf oeq, %452, %453 : vector<16x16xf32>
    %455 = arith.andi %454, %12 : vector<16x16xi1>
    %456 = arith.ori %451, %455 : vector<16x16xi1>
    %457 = arith.andi %448, %456 : vector<16x16xi1>
    %cst_146 = arith.constant 1.000000e+00 : f32
    %cst_147 = arith.constant 0.000000e+00 : f32
    %458 = vector.broadcast %cst_146 : f32 to vector<16x16xf32>
    %459 = vector.broadcast %cst_147 : f32 to vector<16x16xf32>
    %460 = arith.select %457, %458, %459 : vector<16x16xi1>, vector<16x16xf32>
    %cst_148 = arith.constant dense<0.000000e+00> : vector<16xf32>
    %461 = vector.multi_reduction <add>, %460, %cst_148 [1] : vector<16x16xf32> to vector<16xf32>
    %462 = vector.shape_cast %461 : vector<16xf32> to vector<16x1xf32>
    %cst_149 = arith.constant 1.000000e+00 : f32
    %cst_150 = arith.constant 0.000000e+00 : f32
    %463 = vector.broadcast %cst_149 : f32 to vector<16x16xf32>
    %464 = vector.broadcast %cst_150 : f32 to vector<16x16xf32>
    %465 = arith.select %448, %463, %464 : vector<16x16xi1>, vector<16x16xf32>
    %cst_151 = arith.constant dense<0.000000e+00> : vector<16xf32>
    %466 = vector.multi_reduction <add>, %465, %cst_151 [1] : vector<16x16xf32> to vector<16xf32>
    %467 = vector.shape_cast %466 : vector<16xf32> to vector<16x1xf32>
    %cst_152 = arith.constant 8.000000e-01 : f32
    %468 = vector.broadcast %cst_152 : f32 to vector<16x1xf32>
    %469 = arith.mulf %468, %467 : vector<16x1xf32>
    %470 = math.ceil %469 : vector<16x1xf32>
    %cst_153 = arith.constant 5.000000e-01 : f32
    %471 = vector.broadcast %cst_153 : f32 to vector<16x1xf32>
    %472 = arith.cmpf ogt, %348, %471 : vector<16x1xf32>
    %473 = arith.cmpf olt, %462, %470 : vector<16x1xf32>
    %474 = arith.andi %472, %473 : vector<16x1xi1>
    %475 = arith.extui %474 : vector<16x1xi1> to vector<16x1xi32>
    %476 = arith.sitofp %475 : vector<16x1xi32> to vector<16x1xf32>
    %477 = math.tanh %442 : vector<16x1xf32>
    %478 = vector.broadcast %477 : vector<16x1xf32> to vector<16x32xf32>
    %479 = arith.mulf %429, %478 : vector<16x32xf32>
    %480 = vector.broadcast %476 : vector<16x1xf32> to vector<16x32xf32>
    %481 = arith.mulf %479, %480 : vector<16x32xf32>
    %482 = tpu.transpose %476, [1, 0] : vector<16x1xf32> -> vector<1x16xf32>
    %483 = vector.broadcast %482 : vector<1x16xf32> to vector<2x16xf32>
    %484 = arith.mulf %3, %483 : vector<2x16xf32>
    %cst_154 = arith.constant dense<0.000000e+00> : vector<2xf32>
    %485 = vector.multi_reduction <add>, %484, %cst_154 [1] : vector<2x16xf32> to vector<2xf32>
    %486 = vector.shape_cast %485 : vector<2xf32> to vector<2x1xf32>
    %487 = arith.truncf %484 : vector<2x16xf32> to vector<2x16xbf16>
    %488 = arith.truncf %481 : vector<16x32xf32> to vector<16x32xbf16>
    %cst_155 = arith.constant dense<0.000000e+00> : vector<2x32xf32>
    %489 = tpu.matmul %487, %488, %cst_155 {dimension_numbers = #tpu.dot_dimension_numbers<[1], [0], [0], [1], [0, 0, 1, 1], [], []>} : vector<2x16xbf16>, vector<16x32xbf16>, vector<2x32xf32> -> vector<2x32xf32>
    %cst_156 = arith.constant 1.000000e+00 : f32
    %490 = vector.broadcast %cst_156 : f32 to vector<2x1xf32>
    %491 = arith.maximumf %486, %490 : vector<2x1xf32>
    %492 = vector.broadcast %491 : vector<2x1xf32> to vector<2x32xf32>
    %493 = arith.divf %489, %492 : vector<2x32xf32>
    %494 = arith.addf %366, %493 : vector<2x32xf32>
    %495 = vector.extract_strided_slice %4 {offsets = [0, 0], sizes = [16, 1], strides = [1, 1]} : vector<16x2xf32> to vector<16x1xf32>
    %496 = arith.mulf %495, %476 : vector<16x1xf32>
    %cst_157 = arith.constant 5.000000e-01 : f32
    %497 = vector.broadcast %cst_157 : f32 to vector<16x1xf32>
    %498 = arith.cmpf ogt, %496, %497 : vector<16x1xf32>
    %cst_158 = arith.constant -3.000000e+38 : f32
    %499 = vector.shape_cast %498 : vector<16x1xi1> to vector<16x1xi1>
    %500 = vector.broadcast %499 : vector<16x1xi1> to vector<16x32xi1>
    %501 = vector.broadcast %cst_158 : f32 to vector<16x32xf32>
    %502 = arith.select %500, %481, %501 : vector<16x32xi1>, vector<16x32xf32>
    %cst_159 = arith.constant dense<0xFF800000> : vector<32xf32>
    %503 = vector.multi_reduction <maximumf>, %502, %cst_159 [0] : vector<16x32xf32> to vector<32xf32>
    %504 = vector.shape_cast %503 : vector<32xf32> to vector<1x32xf32>
    %505 = vector.extract_strided_slice %486 {offsets = [0, 0], sizes = [1, 1], strides = [1, 1]} : vector<2x1xf32> to vector<1x1xf32>
    %cst_160 = arith.constant 5.000000e-01 : f32
    %506 = vector.broadcast %cst_160 : f32 to vector<1x1xf32>
    %507 = arith.cmpf ogt, %505, %506 : vector<1x1xf32>
    %cst_161 = arith.constant 0.000000e+00 : f32
    %508 = vector.shape_cast %507 : vector<1x1xi1> to vector<1x1xi1>
    %509 = vector.broadcast %508 : vector<1x1xi1> to vector<1x32xi1>
    %510 = vector.broadcast %cst_161 : f32 to vector<1x32xf32>
    %511 = arith.select %509, %504, %510 : vector<1x32xi1>, vector<1x32xf32>
    %512 = vector.broadcast %17 : vector<2x1xf32> to vector<2x32xf32>
    %513 = vector.broadcast %511 : vector<1x32xf32> to vector<2x32xf32>
    %514 = arith.mulf %512, %513 : vector<2x32xf32>
    %515 = arith.addf %408, %514 : vector<2x32xf32>
    %516 = vector.extract_strided_slice %4 {offsets = [0, 1], sizes = [16, 1], strides = [1, 1]} : vector<16x2xf32> to vector<16x1xf32>
    %517 = arith.mulf %516, %476 : vector<16x1xf32>
    %cst_162 = arith.constant 5.000000e-01 : f32
    %518 = vector.broadcast %cst_162 : f32 to vector<16x1xf32>
    %519 = arith.cmpf ogt, %517, %518 : vector<16x1xf32>
    %cst_163 = arith.constant -3.000000e+38 : f32
    %520 = vector.shape_cast %519 : vector<16x1xi1> to vector<16x1xi1>
    %521 = vector.broadcast %520 : vector<16x1xi1> to vector<16x32xi1>
    %522 = vector.broadcast %cst_163 : f32 to vector<16x32xf32>
    %523 = arith.select %521, %481, %522 : vector<16x32xi1>, vector<16x32xf32>
    %cst_164 = arith.constant dense<0xFF800000> : vector<32xf32>
    %524 = vector.multi_reduction <maximumf>, %523, %cst_164 [0] : vector<16x32xf32> to vector<32xf32>
    %525 = vector.shape_cast %524 : vector<32xf32> to vector<1x32xf32>
    %526 = vector.extract_strided_slice %486 {offsets = [1, 0], sizes = [1, 1], strides = [1, 1]} : vector<2x1xf32> to vector<1x1xf32>
    %cst_165 = arith.constant 5.000000e-01 : f32
    %527 = vector.broadcast %cst_165 : f32 to vector<1x1xf32>
    %528 = arith.cmpf ogt, %526, %527 : vector<1x1xf32>
    %cst_166 = arith.constant 0.000000e+00 : f32
    %529 = vector.shape_cast %528 : vector<1x1xi1> to vector<1x1xi1>
    %530 = vector.broadcast %529 : vector<1x1xi1> to vector<1x32xi1>
    %531 = vector.broadcast %cst_166 : f32 to vector<1x32xf32>
    %532 = arith.select %530, %525, %531 : vector<1x32xi1>, vector<1x32xf32>
    %533 = vector.broadcast %21 : vector<2x1xf32> to vector<2x32xf32>
    %534 = vector.broadcast %532 : vector<1x32xf32> to vector<2x32xf32>
    %535 = arith.mulf %533, %534 : vector<2x32xf32>
    %536 = arith.addf %515, %535 : vector<2x32xf32>
    %c0_167 = arith.constant 0 : index
    %c0_168 = arith.constant 0 : index
    %537 = vector.load %arg25[%c0_167, %c0_168] : memref<64x32xf32, #tpu.memory_space<vmem>>, vector<64x32xf32>
    %538 = vector.extract_strided_slice %537 {offsets = [0, 0], sizes = [32, 32], strides = [1, 1]} : vector<64x32xf32> to vector<32x32xf32>
    %539 = arith.truncf %536 : vector<2x32xf32> to vector<2x32xbf16>
    %540 = arith.truncf %538 : vector<32x32xf32> to vector<32x32xbf16>
    %cst_169 = arith.constant dense<0.000000e+00> : vector<2x32xf32>
    %541 = tpu.matmul %539, %540, %cst_169 {dimension_numbers = #tpu.dot_dimension_numbers<[1], [0], [0], [1], [0, 0, 1, 1], [], []>} : vector<2x32xbf16>, vector<32x32xbf16>, vector<2x32xf32> -> vector<2x32xf32>
    %542 = vector.extract_strided_slice %537 {offsets = [32, 0], sizes = [32, 32], strides = [1, 1]} : vector<64x32xf32> to vector<32x32xf32>
    %543 = arith.truncf %494 : vector<2x32xf32> to vector<2x32xbf16>
    %544 = arith.truncf %542 : vector<32x32xf32> to vector<32x32xbf16>
    %cst_170 = arith.constant dense<0.000000e+00> : vector<2x32xf32>
    %545 = tpu.matmul %543, %544, %cst_170 {dimension_numbers = #tpu.dot_dimension_numbers<[1], [0], [0], [1], [0, 0, 1, 1], [], []>} : vector<2x32xbf16>, vector<32x32xbf16>, vector<2x32xf32> -> vector<2x32xf32>
    %546 = arith.addf %541, %545 : vector<2x32xf32>
    %c0_171 = arith.constant 0 : index
    %c0_172 = arith.constant 0 : index
    %547 = vector.load %arg26[%c0_171, %c0_172] : memref<1x32xf32, #tpu.memory_space<vmem>>, vector<1x32xf32>
    %548 = vector.broadcast %547 : vector<1x32xf32> to vector<2x32xf32>
    %549 = arith.addf %546, %548 : vector<2x32xf32>
    %cst_173 = arith.constant 0.000000e+00 : f32
    %550 = vector.broadcast %cst_173 : f32 to vector<2x32xf32>
    %551 = arith.maximumf %549, %550 : vector<2x32xf32>
    %c0_174 = arith.constant 0 : index
    %c0_175 = arith.constant 0 : index
    %552 = vector.load %arg27[%c0_174, %c0_175] : memref<32x16xf32, #tpu.memory_space<vmem>>, vector<32x16xf32>
    %553 = arith.truncf %551 : vector<2x32xf32> to vector<2x32xbf16>
    %554 = arith.truncf %552 : vector<32x16xf32> to vector<32x16xbf16>
    %cst_176 = arith.constant dense<0.000000e+00> : vector<2x16xf32>
    %555 = tpu.matmul %553, %554, %cst_176 {dimension_numbers = #tpu.dot_dimension_numbers<[1], [0], [0], [1], [0, 0, 1, 1], [], []>} : vector<2x32xbf16>, vector<32x16xbf16>, vector<2x16xf32> -> vector<2x16xf32>
    %c0_177 = arith.constant 0 : index
    %c0_178 = arith.constant 0 : index
    %556 = vector.load %arg28[%c0_177, %c0_178] : memref<1x16xf32, #tpu.memory_space<vmem>>, vector<1x16xf32>
    %557 = vector.broadcast %556 : vector<1x16xf32> to vector<2x16xf32>
    %558 = arith.addf %555, %557 : vector<2x16xf32>
    %cst_179 = arith.constant 0.000000e+00 : f32
    %559 = vector.broadcast %cst_179 : f32 to vector<2x16xf32>
    %560 = arith.maximumf %558, %559 : vector<2x16xf32>
    %c0_180 = arith.constant 0 : index
    %c0_181 = arith.constant 0 : index
    %561 = vector.load %arg29[%c0_180, %c0_181] : memref<16x128xf32, #tpu.memory_space<vmem>>, vector<16x128xf32>
    %562 = arith.truncf %560 : vector<2x16xf32> to vector<2x16xbf16>
    %563 = arith.truncf %561 : vector<16x128xf32> to vector<16x128xbf16>
    %cst_182 = arith.constant dense<0.000000e+00> : vector<2x128xf32>
    %564 = tpu.matmul %562, %563, %cst_182 {dimension_numbers = #tpu.dot_dimension_numbers<[1], [0], [0], [1], [0, 0, 1, 1], [], []>} : vector<2x16xbf16>, vector<16x128xbf16>, vector<2x128xf32> -> vector<2x128xf32>
    %c0_183 = arith.constant 0 : index
    %c0_184 = arith.constant 0 : index
    %565 = vector.load %arg30[%c0_183, %c0_184] : memref<1x128xf32, #tpu.memory_space<vmem>>, vector<1x128xf32>
    %566 = vector.broadcast %565 : vector<1x128xf32> to vector<2x128xf32>
    %567 = arith.addf %564, %566 : vector<2x128xf32>
    %c0_185 = arith.constant 0 : index
    %c0_186 = arith.constant 0 : index
    %568 = vector.load %arg31[%c0_185, %c0_186] : memref<2x128xf32, #tpu.memory_space<vmem>>, vector<2x128xf32>
    tpu.vector_store %arg31[%c0_185, %c0_186], %567 {strides = array<i32>} : memref<2x128xf32, #tpu.memory_space<vmem>>, vector<2x128xf32>,
    return
  }
  func.func @transform_0(%arg0: i32) -> (i32, i32) {
    %c0_i32 = arith.constant 0 : i32
    %c0_i32_0 = arith.constant 0 : i32
    %c0_i32_1 = arith.constant 0 : i32
    return %c0_i32, %c0_i32_0 : i32, i32
  }
  func.func @transform_1(%arg0: i32) -> (i32, i32) {
    %c0_i32 = arith.constant 0 : i32
    %c0_i32_0 = arith.constant 0 : i32
    %c0_i32_1 = arith.constant 0 : i32
    return %c0_i32, %c0_i32_0 : i32, i32
  }
  func.func @transform_2(%arg0: i32) -> (i32, i32) {
    %c0_i32 = arith.constant 0 : i32
    %c0_i32_0 = arith.constant 0 : i32
    %c0_i32_1 = arith.constant 0 : i32
    return %c0_i32, %c0_i32_0 : i32, i32
  }
  func.func @transform_3(%arg0: i32) -> (i32, i32) {
    %c0_i32 = arith.constant 0 : i32
    %c0_i32_0 = arith.constant 0 : i32
    %c0_i32_1 = arith.constant 0 : i32
    return %c0_i32, %c0_i32_0 : i32, i32
  }
  func.func @transform_4(%arg0: i32) -> (i32, i32) {
    %c0_i32 = arith.constant 0 : i32
    %c0_i32_0 = arith.constant 0 : i32
    %c0_i32_1 = arith.constant 0 : i32
    return %c0_i32, %c0_i32_0 : i32, i32
  }
  func.func @transform_5(%arg0: i32) -> (i32, i32) {
    %c0_i32 = arith.constant 0 : i32
    %c0_i32_0 = arith.constant 0 : i32
    %c0_i32_1 = arith.constant 0 : i32
    return %c0_i32, %c0_i32_0 : i32, i32
  }
  func.func @transform_6(%arg0: i32) -> (i32, i32) {
    %c0_i32 = arith.constant 0 : i32
    %c0_i32_0 = arith.constant 0 : i32
    %c0_i32_1 = arith.constant 0 : i32
    return %c0_i32, %c0_i32_0 : i32, i32
  }
  func.func @transform_7(%arg0: i32) -> (i32, i32) {
    %c0_i32 = arith.constant 0 : i32
    %c0_i32_0 = arith.constant 0 : i32
    %c0_i32_1 = arith.constant 0 : i32
    return %c0_i32, %c0_i32_0 : i32, i32
  }
  func.func @transform_8(%arg0: i32) -> (i32, i32) {
    %c0_i32 = arith.constant 0 : i32
    %c0_i32_0 = arith.constant 0 : i32
    %c0_i32_1 = arith.constant 0 : i32
    return %c0_i32, %c0_i32_0 : i32, i32
  }
  func.func @transform_9(%arg0: i32) -> (i32, i32) {
    %c0_i32 = arith.constant 0 : i32
    %c0_i32_0 = arith.constant 0 : i32
    %c0_i32_1 = arith.constant 0 : i32
    return %c0_i32, %c0_i32_0 : i32, i32
  }
  func.func @transform_10(%arg0: i32) -> (i32, i32) {
    %c0_i32 = arith.constant 0 : i32
    %c0_i32_0 = arith.constant 0 : i32
    %c0_i32_1 = arith.constant 0 : i32
    return %c0_i32, %c0_i32_0 : i32, i32
  }
  func.func @transform_11(%arg0: i32) -> (i32, i32) {
    %c0_i32 = arith.constant 0 : i32
    %c0_i32_0 = arith.constant 0 : i32
    %c0_i32_1 = arith.constant 0 : i32
    return %c0_i32, %c0_i32_0 : i32, i32
  }
  func.func @transform_12(%arg0: i32) -> (i32, i32) {
    %c0_i32 = arith.constant 0 : i32
    %c0_i32_0 = arith.constant 0 : i32
    %c0_i32_1 = arith.constant 0 : i32
    return %c0_i32, %c0_i32_0 : i32, i32
  }
  func.func @transform_13(%arg0: i32) -> (i32, i32) {
    %c0_i32 = arith.constant 0 : i32
    %c0_i32_0 = arith.constant 0 : i32
    %c0_i32_1 = arith.constant 0 : i32
    return %c0_i32, %c0_i32_0 : i32, i32
  }
  func.func @transform_14(%arg0: i32) -> (i32, i32) {
    %c0_i32 = arith.constant 0 : i32
    %c0_i32_0 = arith.constant 0 : i32
    %c0_i32_1 = arith.constant 0 : i32
    return %c0_i32, %c0_i32_0 : i32, i32
  }
  func.func @transform_15(%arg0: i32) -> (i32, i32) {
    %c0_i32 = arith.constant 0 : i32
    %c0_i32_0 = arith.constant 0 : i32
    %c0_i32_1 = arith.constant 0 : i32
    return %c0_i32, %c0_i32_0 : i32, i32
  }
  func.func @transform_16(%arg0: i32) -> (i32, i32) {
    %c0_i32 = arith.constant 0 : i32
    %c0_i32_0 = arith.constant 0 : i32
    %c0_i32_1 = arith.constant 0 : i32
    return %c0_i32, %c0_i32_0 : i32, i32
  }
  func.func @transform_17(%arg0: i32) -> (i32, i32) {
    %c0_i32 = arith.constant 0 : i32
    %c0_i32_0 = arith.constant 0 : i32
    %c0_i32_1 = arith.constant 0 : i32
    return %c0_i32, %c0_i32_0 : i32, i32
  }
  func.func @transform_18(%arg0: i32) -> (i32, i32) {
    %c0_i32 = arith.constant 0 : i32
    %c0_i32_0 = arith.constant 0 : i32
    %c0_i32_1 = arith.constant 0 : i32
    return %c0_i32, %c0_i32_0 : i32, i32
  }
  func.func @transform_19(%arg0: i32) -> (i32, i32) {
    %c0_i32 = arith.constant 0 : i32
    %c0_i32_0 = arith.constant 0 : i32
    %c0_i32_1 = arith.constant 0 : i32
    return %c0_i32, %c0_i32_0 : i32, i32
  }
  func.func @transform_20(%arg0: i32) -> (i32, i32) {
    %c0_i32 = arith.constant 0 : i32
    %c0_i32_0 = arith.constant 0 : i32
    %c0_i32_1 = arith.constant 0 : i32
    return %c0_i32, %c0_i32_0 : i32, i32
  }
  func.func @transform_21(%arg0: i32) -> (i32, i32) {
    %c0_i32 = arith.constant 0 : i32
    %c0_i32_0 = arith.constant 0 : i32
    %c0_i32_1 = arith.constant 0 : i32
    return %c0_i32, %c0_i32_0 : i32, i32
  }
  func.func @transform_22(%arg0: i32) -> (i32, i32) {
    %c0_i32 = arith.constant 0 : i32
    %c0_i32_0 = arith.constant 0 : i32
    %c0_i32_1 = arith.constant 0 : i32
    return %c0_i32, %c0_i32_0 : i32, i32
  }
  func.func @transform_23(%arg0: i32) -> (i32, i32) {
    %c0_i32 = arith.constant 0 : i32
    %c0_i32_0 = arith.constant 0 : i32
    %c0_i32_1 = arith.constant 0 : i32
    return %c0_i32, %c0_i32_0 : i32, i32
  }
  func.func @transform_24(%arg0: i32) -> (i32, i32) {
    %c0_i32 = arith.constant 0 : i32
    %c0_i32_0 = arith.constant 0 : i32
    %c0_i32_1 = arith.constant 0 : i32
    return %c0_i32, %c0_i32_0 : i32, i32
  }
  func.func @transform_25(%arg0: i32) -> (i32, i32) {
    %c0_i32 = arith.constant 0 : i32
    %c0_i32_0 = arith.constant 0 : i32
    %c0_i32_1 = arith.constant 0 : i32
    return %c0_i32, %c0_i32_0 : i32, i32
  }
  func.func @transform_26(%arg0: i32) -> (i32, i32) {
    %c0_i32 = arith.constant 0 : i32
    %c0_i32_0 = arith.constant 0 : i32
    %c0_i32_1 = arith.constant 0 : i32
    return %c0_i32, %c0_i32_0 : i32, i32
  }
  func.func @transform_27(%arg0: i32) -> (i32, i32) {
    %c0_i32 = arith.constant 0 : i32
    %c0_i32_0 = arith.constant 0 : i32
    %c0_i32_1 = arith.constant 0 : i32
    return %c0_i32, %c0_i32_0 : i32, i32
  }
  func.func @transform_28(%arg0: i32) -> (i32, i32) {
    %c0_i32 = arith.constant 0 : i32
    %c0_i32_0 = arith.constant 0 : i32
    %c0_i32_1 = arith.constant 0 : i32
    return %c0_i32, %c0_i32_0 : i32, i32
  }
  func.func @transform_29(%arg0: i32) -> (i32, i32) {
    %c0_i32 = arith.constant 0 : i32
    %c0_i32_0 = arith.constant 0 : i32
    %c0_i32_1 = arith.constant 0 : i32
    return %c0_i32, %c0_i32_0 : i32, i32
  }
  func.func @transform_30(%arg0: i32) -> (i32, i32) {
    %c0_i32 = arith.constant 0 : i32
    %c0_i32_0 = arith.constant 0 : i32
    %c0_i32_1 = arith.constant 0 : i32
    return %c0_i32, %c0_i32_0 : i32, i32
  }
}

</mosaic_0001>

<llo_original>
// kernel: tpu_custom_call.1
$region0: #{tpu_custom_call.1}
  #allocation0 [shape = 'u32[]', space=smem, size = 0x4, offset = 0x4, fixed_abs, tag = 'smem constant byte address 0x4 - core index']
  #allocation1 [shape = 'u32[144,128]{1,0:T(1,128)}', space=vmem, size = 0x12000, scoped, tag = 'internal scratch']
  %s0 = inlined_call_operand.smem [shape: u32[31], index: -1, kind: input, shape index: {}]
  %s1 = sld [smem:[%s0]]
  %s2 = scalar_lea.smem %s0, 1
  %s3 = sld [smem:[%s2]]
  %s4 = scalar_lea.smem %s0, 2
  %s5 = sld [smem:[%s4]]
  %s6 = scalar_lea.smem %s0, 3
  %s7 = sld [smem:[%s6]]
  %s8 = scalar_lea.smem %s0, 4
  %s9 = sld [smem:[%s8]]
  %s10 = scalar_lea.smem %s0, 5
  %s11 = sld [smem:[%s10]]
  %s12 = scalar_lea.smem %s0, 6
  %s13 = sld [smem:[%s12]]
  %s14 = scalar_lea.smem %s0, 7
  %s15 = sld [smem:[%s14]]
  %s16 = scalar_lea.smem %s0, 8
  %s17 = sld [smem:[%s16]]
  %s18 = scalar_lea.smem %s0, 9
  %s19 = sld [smem:[%s18]]
  %s20 = scalar_lea.smem %s0, 10
  %s21 = sld [smem:[%s20]]
  %s22 = scalar_lea.smem %s0, 11
  %s23 = sld [smem:[%s22]]
  %s24 = scalar_lea.smem %s0, 12
  %s25 = sld [smem:[%s24]]
  %s26 = scalar_lea.smem %s0, 13
  %s27 = sld [smem:[%s26]]
  %s28 = scalar_lea.smem %s0, 14
  %s29 = sld [smem:[%s28]]
  %s30 = scalar_lea.smem %s0, 15
  %s31 = sld [smem:[%s30]]
  %s32 = scalar_lea.smem %s0, 16
  %s33 = sld [smem:[%s32]]
  %s34 = scalar_lea.smem %s0, 17
  %s35 = sld [smem:[%s34]]
  %s36 = scalar_lea.smem %s0, 18
  %s37 = sld [smem:[%s36]]
  %s38 = scalar_lea.smem %s0, 19
  %s39 = sld [smem:[%s38]]
  %s40 = scalar_lea.smem %s0, 20
  %s41 = sld [smem:[%s40]]
  %s42 = scalar_lea.smem %s0, 21
  %s43 = sld [smem:[%s42]]
  %s44 = scalar_lea.smem %s0, 22
  %s45 = sld [smem:[%s44]]
  %s46 = scalar_lea.smem %s0, 23
  %s47 = sld [smem:[%s46]]
  %s48 = scalar_lea.smem %s0, 24
  %s49 = sld [smem:[%s48]]
  %s50 = scalar_lea.smem %s0, 25
  %s51 = sld [smem:[%s50]]
  %s52 = scalar_lea.smem %s0, 26
  %s53 = sld [smem:[%s52]]
  %s54 = scalar_lea.smem %s0, 27
  %s55 = sld [smem:[%s54]]
  %s56 = scalar_lea.smem %s0, 28
  %s57 = sld [smem:[%s56]]
  %s58 = scalar_lea.smem %s0, 29
  %s59 = sld [smem:[%s58]]
  %s60 = scalar_lea.smem %s0, 30
  %s61 = sld [smem:[%s60]]
  %s62 = sld [smem:[#allocation0]]
  $region174: #{tpu_custom_call.1} parent=0
    _
  %s64 = ssub.s32 1, %s62
  %s65 = scalar_select 0, %s64, %s62
  $region1: #{tpu_custom_call.1} parent=0
    #allocation2 [shape = 'u8[8192]{0}', space=vmem, size = 0x2000, scoped, tag = 'input window, operand 1, single buffered']
    #allocation3 [shape = 's32[1]{0}', space=sflag, size = 0x4, scoped, tag = 'scoped memory for tpu_custom_call.1']
    #allocation4 [shape = 's32[1]{0}', space=sflag, size = 0x4, scoped, tag = 'scoped memory for tpu_custom_call.1']
    #allocation5 [shape = 'u8[1024]{0}', space=vmem, size = 0x400, scoped, tag = 'input window, operand 2, single buffered']
    #allocation6 [shape = 's32[1]{0}', space=sflag, size = 0x4, scoped, tag = 'scoped memory for tpu_custom_call.1']
    #allocation7 [shape = 'u8[4096]{0}', space=vmem, size = 0x1000, scoped, tag = 'input window, operand 4, single buffered']
    #allocation8 [shape = 'u8[512]{0}', space=vmem, size = 0x400, scoped, tag = 'input window, operand 7, single buffered']
    #allocation9 [shape = 's32[1]{0}', space=sflag, size = 0x4, scoped, tag = 'scoped memory for tpu_custom_call.1']
    #allocation10 [shape = 'u8[512]{0}', space=vmem, size = 0x400, scoped, tag = 'input window, operand 9, single buffered']
    #allocation11 [shape = 'u8[512]{0}', space=vmem, size = 0x400, scoped, tag = 'input window, operand 11, single buffered']
    #allocation12 [shape = 's32[1]{0}', space=sflag, size = 0x4, scoped, tag = 'scoped memory for tpu_custom_call.1']
    #allocation13 [shape = 'u8[512]{0}', space=vmem, size = 0x400, scoped, tag = 'input window, operand 13, single buffered']
    #allocation14 [shape = 'u8[512]{0}', space=vmem, size = 0x400, scoped, tag = 'input window, operand 15, single buffered']
    #allocation15 [shape = 's32[1]{0}', space=sflag, size = 0x4, scoped, tag = 'scoped memory for tpu_custom_call.1']
    #allocation16 [shape = 'u8[512]{0}', space=vmem, size = 0x400, scoped, tag = 'input window, operand 17, single buffered']
    #allocation17 [shape = 'u8[16384]{0}', space=vmem, size = 0x4000, scoped, tag = 'input window, operand 18, single buffered']
    #allocation18 [shape = 's32[1]{0}', space=sflag, size = 0x4, scoped, tag = 'scoped memory for tpu_custom_call.1']
    #allocation19 [shape = 'u8[512]{0}', space=vmem, size = 0x400, scoped, tag = 'input window, operand 19, single buffered']
    #allocation20 [shape = 'u8[1024]{0}', space=vmem, size = 0x400, scoped, tag = 'output window, operand 0, single buffered']
    %66 = vsyncpa [#allocation3], 0
    %67 = vsyncpa [#allocation6], 0
    %68 = vsyncpa [#allocation9], 0
    %69 = vsyncpa [#allocation12], 0
    %70 = vsyncpa [#allocation15], 0
    %71 = vsyncpa [#allocation18], 0
    %72 = vsyncpa [#allocation4], 0
    // Predicated region
    $region2: #{tpu_custom_call.1} parent=1 // pred_check
      _
    $region3: #{tpu_custom_call.1} parent=1 // pred_check_branch
      %74 = sbr.rel (0) target = $region5
    $region4: #{tpu_custom_call.1} parent=1 // pred_region
      _
    $region5: #{tpu_custom_call.1} parent=1 // pred_fallthru
      _
    // Predicated region
    $region6: #{tpu_custom_call.1} parent=1 // pred_check
      _
    $region7: #{tpu_custom_call.1} parent=1 // pred_check_branch
      %76 = sbr.rel (0) target = $region9
    $region8: #{tpu_custom_call.1} parent=1 // pred_region
      %s78 = ssub.s32 256, 256
      %79 = vsyncadd [#allocation3], %s78
      %s80 = sshll.u32 [#allocation2], 4
      %s81 = int_to_ptr.vmem [resolvable:$true] %s80
      %86 = dma.hbm_to_vmem [thread:$0]  %s3, 256, %s81, [#allocation3], 128, 128, 8
    $region9: #{tpu_custom_call.1} parent=1 // pred_fallthru
      _
    // Predicated region
    $region10: #{tpu_custom_call.1} parent=1 // pred_check
      _
    $region11: #{tpu_custom_call.1} parent=1 // pred_check_branch
      %88 = sbr.rel (0) target = $region13
    $region12: #{tpu_custom_call.1} parent=1 // pred_region
      %s90 = ssub.s32 32, 32
      %91 = vsyncadd [#allocation6], %s90
      %s93 = sshll.u32 [#allocation5], 4
      %s94 = int_to_ptr.vmem [resolvable:$true] %s93
      %96 = dma.hbm_to_vmem [thread:$0]  %s5, 32, %s94, [#allocation6]
    $region13: #{tpu_custom_call.1} parent=1 // pred_fallthru
      _
    // Predicated region
    $region14: #{tpu_custom_call.1} parent=1 // pred_check
      _
    $region15: #{tpu_custom_call.1} parent=1 // pred_check_branch
      %98 = sbr.rel (0) target = $region17
    $region16: #{tpu_custom_call.1} parent=1 // pred_region
      _
    $region17: #{tpu_custom_call.1} parent=1 // pred_fallthru
      _
    // Predicated region
    $region18: #{tpu_custom_call.1} parent=1 // pred_check
      _
    $region19: #{tpu_custom_call.1} parent=1 // pred_check_branch
      %100 = sbr.rel (0) target = $region21
    $region20: #{tpu_custom_call.1} parent=1 // pred_region
      %s102 = ssub.s32 128, 128
      %103 = vsyncadd [#allocation6], %s102
      %s105 = sshll.u32 [#allocation7], 4
      %s106 = int_to_ptr.vmem [resolvable:$true] %s105
      %108 = dma.hbm_to_vmem [thread:$0]  %s9, 128, %s106, [#allocation6]
    $region21: #{tpu_custom_call.1} parent=1 // pred_fallthru
      _
    // Predicated region
    $region22: #{tpu_custom_call.1} parent=1 // pred_check
      _
    $region23: #{tpu_custom_call.1} parent=1 // pred_check_branch
      %110 = sbr.rel (0) target = $region25
    $region24: #{tpu_custom_call.1} parent=1 // pred_region
      _
    $region25: #{tpu_custom_call.1} parent=1 // pred_fallthru
      _
    // Predicated region
    $region26: #{tpu_custom_call.1} parent=1 // pred_check
      _
    $region27: #{tpu_custom_call.1} parent=1 // pred_check_branch
      %112 = sbr.rel (0) target = $region29
    $region28: #{tpu_custom_call.1} parent=1 // pred_region
      _
    $region29: #{tpu_custom_call.1} parent=1 // pred_fallthru
      _
    // Predicated region
    $region30: #{tpu_custom_call.1} parent=1 // pred_check
      _
    $region31: #{tpu_custom_call.1} parent=1 // pred_check_branch
      %114 = sbr.rel (0) target = $region33
    $region32: #{tpu_custom_call.1} parent=1 // pred_region
      %s116 = ssub.s32 16, 16
      %117 = vsyncadd [#allocation9], %s116
      %s119 = sshll.u32 [#allocation8], 4
      %s120 = int_to_ptr.vmem [resolvable:$true] %s119
      %122 = dma.hbm_to_vmem [thread:$0]  %s15, 16, %s120, [#allocation9]
    $region33: #{tpu_custom_call.1} parent=1 // pred_fallthru
      _
    // Predicated region
    $region34: #{tpu_custom_call.1} parent=1 // pred_check
      _
    $region35: #{tpu_custom_call.1} parent=1 // pred_check_branch
      %124 = sbr.rel (0) target = $region37
    $region36: #{tpu_custom_call.1} parent=1 // pred_region
      _
    $region37: #{tpu_custom_call.1} parent=1 // pred_fallthru
      _
    // Predicated region
    $region38: #{tpu_custom_call.1} parent=1 // pred_check
      _
    $region39: #{tpu_custom_call.1} parent=1 // pred_check_branch
      %126 = sbr.rel (0) target = $region41
    $region40: #{tpu_custom_call.1} parent=1 // pred_region
      %s128 = ssub.s32 16, 16
      %129 = vsyncadd [#allocation9], %s128
      %s131 = sshll.u32 [#allocation10], 4
      %s132 = int_to_ptr.vmem [resolvable:$true] %s131
      %134 = dma.hbm_to_vmem [thread:$0]  %s19, 16, %s132, [#allocation9]
    $region41: #{tpu_custom_call.1} parent=1 // pred_fallthru
      _
    // Predicated region
    $region42: #{tpu_custom_call.1} parent=1 // pred_check
      _
    $region43: #{tpu_custom_call.1} parent=1 // pred_check_branch
      %136 = sbr.rel (0) target = $region45
    $region44: #{tpu_custom_call.1} parent=1 // pred_region
      _
    $region45: #{tpu_custom_call.1} parent=1 // pred_fallthru
      _
    // Predicated region
    $region46: #{tpu_custom_call.1} parent=1 // pred_check
      _
    $region47: #{tpu_custom_call.1} parent=1 // pred_check_branch
      %138 = sbr.rel (0) target = $region49
    $region48: #{tpu_custom_call.1} parent=1 // pred_region
      %s140 = ssub.s32 16, 16
      %141 = vsyncadd [#allocation12], %s140
      %s143 = sshll.u32 [#allocation11], 4
      %s144 = int_to_ptr.vmem [resolvable:$true] %s143
      %146 = dma.hbm_to_vmem [thread:$0]  %s23, 16, %s144, [#allocation12]
    $region49: #{tpu_custom_call.1} parent=1 // pred_fallthru
      _
    // Predicated region
    $region50: #{tpu_custom_call.1} parent=1 // pred_check
      _
    $region51: #{tpu_custom_call.1} parent=1 // pred_check_branch
      %148 = sbr.rel (0) target = $region53
    $region52: #{tpu_custom_call.1} parent=1 // pred_region
      _
    $region53: #{tpu_custom_call.1} parent=1 // pred_fallthru
      _
    // Predicated region
    $region54: #{tpu_custom_call.1} parent=1 // pred_check
      _
    $region55: #{tpu_custom_call.1} parent=1 // pred_check_branch
      %150 = sbr.rel (0) target = $region57
    $region56: #{tpu_custom_call.1} parent=1 // pred_region
      %s152 = ssub.s32 16, 16
      %153 = vsyncadd [#allocation12], %s152
      %s155 = sshll.u32 [#allocation13], 4
      %s156 = int_to_ptr.vmem [resolvable:$true] %s155
      %158 = dma.hbm_to_vmem [thread:$0]  %s27, 16, %s156, [#allocation12]
    $region57: #{tpu_custom_call.1} parent=1 // pred_fallthru
      _
    // Predicated region
    $region58: #{tpu_custom_call.1} parent=1 // pred_check
      _
    $region59: #{tpu_custom_call.1} parent=1 // pred_check_branch
      %160 = sbr.rel (0) target = $region61
    $region60: #{tpu_custom_call.1} parent=1 // pred_region
      _
    $region61: #{tpu_custom_call.1} parent=1 // pred_fallthru
      _
    // Predicated region
    $region62: #{tpu_custom_call.1} parent=1 // pred_check
      _
    $region63: #{tpu_custom_call.1} parent=1 // pred_check_branch
      %162 = sbr.rel (0) target = $region65
    $region64: #{tpu_custom_call.1} parent=1 // pred_region
      %s164 = ssub.s32 16, 16
      %165 = vsyncadd [#allocation15], %s164
      %s167 = sshll.u32 [#allocation14], 4
      %s168 = int_to_ptr.vmem [resolvable:$true] %s167
      %170 = dma.hbm_to_vmem [thread:$0]  %s31, 16, %s168, [#allocation15]
    $region65: #{tpu_custom_call.1} parent=1 // pred_fallthru
      _
    // Predicated region
    $region66: #{tpu_custom_call.1} parent=1 // pred_check
      _
    $region67: #{tpu_custom_call.1} parent=1 // pred_check_branch
      %172 = sbr.rel (0) target = $region69
    $region68: #{tpu_custom_call.1} parent=1 // pred_region
      _
    $region69: #{tpu_custom_call.1} parent=1 // pred_fallthru
      _
    // Predicated region
    $region70: #{tpu_custom_call.1} parent=1 // pred_check
      _
    $region71: #{tpu_custom_call.1} parent=1 // pred_check_branch
      %174 = sbr.rel (0) target = $region73
    $region72: #{tpu_custom_call.1} parent=1 // pred_region
      %s176 = ssub.s32 16, 16
      %177 = vsyncadd [#allocation15], %s176
      %s179 = sshll.u32 [#allocation16], 4
      %s180 = int_to_ptr.vmem [resolvable:$true] %s179
      %182 = dma.hbm_to_vmem [thread:$0]  %s35, 16, %s180, [#allocation15]
    $region73: #{tpu_custom_call.1} parent=1 // pred_fallthru
      _
    // Predicated region
    $region74: #{tpu_custom_call.1} parent=1 // pred_check
      _
    $region75: #{tpu_custom_call.1} parent=1 // pred_check_branch
      %184 = sbr.rel (0) target = $region77
    $region76: #{tpu_custom_call.1} parent=1 // pred_region
      %s186 = ssub.s32 512, 512
      %187 = vsyncadd [#allocation18], %s186
      %s188 = sshll.u32 [#allocation17], 4
      %s189 = int_to_ptr.vmem [resolvable:$true] %s188
      %194 = dma.hbm_to_vmem [thread:$0]  %s37, 512, %s189, [#allocation18], 128, 128, 8
    $region77: #{tpu_custom_call.1} parent=1 // pred_fallthru
      _
    // Predicated region
    $region78: #{tpu_custom_call.1} parent=1 // pred_check
      _
    $region79: #{tpu_custom_call.1} parent=1 // pred_check_branch
      %196 = sbr.rel (0) target = $region81
    $region80: #{tpu_custom_call.1} parent=1 // pred_region
      %s198 = ssub.s32 16, 16
      %199 = vsyncadd [#allocation18], %s198
      %s201 = sshll.u32 [#allocation19], 4
      %s202 = int_to_ptr.vmem [resolvable:$true] %s201
      %204 = dma.hbm_to_vmem [thread:$0]  %s39, 16, %s202, [#allocation18]
    $region81: #{tpu_custom_call.1} parent=1 // pred_fallthru
      _
    // Predicated region
    $region82: #{tpu_custom_call.1} parent=1 // pred_check
      _
    $region83: #{tpu_custom_call.1} parent=1 // pred_check_branch
      %206 = sbr.rel (0) target = $region85
    $region84: #{tpu_custom_call.1} parent=1 // pred_region
      _
    $region85: #{tpu_custom_call.1} parent=1 // pred_fallthru
      _
    // Predicated region
    $region86: #{tpu_custom_call.1} parent=1 // pred_check
      _
    $region87: #{tpu_custom_call.1} parent=1 // pred_check_branch
      %208 = sbr.rel (0) target = $region89
    $region88: #{tpu_custom_call.1} parent=1 // pred_region
      _
    $region89: #{tpu_custom_call.1} parent=1 // pred_fallthru
      _
    // Predicated region
    $region90: #{tpu_custom_call.1} parent=1 // pred_check
      _
    $region91: #{tpu_custom_call.1} parent=1 // pred_check_branch
      %210 = sbr.rel (0) target = $region93
    $region92: #{tpu_custom_call.1} parent=1 // pred_region
      _
    $region93: #{tpu_custom_call.1} parent=1 // pred_fallthru
      _
    // Predicated region
    $region94: #{tpu_custom_call.1} parent=1 // pred_check
      _
    $region95: #{tpu_custom_call.1} parent=1 // pred_check_branch
      %212 = sbr.rel (0) target = $region97
    $region96: #{tpu_custom_call.1} parent=1 // pred_region
      _
    $region97: #{tpu_custom_call.1} parent=1 // pred_fallthru
      _
    // Predicated region
    $region98: #{tpu_custom_call.1} parent=1 // pred_check
      _
    $region99: #{tpu_custom_call.1} parent=1 // pred_check_branch
      %214 = sbr.rel (0) target = $region101
    $region100: #{tpu_custom_call.1} parent=1 // pred_region
      _
    $region101: #{tpu_custom_call.1} parent=1 // pred_fallthru
      _
    // Predicated region
    $region102: #{tpu_custom_call.1} parent=1 // pred_check
      _
    $region103: #{tpu_custom_call.1} parent=1 // pred_check_branch
      %216 = sbr.rel (0) target = $region105
    $region104: #{tpu_custom_call.1} parent=1 // pred_region
      _
    $region105: #{tpu_custom_call.1} parent=1 // pred_fallthru
      _
    // Predicated region
    $region106: #{tpu_custom_call.1} parent=1 // pred_check
      _
    $region107: #{tpu_custom_call.1} parent=1 // pred_check_branch
      %218 = sbr.rel (0) target = $region109
    $region108: #{tpu_custom_call.1} parent=1 // pred_region
      _
    $region109: #{tpu_custom_call.1} parent=1 // pred_fallthru
      _
    // Predicated region
    $region110: #{tpu_custom_call.1} parent=1 // pred_check
      _
    $region111: #{tpu_custom_call.1} parent=1 // pred_check_branch
      %220 = sbr.rel (0) target = $region113
    $region112: #{tpu_custom_call.1} parent=1 // pred_region
      _
    $region113: #{tpu_custom_call.1} parent=1 // pred_fallthru
      _
    // Predicated region
    $region114: #{tpu_custom_call.1} parent=1 // pred_check
      _
    $region115: #{tpu_custom_call.1} parent=1 // pred_check_branch
      %222 = sbr.rel (0) target = $region117
    $region116: #{tpu_custom_call.1} parent=1 // pred_region
      _
    $region117: #{tpu_custom_call.1} parent=1 // pred_fallthru
      _
    // Predicated region
    $region118: #{tpu_custom_call.1} parent=1 // pred_check
      _
    $region119: #{tpu_custom_call.1} parent=1 // pred_check_branch
      %224 = sbr.rel (0) target = $region121
    $region120: #{tpu_custom_call.1} parent=1 // pred_region
      _
    $region121: #{tpu_custom_call.1} parent=1 // pred_fallthru
      _
    // Predicated region
    $region122: #{tpu_custom_call.1} parent=1 // pred_check
      _
    $region123: #{tpu_custom_call.1} parent=1 // pred_check_branch
      %226 = sbr.rel (0) target = $region125
    $region124: #{tpu_custom_call.1} parent=1 // pred_region
      %227 = dma.done [#allocation3], 256
    $region125: #{tpu_custom_call.1} parent=1 // pred_fallthru
      _
    // Predicated region
    $region126: #{tpu_custom_call.1} parent=1 // pred_check
      _
    $region127: #{tpu_custom_call.1} parent=1 // pred_check_branch
      %229 = sbr.rel (0) target = $region129
    $region128: #{tpu_custom_call.1} parent=1 // pred_region
      %230 = dma.done [#allocation6], 32
    $region129: #{tpu_custom_call.1} parent=1 // pred_fallthru
      _
    // Predicated region
    $region130: #{tpu_custom_call.1} parent=1 // pred_check
      _
    $region131: #{tpu_custom_call.1} parent=1 // pred_check_branch
      %232 = sbr.rel (0) target = $region133
    $region132: #{tpu_custom_call.1} parent=1 // pred_region
      %233 = dma.done [#allocation6], 128
    $region133: #{tpu_custom_call.1} parent=1 // pred_fallthru
      _
    // Predicated region
    $region134: #{tpu_custom_call.1} parent=1 // pred_check
      _
    $region135: #{tpu_custom_call.1} parent=1 // pred_check_branch
      %235 = sbr.rel (0) target = $region137
    $region136: #{tpu_custom_call.1} parent=1 // pred_region
      %236 = dma.done [#allocation9], 16
    $region137: #{tpu_custom_call.1} parent=1 // pred_fallthru
      _
    // Predicated region
    $region138: #{tpu_custom_call.1} parent=1 // pred_check
      _
    $region139: #{tpu_custom_call.1} parent=1 // pred_check_branch
      %238 = sbr.rel (0) target = $region141
    $region140: #{tpu_custom_call.1} parent=1 // pred_region
      %239 = dma.done [#allocation9], 16
    $region141: #{tpu_custom_call.1} parent=1 // pred_fallthru
      _
    // Predicated region
    $region142: #{tpu_custom_call.1} parent=1 // pred_check
      _
    $region143: #{tpu_custom_call.1} parent=1 // pred_check_branch
      %241 = sbr.rel (0) target = $region145
    $region144: #{tpu_custom_call.1} parent=1 // pred_region
      %242 = dma.done [#allocation12], 16
    $region145: #{tpu_custom_call.1} parent=1 // pred_fallthru
      _
    // Predicated region
    $region146: #{tpu_custom_call.1} parent=1 // pred_check
      _
    $region147: #{tpu_custom_call.1} parent=1 // pred_check_branch
      %244 = sbr.rel (0) target = $region149
    $region148: #{tpu_custom_call.1} parent=1 // pred_region
      %245 = dma.done [#allocation12], 16
    $region149: #{tpu_custom_call.1} parent=1 // pred_fallthru
      _
    // Predicated region
    $region150: #{tpu_custom_call.1} parent=1 // pred_check
      _
    $region151: #{tpu_custom_call.1} parent=1 // pred_check_branch
      %247 = sbr.rel (0) target = $region153
    $region152: #{tpu_custom_call.1} parent=1 // pred_region
      %248 = dma.done [#allocation15], 16
    $region153: #{tpu_custom_call.1} parent=1 // pred_fallthru
      _
    // Predicated region
    $region154: #{tpu_custom_call.1} parent=1 // pred_check
      _
    $region155: #{tpu_custom_call.1} parent=1 // pred_check_branch
      %250 = sbr.rel (0) target = $region157
    $region156: #{tpu_custom_call.1} parent=1 // pred_region
      %251 = dma.done [#allocation15], 16
    $region157: #{tpu_custom_call.1} parent=1 // pred_fallthru
      _
    // Predicated region
    $region158: #{tpu_custom_call.1} parent=1 // pred_check
      _
    $region159: #{tpu_custom_call.1} parent=1 // pred_check_branch
      %253 = sbr.rel (0) target = $region161
    $region160: #{tpu_custom_call.1} parent=1 // pred_region
      %254 = dma.done [#allocation18], 512
    $region161: #{tpu_custom_call.1} parent=1 // pred_fallthru
      _
    // Predicated region
    $region162: #{tpu_custom_call.1} parent=1 // pred_check
      _
    $region163: #{tpu_custom_call.1} parent=1 // pred_check_branch
      %256 = sbr.rel (0) target = $region165
    $region164: #{tpu_custom_call.1} parent=1 // pred_region
      %257 = dma.done [#allocation18], 16
    $region165: #{tpu_custom_call.1} parent=1 // pred_fallthru
      _
    %v259 = vld [vmem:[%s1] sm:$0xff]
    %v260 = vld [vmem:[%s1 + $0x8] sm:$0xff]
    %v261 = vld [vmem:[#allocation2] sm:$0xff]
    %v262 = vld [vmem:[#allocation2 + $0x8] sm:$0xff]
    %v263 = vpack.c.bf16 %v262, %v261
    %v264 = vld [vmem:[#allocation5] sm:$0x3]
    %v265 = vld [vmem:[%s7] sm:$0xff]
    %v266 = vld [vmem:[%s7 + $0x8] sm:$0xff]
    %v267 = vpack.c.bf16 %v266, %v265
    %v268 = vpack.c.bf16 %v264, %v264
    %vm269 = vcmask 15360
    %v271 = vsel %vm269, %v267, 0
    %vm273 = vcmask 1040384
    %v275 = vsel %vm273, %v268, 0
    %277 = vmatprep.subr.bf16.mxu0 0
    %278 = vmatpush1.bf16.msra.mxu0 %v275
    %279 = vmatprep.subr.bf16.mxu0 0
    %280 = vmatpush1.bf16.msra.mxu0 0
    %281 = vmatprep.subr.bf16.mxu0 0
    %282 = vmatpush1.bf16.msra.mxu0 0
    %283 = vmatprep.subr.bf16.mxu0 0
    %284 = vmatpush1.bf16.msra.mxu0 0
    %285 = vmatprep.subr.bf16.mxu0 0
    %286 = vmatpush1.bf16.msra.mxu0 0
    %287 = vmatprep.subr.bf16.mxu0 0
    %288 = vmatpush1.bf16.msra.mxu0 0
    %289 = vmatprep.subr.bf16.mxu0 0
    %290 = vmatpush1.bf16.msra.mxu0 0
    %291 = vmatprep.subr.bf16.mxu0 0
    %292 = vmatpush1.bf16.msra.mxu0 0
    %293 = vmatprep.subr.bf16.mxu0 0
    %294 = vmatpush1.bf16.msra.mxu0 0
    %295 = vmatprep.subr.bf16.mxu0 0
    %296 = vmatpush1.bf16.msra.mxu0 0
    %297 = vmatprep.subr.bf16.mxu0 0
    %298 = vmatpush1.bf16.msra.mxu0 0
    %299 = vmatprep.subr.bf16.mxu0 0
    %300 = vmatpush1.bf16.msra.mxu0 0
    %301 = vmatprep.subr.bf16.mxu0 0
    %302 = vmatpush1.bf16.msra.mxu0 0
    %303 = vmatprep.subr.bf16.mxu0 0
    %304 = vmatpush1.bf16.msra.mxu0 0
    %305 = vmatprep.subr.bf16.mxu0 0
    %306 = vmatpush1.bf16.msra.mxu0 0
    %307 = vmatprep.subr.bf16.mxu0 0
    %308 = vmatpush1.bf16.msra.mxu0 0
    %309 = vmatprep.mubr.bf16.mxu0 0
    %310 = vmatmul.mubr.bf16.gmra.mrb[0].mxu0 %v271
    %v311 = vpop.f32.mrb[0].mxu0
    %v312 = vadd.f32 0.0, %v311
    %v313 = vpop.f32.mrb[0].mxu0
    %v314 = vpop.f32.mrb[0].mxu0
    %v315 = vadd.f32 0.0, %v314
    %v316 = vpop.f32.mrb[0].mxu0
    %317 = vdwg.mxu0
    %vm318 = vcmp.gt.f32.partialorder %v312, 0.5
    %vm319 = vcmp.gt.f32.partialorder %v315, 0.5
    %v320 = vlaneseq
    %v321 = vshrl.u32 %v320, 7
    %v322 = vadd.s32 %v321, 8
    %v323 = vlaneseq
    %v324 = vand.u32 %v323, 127
    %vm325 = vcmp.lt.s32.totalorder %v324, %v321
    %vm326 = vcmp.lt.s32.totalorder %v324, %v322
    %vm327 = vcmp.eq.s32.totalorder %v321, 0
    %v328 = vsel %vm327, 1, 0
    %v329 = vcvt.s32.f32 %v328
    %vm330 = vcmp.eq.s32.totalorder %v321, 1
    %v331 = vsel %vm330, 1, 0
    %v332 = vcvt.s32.f32 %v331
    %v333 = vpack.c.bf16 %v260, %v259
    %vm334 = vcmask 130048
    %v336 = vsel %vm334, %v263, 0
    %338 = vmatprep.subr.bf16.mxu0 0
    %339 = vmatpush1.bf16.msra.mxu0 %v333
    %340 = vmatprep.subr.bf16.mxu0 0
    %341 = vmatpush1.bf16.msra.mxu0 0
    %342 = vmatprep.subr.bf16.mxu0 0
    %343 = vmatpush1.bf16.msra.mxu0 0
    %344 = vmatprep.subr.bf16.mxu0 0
    %345 = vmatpush1.bf16.msra.mxu0 0
    %346 = vmatprep.subr.bf16.mxu0 0
    %347 = vmatpush1.bf16.msra.mxu0 0
    %348 = vmatprep.subr.bf16.mxu0 0
    %349 = vmatpush1.bf16.msra.mxu0 0
    %350 = vmatprep.subr.bf16.mxu0 0
    %351 = vmatpush1.bf16.msra.mxu0 0
    %352 = vmatprep.subr.bf16.mxu0 0
    %353 = vmatpush1.bf16.msra.mxu0 0
    %354 = vmatprep.subr.bf16.mxu0 0
    %355 = vmatpush1.bf16.msra.mxu0 0
    %356 = vmatprep.subr.bf16.mxu0 0
    %357 = vmatpush1.bf16.msra.mxu0 0
    %358 = vmatprep.subr.bf16.mxu0 0
    %359 = vmatpush1.bf16.msra.mxu0 0
    %360 = vmatprep.subr.bf16.mxu0 0
    %361 = vmatpush1.bf16.msra.mxu0 0
    %362 = vmatprep.subr.bf16.mxu0 0
    %363 = vmatpush1.bf16.msra.mxu0 0
    %364 = vmatprep.subr.bf16.mxu0 0
    %365 = vmatpush1.bf16.msra.mxu0 0
    %366 = vmatprep.subr.bf16.mxu0 0
    %367 = vmatpush1.bf16.msra.mxu0 0
    %368 = vmatprep.subr.bf16.mxu0 0
    %369 = vmatpush1.bf16.msra.mxu0 0
    %370 = vmatprep.mubr.bf16.mxu0 0
    %371 = vmatmul.mubr.bf16.gmra.mrb[0].mxu0 %v336
    %v372 = vpop.f32.mrb[0].mxu0
    %v373 = vadd.f32 0.0, %v372
    %v374 = vpop.f32.mrb[0].mxu0
    %v375 = vpop.f32.mrb[0].mxu0
    %v376 = vadd.f32 0.0, %v375
    %v377 = vpop.f32.mrb[0].mxu0
    %378 = vdwg.mxu0
    %v379 = vadd.f32 %v259, %v373
    %v380 = vadd.f32 %v260, %v376
    %v381 = vld [vmem:[#allocation7] sm:$0xff]
    %v382 = vpack.c.bf16 %v380, %v379
    %v383 = vpack.c.bf16 %v381, %v381
    %v384 = vld [vmem:[%s11] sm:$0x1]
    %v386 = vlaneseq
    %v387 = vshrl.u32 %v386, 7
    %v388 = vsub.s32 0, %v387
    %v389 = vrot.slane %v384, %v388
    %vm391 = vcmask 64512
    %v393 = vsel %vm391, %v382, 0
    %vm395 = vcmask 1043456
    %v397 = vsel %vm395, %v383, 0
    %399 = vmatprep.subr.bf16.mxu0 0
    %400 = vmatpush1.bf16.msra.mxu0 %v397
    %401 = vmatprep.subr.bf16.mxu0 0
    %402 = vmatpush1.bf16.msra.mxu0 0
    %403 = vmatprep.subr.bf16.mxu0 0
    %404 = vmatpush1.bf16.msra.mxu0 0
    %405 = vmatprep.subr.bf16.mxu0 0
    %406 = vmatpush1.bf16.msra.mxu0 0
    %407 = vmatprep.subr.bf16.mxu0 0
    %408 = vmatpush1.bf16.msra.mxu0 0
    %409 = vmatprep.subr.bf16.mxu0 0
    %410 = vmatpush1.bf16.msra.mxu0 0
    %411 = vmatprep.subr.bf16.mxu0 0
    %412 = vmatpush1.bf16.msra.mxu0 0
    %413 = vmatprep.subr.bf16.mxu0 0
    %414 = vmatpush1.bf16.msra.mxu0 0
    %415 = vmatprep.subr.bf16.mxu0 0
    %416 = vmatpush1.bf16.msra.mxu0 0
    %417 = vmatprep.subr.bf16.mxu0 0
    %418 = vmatpush1.bf16.msra.mxu0 0
    %419 = vmatprep.subr.bf16.mxu0 0
    %420 = vmatpush1.bf16.msra.mxu0 0
    %421 = vmatprep.subr.bf16.mxu0 0
    %422 = vmatpush1.bf16.msra.mxu0 0
    %423 = vmatprep.subr.bf16.mxu0 0
    %424 = vmatpush1.bf16.msra.mxu0 0
    %425 = vmatprep.subr.bf16.mxu0 0
    %426 = vmatpush1.bf16.msra.mxu0 0
    %427 = vmatprep.subr.bf16.mxu0 0
    %428 = vmatpush1.bf16.msra.mxu0 0
    %429 = vmatprep.subr.bf16.mxu0 0
    %430 = vmatpush1.bf16.msra.mxu0 0
    %431 = vmatprep.mubr.bf16.mxu0 0
    %432 = vmatmul.mubr.bf16.gmra.mrb[0].mxu0 %v393
    %v433 = vpop.f32.mrb[0].mxu0
    %v434 = vadd.f32 %v389, %v433
    %v435 = vpop.f32.mrb[0].mxu0
    %v436 = vpop.f32.mrb[0].mxu0
    %v437 = vadd.f32 %v389, %v436
    %v438 = vpop.f32.mrb[0].mxu0
    %439 = vdwg.mxu0
    %v440 = vmax.f32 %v434, 0.0
    %v441 = vmax.f32 %v437, 0.0
    %v442 = vld [vmem:[%s13] sm:$0xff]
    %v443 = vld [vmem:[%s13 + $0x8] sm:$0xff]
    %v444 = vld [vmem:[%s13 + $0x10] sm:$0xff]
    %v445 = vld [vmem:[%s13 + $0x18] sm:$0xff]
    %v446 = vpack.c.bf16 %v441, %v440
    %v447 = vpack.c.bf16 %v443, %v442
    %v448 = vpack.c.bf16 %v445, %v444
    %v449 = vld [vmem:[#allocation8] sm:$0x1]
    %v451 = vlaneseq
    %v452 = vshrl.u32 %v451, 7
    %v453 = vsub.s32 0, %v452
    %v454 = vrot.slane %v449, %v453
    %vm456 = vcmask 261120
    %v458 = vsel %vm456, %v446, 0
    %460 = vmatprep.subr.bf16.mxu0 0
    %461 = vmatpush1.bf16.msra.mxu0 %v447
    %462 = vmatprep.subr.bf16.mxu0 0
    %463 = vmatpush1.bf16.msra.mxu0 %v448
    %464 = vmatprep.subr.bf16.mxu0 0
    %465 = vmatpush1.bf16.msra.mxu0 0
    %466 = vmatprep.subr.bf16.mxu0 0
    %467 = vmatpush1.bf16.msra.mxu0 0
    %468 = vmatprep.subr.bf16.mxu0 0
    %469 = vmatpush1.bf16.msra.mxu0 0
    %470 = vmatprep.subr.bf16.mxu0 0
    %471 = vmatpush1.bf16.msra.mxu0 0
    %472 = vmatprep.subr.bf16.mxu0 0
    %473 = vmatpush1.bf16.msra.mxu0 0
    %474 = vmatprep.subr.bf16.mxu0 0
    %475 = vmatpush1.bf16.msra.mxu0 0
    %476 = vmatprep.subr.bf16.mxu0 0
    %477 = vmatpush1.bf16.msra.mxu0 0
    %478 = vmatprep.subr.bf16.mxu0 0
    %479 = vmatpush1.bf16.msra.mxu0 0
    %480 = vmatprep.subr.bf16.mxu0 0
    %481 = vmatpush1.bf16.msra.mxu0 0
    %482 = vmatprep.subr.bf16.mxu0 0
    %483 = vmatpush1.bf16.msra.mxu0 0
    %484 = vmatprep.subr.bf16.mxu0 0
    %485 = vmatpush1.bf16.msra.mxu0 0
    %486 = vmatprep.subr.bf16.mxu0 0
    %487 = vmatpush1.bf16.msra.mxu0 0
    %488 = vmatprep.subr.bf16.mxu0 0
    %489 = vmatpush1.bf16.msra.mxu0 0
    %490 = vmatprep.subr.bf16.mxu0 0
    %491 = vmatpush1.bf16.msra.mxu0 0
    %492 = vmatprep.mubr.bf16.mxu0 0
    %493 = vmatmul.mubr.bf16.gmra.mrb[0].mxu0 %v458
    %v494 = vpop.f32.mrb[0].mxu0
    %v495 = vadd.f32 %v454, %v494
    %v496 = vpop.f32.mrb[0].mxu0
    %v497 = vpop.f32.mrb[0].mxu0
    %v498 = vadd.f32 %v454, %v497
    %v499 = vpop.f32.mrb[0].mxu0
    %500 = vdwg.mxu0
    %v501 = vmax.f32 %v495, 0.0
    %v502 = vmax.f32 %v498, 0.0
    %v503 = vld [vmem:[%s41] sm:$0x1]
    %v504 = vmul.f32 %v503, %v503
    %vm505 = vcmask 253952
    %v506 = vsel %vm505, %v504, 0.0
    %507 = vadd.xlane.f32.xlu0 %v506
    %v508 = vpop.xlane.xlu0 %507
    %v509 = vrot.slane %v508, 4
    %v510 = vadd.f32 %v508, %v509
    %v511 = vrot.slane %v510, 2
    %v512 = vadd.f32 %v510, %v511
    %v513 = vrot.slane %v512, 1
    %v514 = vadd.f32 %v512, %v513
    %s515 = vtos %v514
    %v516 = vstv %s515
    %v517 = vrsqrt.pop %v516
    %v518 = vmul.f32 %v516, %v517
    %vm519 = vcmp.eq.f32.partialorder %v516, inf
    %v520 = vsel %vm519, %v516, %v518
    %vm521 = vcmp.eq.f32.partialorder %v516, 0.0
    %v522 = vand.u32 %v516, 2147483648
    %v523 = vsel %vm521, %v522, %v520
    %s524 = vtos %v523
    %v526 = vlaneseq
    %v527 = vshrl.u32 %v526, 7
    %v528 = vsub.s32 0, %v527
    %v529 = vrot.slane %v503, %v528
    %v531 = vmul.f32 %v501, %v529
    %v532 = vmul.f32 %v502, %v529
    %v533 = vsel %vm456, %v531, 0.0
    %534 = vadd.xlane.f32.xlu0 %v533
    %v535 = vpop.xlane.xlu0 %534
    %v536 = vsel %vm456, %v532, 0.0
    %537 = vadd.xlane.f32.xlu0 %v536
    %v538 = vpop.xlane.xlu0 %537
    %v539 = vstv %s524
    %v540 = vrcp.pop %v539
    %v541 = vmul.f32 %v535, %v540
    %v542 = vmul.f32 %v538, %v540
    %543 = vxpose.xlu0.b32.start [1/16] %v541, 128
    %544 = vxpose.xlu0.b32.cont [2/16] %v542, 128
    %545 = vxpose.xlu0.b32.cont [3/16] 0.0, 128
    %546 = vxpose.xlu0.b32.cont [4/16] 0.0, 128
    %547 = vxpose.xlu0.b32.cont [5/16] 0.0, 128
    %548 = vxpose.xlu0.b32.cont [6/16] 0.0, 128
    %549 = vxpose.xlu0.b32.cont [7/16] 0.0, 128
    %550 = vxpose.xlu0.b32.cont [8/16] 0.0, 128
    %551 = vxpose.xlu0.b32.cont [9/16] 0.0, 128
    %552 = vxpose.xlu0.b32.cont [10/16] 0.0, 128
    %553 = vxpose.xlu0.b32.cont [11/16] 0.0, 128
    %554 = vxpose.xlu0.b32.cont [12/16] 0.0, 128
    %555 = vxpose.xlu0.b32.cont [13/16] 0.0, 128
    %556 = vxpose.xlu0.b32.cont [14/16] 0.0, 128
    %557 = vxpose.xlu0.b32.cont [15/16] 0.0, 128
    %558 = vxpose.xlu0.b32.end [16/16] 0.0, 128
    %v559 = vpop.trf.xlu0
    %v560 = vpop.trf.xlu0
    %v561 = vpop.trf.xlu0
    %v562 = vpop.trf.xlu0
    %v563 = vpop.trf.xlu0
    %v564 = vpop.trf.xlu0
    %v565 = vpop.trf.xlu0
    %v566 = vpop.trf.xlu0
    %v567 = vpop.trf.xlu0
    %v568 = vpop.trf.xlu0
    %v569 = vpop.trf.xlu0
    %v570 = vpop.trf.xlu0
    %v571 = vpop.trf.xlu0
    %v572 = vpop.trf.xlu0
    %v573 = vpop.trf.xlu0
    %v574 = vpop.trf.xlu0
    %575 = vxpose.xlu0.b32.start [1/16] 1.0, 128
    %576 = vxpose.xlu0.b32.cont [2/16] 1.0, 128
    %577 = vxpose.xlu0.b32.cont [3/16] 0.0, 128
    %578 = vxpose.xlu0.b32.cont [4/16] 0.0, 128
    %579 = vxpose.xlu0.b32.cont [5/16] 0.0, 128
    %580 = vxpose.xlu0.b32.cont [6/16] 0.0, 128
    %581 = vxpose.xlu0.b32.cont [7/16] 0.0, 128
    %582 = vxpose.xlu0.b32.cont [8/16] 0.0, 128
    %583 = vxpose.xlu0.b32.cont [9/16] 0.0, 128
    %584 = vxpose.xlu0.b32.cont [10/16] 0.0, 128
    %585 = vxpose.xlu0.b32.cont [11/16] 0.0, 128
    %586 = vxpose.xlu0.b32.cont [12/16] 0.0, 128
    %587 = vxpose.xlu0.b32.cont [13/16] 0.0, 128
    %588 = vxpose.xlu0.b32.cont [14/16] 0.0, 128
    %589 = vxpose.xlu0.b32.cont [15/16] 0.0, 128
    %590 = vxpose.xlu0.b32.end [16/16] 0.0, 128
    %v591 = vpop.trf.xlu0
    %v592 = vpop.trf.xlu0
    %v593 = vpop.trf.xlu0
    %v594 = vpop.trf.xlu0
    %v595 = vpop.trf.xlu0
    %v596 = vpop.trf.xlu0
    %v597 = vpop.trf.xlu0
    %v598 = vpop.trf.xlu0
    %v599 = vpop.trf.xlu0
    %v600 = vpop.trf.xlu0
    %v601 = vpop.trf.xlu0
    %v602 = vpop.trf.xlu0
    %v603 = vpop.trf.xlu0
    %v604 = vpop.trf.xlu0
    %v605 = vpop.trf.xlu0
    %v606 = vpop.trf.xlu0
    %vm607 = vcmp.gt.f32.partialorder %v591, 0.5
    %v608 = vsel %vm607, 1, 0
    %v609 = vlaneseq
    %v610 = vshrl.u32 %v609, 7
    %v611 = vsub.s32 0, %v610
    %v612 = vrot.slane %v608, %v611
    %vm613 = vcmp.eq.s32.totalorder %v612, 1
    %vm614 = vmand %vm318, %vm613
    %vm615 = vmand %vm319, %vm613
    %v616 = vlaneseq
    %v617 = vshrl.u32 %v616, 7
    %v618 = vsub.s32 0, %v617
    %v619 = vrot.slane %v559, %v618
    %vm620 = vcmp.gt.f32.partialorder %v619, %v541
    %vm621 = vcmp.gt.f32.partialorder %v619, %v542
    %vm622 = vcmp.eq.f32.partialorder %v619, %v541
    %vm623 = vcmp.eq.f32.partialorder %v619, %v542
    %vm624 = vmand %vm622, %vm325
    %vm625 = vmand %vm623, %vm326
    %vm626 = vmor %vm620, %vm624
    %vm627 = vmor %vm621, %vm625
    %vm628 = vmand %vm614, %vm626
    %vm629 = vmand %vm615, %vm627
    %v630 = vsel %vm628, 1.0, 0.0
    %v631 = vsel %vm629, 1.0, 0.0
    %v632 = vsel %vm334, %v630, 0.0
    %633 = vadd.xlane.f32.xlu0 %v632
    %v634 = vpop.xlane.xlu0 %633
    %v635 = vsel %vm334, %v631, 0.0
    %636 = vadd.xlane.f32.xlu0 %v635
    %v637 = vpop.xlane.xlu0 %636
    %v638 = vsel %vm614, 1.0, 0.0
    %v639 = vsel %vm615, 1.0, 0.0
    %v640 = vsel %vm334, %v638, 0.0
    %641 = vadd.xlane.f32.xlu0 %v640
    %v642 = vpop.xlane.xlu0 %641
    %v643 = vsel %vm334, %v639, 0.0
    %644 = vadd.xlane.f32.xlu0 %v643
    %v645 = vpop.xlane.xlu0 %644
    %v646 = vmul.f32 %v642, 0.8
    %v647 = vmul.f32 %v645, 0.8
    %v648 = vceil.f32 %v646
    %v649 = vceil.f32 %v647
    %vm650 = vcmp.gt.f32.partialorder 1.0, 0.5
    %vm651 = vcmp.lt.f32.partialorder %v634, %v648
    %vm652 = vcmp.lt.f32.partialorder %v637, %v649
    %vm653 = vmand %vm650, %vm651
    %vm654 = vmand %vm650, %vm652
    %v655 = vsel %vm653, 1, 0
    %v656 = vsel %vm654, 1, 0
    %v657 = vcvt.s32.f32 %v655
    %v658 = vcvt.s32.f32 %v656
    %v659 = vtanh.pop %v541
    %v660 = vtanh.pop %v542
    %v661 = vmul.f32 %v501, %v659
    %v662 = vmul.f32 %v502, %v660
    %v663 = vmul.f32 %v661, %v657
    %v664 = vmul.f32 %v662, %v658
    %665 = vxpose.xlu0.b32.start [1/16] %v657, 128
    %666 = vxpose.xlu0.b32.cont [2/16] %v658, 128
    %667 = vxpose.xlu0.b32.cont [3/16] 0.0, 128
    %668 = vxpose.xlu0.b32.cont [4/16] 0.0, 128
    %669 = vxpose.xlu0.b32.cont [5/16] 0.0, 128
    %670 = vxpose.xlu0.b32.cont [6/16] 0.0, 128
    %671 = vxpose.xlu0.b32.cont [7/16] 0.0, 128
    %672 = vxpose.xlu0.b32.cont [8/16] 0.0, 128
    %673 = vxpose.xlu0.b32.cont [9/16] 0.0, 128
    %674 = vxpose.xlu0.b32.cont [10/16] 0.0, 128
    %675 = vxpose.xlu0.b32.cont [11/16] 0.0, 128
    %676 = vxpose.xlu0.b32.cont [12/16] 0.0, 128
    %677 = vxpose.xlu0.b32.cont [13/16] 0.0, 128
    %678 = vxpose.xlu0.b32.cont [14/16] 0.0, 128
    %679 = vxpose.xlu0.b32.cont [15/16] 0.0, 128
    %680 = vxpose.xlu0.b32.end [16/16] 0.0, 128
    %v681 = vpop.trf.xlu0
    %v682 = vpop.trf.xlu0
    %v683 = vpop.trf.xlu0
    %v684 = vpop.trf.xlu0
    %v685 = vpop.trf.xlu0
    %v686 = vpop.trf.xlu0
    %v687 = vpop.trf.xlu0
    %v688 = vpop.trf.xlu0
    %v689 = vpop.trf.xlu0
    %v690 = vpop.trf.xlu0
    %v691 = vpop.trf.xlu0
    %v692 = vpop.trf.xlu0
    %v693 = vpop.trf.xlu0
    %v694 = vpop.trf.xlu0
    %v695 = vpop.trf.xlu0
    %v696 = vpop.trf.xlu0
    %v697 = vlaneseq
    %v698 = vshrl.u32 %v697, 7
    %v699 = vsub.s32 0, %v698
    %v700 = vrot.slane %v681, %v699
    %v701 = vmul.f32 %v264, %v700
    %vm702 = vcmask 123904
    %v703 = vsel %vm702, %v701, 0.0
    %704 = vadd.xlane.f32.xlu0 %v703
    %v705 = vpop.xlane.xlu0 %704
    %v706 = vpack.c.bf16 %v701, %v701
    %v707 = vpack.c.bf16 %v664, %v663
    %v709 = vsel %vm334, %v706, 0
    %711 = vmatprep.subr.bf16.mxu0 0
    %712 = vmatpush1.bf16.msra.mxu0 %v707
    %713 = vmatprep.subr.bf16.mxu0 0
    %714 = vmatpush1.bf16.msra.mxu0 0
    %715 = vmatprep.subr.bf16.mxu0 0
    %716 = vmatpush1.bf16.msra.mxu0 0
    %717 = vmatprep.subr.bf16.mxu0 0
    %718 = vmatpush1.bf16.msra.mxu0 0
    %719 = vmatprep.subr.bf16.mxu0 0
    %720 = vmatpush1.bf16.msra.mxu0 0
    %721 = vmatprep.subr.bf16.mxu0 0
    %722 = vmatpush1.bf16.msra.mxu0 0
    %723 = vmatprep.subr.bf16.mxu0 0
    %724 = vmatpush1.bf16.msra.mxu0 0
    %725 = vmatprep.subr.bf16.mxu0 0
    %726 = vmatpush1.bf16.msra.mxu0 0
    %727 = vmatprep.subr.bf16.mxu0 0
    %728 = vmatpush1.bf16.msra.mxu0 0
    %729 = vmatprep.subr.bf16.mxu0 0
    %730 = vmatpush1.bf16.msra.mxu0 0
    %731 = vmatprep.subr.bf16.mxu0 0
    %732 = vmatpush1.bf16.msra.mxu0 0
    %733 = vmatprep.subr.bf16.mxu0 0
    %734 = vmatpush1.bf16.msra.mxu0 0
    %735 = vmatprep.subr.bf16.mxu0 0
    %736 = vmatpush1.bf16.msra.mxu0 0
    %737 = vmatprep.subr.bf16.mxu0 0
    %738 = vmatpush1.bf16.msra.mxu0 0
    %739 = vmatprep.subr.bf16.mxu0 0
    %740 = vmatpush1.bf16.msra.mxu0 0
    %741 = vmatprep.subr.bf16.mxu0 0
    %742 = vmatpush1.bf16.msra.mxu0 0
    %743 = vmatprep.mubr.bf16.mxu0 0
    %744 = vmatmul.mubr.bf16.gmra.mrb[0].mxu0 %v709
    %v745 = vpop.f32.mrb[0].mxu0
    %v746 = vadd.f32 0.0, %v745
    %v747 = vpop.f32.mrb[0].mxu0
    %v748 = vpop.f32.mrb[0].mxu0
    %v749 = vpop.f32.mrb[0].mxu0
    %750 = vdwg.mxu0
    %v751 = vmax.f32 %v705, 1.0
    %v752 = vrcp.pop %v751
    %v753 = vmul.f32 %v746, %v752
    %v754 = vadd.f32 %v753, 0.0
    %v755 = vmul.f32 %v265, %v657
    %v756 = vmul.f32 %v266, %v658
    %vm757 = vcmp.gt.f32.partialorder %v755, 0.5
    %vm758 = vcmp.gt.f32.partialorder %v756, 0.5
    %v759 = vsel %vm757, 1, 0
    %v760 = vsel %vm758, 1, 0
    %761 = vset.pattern.permute.xlu0 0
    %762 = vperm.xlu0 %761, %v759
    %v763 = vpop.permute.xlu0 %762
    %764 = vset.pattern.permute.xlu0 0
    %765 = vperm.xlu0 %764, %v760
    %v766 = vpop.permute.xlu0 %765
    %vm767 = vcmp.eq.s32.totalorder %v763, 1
    %vm768 = vcmp.eq.s32.totalorder %v766, 1
    %v769 = vsel %vm767, %v663, -3e+38
    %v770 = vsel %vm768, %v664, -3e+38
    %v771 = vsel %vm456, %v769, -inf
    %v772 = vsel %vm456, %v770, -inf
    %v773 = vmax.f32 %v771, %v772
    %v774 = vrot.slane %v773, 4
    %v775 = vmax.f32 %v773, %v774
    %v776 = vrot.slane %v775, 2
    %v777 = vmax.f32 %v775, %v776
    %v778 = vrot.slane %v777, 1
    %v779 = vmax.f32 %v777, %v778
    %vm780 = vcmp.gt.f32.partialorder %v705, 0.5
    %v781 = vsel %vm780, 1, 0
    %vm782 = vcmp.eq.s32.totalorder %v781, 1
    %v783 = vsel %vm782, %v779, 0.0
    %v784 = vlaneseq
    %v785 = vshrl.u32 %v784, 7
    %v786 = vsub.s32 0, %v785
    %v787 = vrot.slane %v783, %v786
    %v788 = vmul.f32 %v329, %v787
    %v789 = vadd.f32 %v788, 0.0
    %790 = vset.pattern.permute.xlu0 1
    %791 = vperm.xlu0 %790, %v759
    %v792 = vpop.permute.xlu0 %791
    %793 = vset.pattern.permute.xlu0 1
    %794 = vperm.xlu0 %793, %v760
    %v795 = vpop.permute.xlu0 %794
    %vm796 = vcmp.eq.s32.totalorder %v792, 1
    %vm797 = vcmp.eq.s32.totalorder %v795, 1
    %v798 = vsel %vm796, %v663, -3e+38
    %v799 = vsel %vm797, %v664, -3e+38
    %v800 = vsel %vm456, %v798, -inf
    %v801 = vsel %vm456, %v799, -inf
    %v802 = vmax.f32 %v800, %v801
    %v803 = vrot.slane %v802, 4
    %v804 = vmax.f32 %v802, %v803
    %v805 = vrot.slane %v804, 2
    %v806 = vmax.f32 %v804, %v805
    %v807 = vrot.slane %v806, 1
    %v808 = vmax.f32 %v806, %v807
    %v809 = vsel %vm782, %v808, 0.0
    %v810 = vlaneseq
    %v811 = vshrl.u32 %v810, 7
    %v812 = vsub.s32 1, %v811
    %v813 = vrot.slane %v809, %v812
    %v814 = vmul.f32 %v332, %v813
    %v815 = vadd.f32 %v789, %v814
    %816 = vmatprep.subr.bf16.mxu0 0
    %817 = vmatpush1.bf16.msra.mxu0 %v707
    %818 = vmatprep.subr.bf16.mxu0 0
    %819 = vmatpush1.bf16.msra.mxu0 0
    %820 = vmatprep.subr.bf16.mxu0 0
    %821 = vmatpush1.bf16.msra.mxu0 0
    %822 = vmatprep.subr.bf16.mxu0 0
    %823 = vmatpush1.bf16.msra.mxu0 0
    %824 = vmatprep.subr.bf16.mxu0 0
    %825 = vmatpush1.bf16.msra.mxu0 0
    %826 = vmatprep.subr.bf16.mxu0 0
    %827 = vmatpush1.bf16.msra.mxu0 0
    %828 = vmatprep.subr.bf16.mxu0 0
    %829 = vmatpush1.bf16.msra.mxu0 0
    %830 = vmatprep.subr.bf16.mxu0 0
    %831 = vmatpush1.bf16.msra.mxu0 0
    %832 = vmatprep.subr.bf16.mxu0 0
    %833 = vmatpush1.bf16.msra.mxu0 0
    %834 = vmatprep.subr.bf16.mxu0 0
    %835 = vmatpush1.bf16.msra.mxu0 0
    %836 = vmatprep.subr.bf16.mxu0 0
    %837 = vmatpush1.bf16.msra.mxu0 0
    %838 = vmatprep.subr.bf16.mxu0 0
    %839 = vmatpush1.bf16.msra.mxu0 0
    %840 = vmatprep.subr.bf16.mxu0 0
    %841 = vmatpush1.bf16.msra.mxu0 0
    %842 = vmatprep.subr.bf16.mxu0 0
    %843 = vmatpush1.bf16.msra.mxu0 0
    %844 = vmatprep.subr.bf16.mxu0 0
    %845 = vmatpush1.bf16.msra.mxu0 0
    %846 = vmatprep.subr.bf16.mxu0 0
    %847 = vmatpush1.bf16.msra.mxu0 0
    %848 = vmatprep.mubr.bf16.mxu0 0
    %849 = vmatmul.mubr.bf16.gmra.mrb[0].mxu0 %v336
    %v850 = vpop.f32.mrb[0].mxu0
    %v851 = vadd.f32 0.0, %v850
    %v852 = vpop.f32.mrb[0].mxu0
    %v853 = vpop.f32.mrb[0].mxu0
    %v854 = vadd.f32 0.0, %v853
    %v855 = vpop.f32.mrb[0].mxu0
    %856 = vdwg.mxu0
    %v857 = vadd.f32 %v663, %v851
    %v858 = vadd.f32 %v664, %v854
    %v859 = vld [vmem:[%s17] sm:$0xff]
    %v860 = vld [vmem:[%s17 + $0x8] sm:$0xff]
    %v861 = vld [vmem:[%s17 + $0x10] sm:$0xff]
    %v862 = vld [vmem:[%s17 + $0x18] sm:$0xff]
    %v863 = vpack.c.bf16 %v858, %v857
    %v864 = vpack.c.bf16 %v860, %v859
    %v865 = vpack.c.bf16 %v862, %v861
    %v866 = vld [vmem:[#allocation10] sm:$0x1]
    %v868 = vlaneseq
    %v869 = vshrl.u32 %v868, 7
    %v870 = vsub.s32 0, %v869
    %v871 = vrot.slane %v866, %v870
    %v874 = vsel %vm456, %v863, 0
    %876 = vmatprep.subr.bf16.mxu0 0
    %877 = vmatpush1.bf16.msra.mxu0 %v864
    %878 = vmatprep.subr.bf16.mxu0 0
    %879 = vmatpush1.bf16.msra.mxu0 %v865
    %880 = vmatprep.subr.bf16.mxu0 0
    %881 = vmatpush1.bf16.msra.mxu0 0
    %882 = vmatprep.subr.bf16.mxu0 0
    %883 = vmatpush1.bf16.msra.mxu0 0
    %884 = vmatprep.subr.bf16.mxu0 0
    %885 = vmatpush1.bf16.msra.mxu0 0
    %886 = vmatprep.subr.bf16.mxu0 0
    %887 = vmatpush1.bf16.msra.mxu0 0
    %888 = vmatprep.subr.bf16.mxu0 0
    %889 = vmatpush1.bf16.msra.mxu0 0
    %890 = vmatprep.subr.bf16.mxu0 0
    %891 = vmatpush1.bf16.msra.mxu0 0
    %892 = vmatprep.subr.bf16.mxu0 0
    %893 = vmatpush1.bf16.msra.mxu0 0
    %894 = vmatprep.subr.bf16.mxu0 0
    %895 = vmatpush1.bf16.msra.mxu0 0
    %896 = vmatprep.subr.bf16.mxu0 0
    %897 = vmatpush1.bf16.msra.mxu0 0
    %898 = vmatprep.subr.bf16.mxu0 0
    %899 = vmatpush1.bf16.msra.mxu0 0
    %900 = vmatprep.subr.bf16.mxu0 0
    %901 = vmatpush1.bf16.msra.mxu0 0
    %902 = vmatprep.subr.bf16.mxu0 0
    %903 = vmatpush1.bf16.msra.mxu0 0
    %904 = vmatprep.subr.bf16.mxu0 0
    %905 = vmatpush1.bf16.msra.mxu0 0
    %906 = vmatprep.subr.bf16.mxu0 0
    %907 = vmatpush1.bf16.msra.mxu0 0
    %908 = vmatprep.mubr.bf16.mxu0 0
    %909 = vmatmul.mubr.bf16.gmra.mrb[0].mxu0 %v874
    %v910 = vpop.f32.mrb[0].mxu0
    %v911 = vadd.f32 %v871, %v910
    %v912 = vpop.f32.mrb[0].mxu0
    %v913 = vpop.f32.mrb[0].mxu0
    %v914 = vadd.f32 %v871, %v913
    %v915 = vpop.f32.mrb[0].mxu0
    %916 = vdwg.mxu0
    %v917 = vmax.f32 %v911, 0.0
    %v918 = vmax.f32 %v914, 0.0
    %v919 = vld [vmem:[%s21] sm:$0xff]
    %v920 = vld [vmem:[%s21 + $0x8] sm:$0xff]
    %v921 = vld [vmem:[%s21 + $0x10] sm:$0xff]
    %v922 = vld [vmem:[%s21 + $0x18] sm:$0xff]
    %v923 = vpack.c.bf16 %v918, %v917
    %v924 = vpack.c.bf16 %v920, %v919
    %v925 = vpack.c.bf16 %v922, %v921
    %v926 = vld [vmem:[#allocation11] sm:$0x1]
    %v928 = vlaneseq
    %v929 = vshrl.u32 %v928, 7
    %v930 = vsub.s32 0, %v929
    %v931 = vrot.slane %v926, %v930
    %v934 = vsel %vm456, %v923, 0
    %936 = vmatprep.subr.bf16.mxu0 0
    %937 = vmatpush1.bf16.msra.mxu0 %v924
    %938 = vmatprep.subr.bf16.mxu0 0
    %939 = vmatpush1.bf16.msra.mxu0 %v925
    %940 = vmatprep.subr.bf16.mxu0 0
    %941 = vmatpush1.bf16.msra.mxu0 0
    %942 = vmatprep.subr.bf16.mxu0 0
    %943 = vmatpush1.bf16.msra.mxu0 0
    %944 = vmatprep.subr.bf16.mxu0 0
    %945 = vmatpush1.bf16.msra.mxu0 0
    %946 = vmatprep.subr.bf16.mxu0 0
    %947 = vmatpush1.bf16.msra.mxu0 0
    %948 = vmatprep.subr.bf16.mxu0 0
    %949 = vmatpush1.bf16.msra.mxu0 0
    %950 = vmatprep.subr.bf16.mxu0 0
    %951 = vmatpush1.bf16.msra.mxu0 0
    %952 = vmatprep.subr.bf16.mxu0 0
    %953 = vmatpush1.bf16.msra.mxu0 0
    %954 = vmatprep.subr.bf16.mxu0 0
    %955 = vmatpush1.bf16.msra.mxu0 0
    %956 = vmatprep.subr.bf16.mxu0 0
    %957 = vmatpush1.bf16.msra.mxu0 0
    %958 = vmatprep.subr.bf16.mxu0 0
    %959 = vmatpush1.bf16.msra.mxu0 0
    %960 = vmatprep.subr.bf16.mxu0 0
    %961 = vmatpush1.bf16.msra.mxu0 0
    %962 = vmatprep.subr.bf16.mxu0 0
    %963 = vmatpush1.bf16.msra.mxu0 0
    %964 = vmatprep.subr.bf16.mxu0 0
    %965 = vmatpush1.bf16.msra.mxu0 0
    %966 = vmatprep.subr.bf16.mxu0 0
    %967 = vmatpush1.bf16.msra.mxu0 0
    %968 = vmatprep.mubr.bf16.mxu0 0
    %969 = vmatmul.mubr.bf16.gmra.mrb[0].mxu0 %v934
    %v970 = vpop.f32.mrb[0].mxu0
    %v971 = vadd.f32 %v931, %v970
    %v972 = vpop.f32.mrb[0].mxu0
    %v973 = vpop.f32.mrb[0].mxu0
    %v974 = vadd.f32 %v931, %v973
    %v975 = vpop.f32.mrb[0].mxu0
    %976 = vdwg.mxu0
    %v977 = vmax.f32 %v971, 0.0
    %v978 = vmax.f32 %v974, 0.0
    %v979 = vld [vmem:[%s43] sm:$0x1]
    %v980 = vmul.f32 %v979, %v979
    %v981 = vsel %vm505, %v980, 0.0
    %982 = vadd.xlane.f32.xlu0 %v981
    %v983 = vpop.xlane.xlu0 %982
    %v984 = vrot.slane %v983, 4
    %v985 = vadd.f32 %v983, %v984
    %v986 = vrot.slane %v985, 2
    %v987 = vadd.f32 %v985, %v986
    %v988 = vrot.slane %v987, 1
    %v989 = vadd.f32 %v987, %v988
    %s990 = vtos %v989
    %v991 = vstv %s990
    %v992 = vrsqrt.pop %v991
    %v993 = vmul.f32 %v991, %v992
    %vm994 = vcmp.eq.f32.partialorder %v991, inf
    %v995 = vsel %vm994, %v991, %v993
    %vm996 = vcmp.eq.f32.partialorder %v991, 0.0
    %v997 = vand.u32 %v991, 2147483648
    %v998 = vsel %vm996, %v997, %v995
    %s999 = vtos %v998
    %v1001 = vlaneseq
    %v1002 = vshrl.u32 %v1001, 7
    %v1003 = vsub.s32 0, %v1002
    %v1004 = vrot.slane %v979, %v1003
    %v1006 = vmul.f32 %v977, %v1004
    %v1007 = vmul.f32 %v978, %v1004
    %v1008 = vsel %vm456, %v1006, 0.0
    %1009 = vadd.xlane.f32.xlu0 %v1008
    %v1010 = vpop.xlane.xlu0 %1009
    %v1011 = vsel %vm456, %v1007, 0.0
    %1012 = vadd.xlane.f32.xlu0 %v1011
    %v1013 = vpop.xlane.xlu0 %1012
    %v1014 = vstv %s999
    %v1015 = vrcp.pop %v1014
    %v1016 = vmul.f32 %v1010, %v1015
    %v1017 = vmul.f32 %v1013, %v1015
    %1018 = vxpose.xlu0.b32.start [1/16] %v1016, 128
    %1019 = vxpose.xlu0.b32.cont [2/16] %v1017, 128
    %1020 = vxpose.xlu0.b32.cont [3/16] 0.0, 128
    %1021 = vxpose.xlu0.b32.cont [4/16] 0.0, 128
    %1022 = vxpose.xlu0.b32.cont [5/16] 0.0, 128
    %1023 = vxpose.xlu0.b32.cont [6/16] 0.0, 128
    %1024 = vxpose.xlu0.b32.cont [7/16] 0.0, 128
    %1025 = vxpose.xlu0.b32.cont [8/16] 0.0, 128
    %1026 = vxpose.xlu0.b32.cont [9/16] 0.0, 128
    %1027 = vxpose.xlu0.b32.cont [10/16] 0.0, 128
    %1028 = vxpose.xlu0.b32.cont [11/16] 0.0, 128
    %1029 = vxpose.xlu0.b32.cont [12/16] 0.0, 128
    %1030 = vxpose.xlu0.b32.cont [13/16] 0.0, 128
    %1031 = vxpose.xlu0.b32.cont [14/16] 0.0, 128
    %1032 = vxpose.xlu0.b32.cont [15/16] 0.0, 128
    %1033 = vxpose.xlu0.b32.end [16/16] 0.0, 128
    %v1034 = vpop.trf.xlu0
    %v1035 = vpop.trf.xlu0
    %v1036 = vpop.trf.xlu0
    %v1037 = vpop.trf.xlu0
    %v1038 = vpop.trf.xlu0
    %v1039 = vpop.trf.xlu0
    %v1040 = vpop.trf.xlu0
    %v1041 = vpop.trf.xlu0
    %v1042 = vpop.trf.xlu0
    %v1043 = vpop.trf.xlu0
    %v1044 = vpop.trf.xlu0
    %v1045 = vpop.trf.xlu0
    %v1046 = vpop.trf.xlu0
    %v1047 = vpop.trf.xlu0
    %v1048 = vpop.trf.xlu0
    %v1049 = vpop.trf.xlu0
    %vm1050 = vcmp.gt.f32.partialorder %v681, 0.5
    %v1051 = vsel %vm1050, 1, 0
    %v1052 = vlaneseq
    %v1053 = vshrl.u32 %v1052, 7
    %v1054 = vsub.s32 0, %v1053
    %v1055 = vrot.slane %v1051, %v1054
    %vm1056 = vcmp.eq.s32.totalorder %v1055, 1
    %vm1057 = vmand %vm318, %vm1056
    %vm1058 = vmand %vm319, %vm1056
    %v1059 = vlaneseq
    %v1060 = vshrl.u32 %v1059, 7
    %v1061 = vsub.s32 0, %v1060
    %v1062 = vrot.slane %v1034, %v1061
    %vm1063 = vcmp.gt.f32.partialorder %v1062, %v1016
    %vm1064 = vcmp.gt.f32.partialorder %v1062, %v1017
    %vm1065 = vcmp.eq.f32.partialorder %v1062, %v1016
    %vm1066 = vcmp.eq.f32.partialorder %v1062, %v1017
    %vm1067 = vmand %vm1065, %vm325
    %vm1068 = vmand %vm1066, %vm326
    %vm1069 = vmor %vm1063, %vm1067
    %vm1070 = vmor %vm1064, %vm1068
    %vm1071 = vmand %vm1057, %vm1069
    %vm1072 = vmand %vm1058, %vm1070
    %v1073 = vsel %vm1071, 1.0, 0.0
    %v1074 = vsel %vm1072, 1.0, 0.0
    %v1075 = vsel %vm334, %v1073, 0.0
    %1076 = vadd.xlane.f32.xlu0 %v1075
    %v1077 = vpop.xlane.xlu0 %1076
    %v1078 = vsel %vm334, %v1074, 0.0
    %1079 = vadd.xlane.f32.xlu0 %v1078
    %v1080 = vpop.xlane.xlu0 %1079
    %v1081 = vsel %vm1057, 1.0, 0.0
    %v1082 = vsel %vm1058, 1.0, 0.0
    %v1083 = vsel %vm334, %v1081, 0.0
    %1084 = vadd.xlane.f32.xlu0 %v1083
    %v1085 = vpop.xlane.xlu0 %1084
    %v1086 = vsel %vm334, %v1082, 0.0
    %1087 = vadd.xlane.f32.xlu0 %v1086
    %v1088 = vpop.xlane.xlu0 %1087
    %v1089 = vmul.f32 %v1085, 0.8
    %v1090 = vmul.f32 %v1088, 0.8
    %v1091 = vceil.f32 %v1089
    %v1092 = vceil.f32 %v1090
    %vm1093 = vcmp.gt.f32.partialorder %v657, 0.5
    %vm1094 = vcmp.gt.f32.partialorder %v658, 0.5
    %vm1095 = vcmp.lt.f32.partialorder %v1077, %v1091
    %vm1096 = vcmp.lt.f32.partialorder %v1080, %v1092
    %vm1097 = vmand %vm1093, %vm1095
    %vm1098 = vmand %vm1094, %vm1096
    %v1099 = vsel %vm1097, 1, 0
    %v1100 = vsel %vm1098, 1, 0
    %v1101 = vcvt.s32.f32 %v1099
    %v1102 = vcvt.s32.f32 %v1100
    %v1103 = vtanh.pop %v1016
    %v1104 = vtanh.pop %v1017
    %v1105 = vmul.f32 %v977, %v1103
    %v1106 = vmul.f32 %v978, %v1104
    %v1107 = vmul.f32 %v1105, %v1101
    %v1108 = vmul.f32 %v1106, %v1102
    %1109 = vxpose.xlu0.b32.start [1/16] %v1101, 128
    %1110 = vxpose.xlu0.b32.cont [2/16] %v1102, 128
    %1111 = vxpose.xlu0.b32.cont [3/16] 0.0, 128
    %1112 = vxpose.xlu0.b32.cont [4/16] 0.0, 128
    %1113 = vxpose.xlu0.b32.cont [5/16] 0.0, 128
    %1114 = vxpose.xlu0.b32.cont [6/16] 0.0, 128
    %1115 = vxpose.xlu0.b32.cont [7/16] 0.0, 128
    %1116 = vxpose.xlu0.b32.cont [8/16] 0.0, 128
    %1117 = vxpose.xlu0.b32.cont [9/16] 0.0, 128
    %1118 = vxpose.xlu0.b32.cont [10/16] 0.0, 128
    %1119 = vxpose.xlu0.b32.cont [11/16] 0.0, 128
    %1120 = vxpose.xlu0.b32.cont [12/16] 0.0, 128
    %1121 = vxpose.xlu0.b32.cont [13/16] 0.0, 128
    %1122 = vxpose.xlu0.b32.cont [14/16] 0.0, 128
    %1123 = vxpose.xlu0.b32.cont [15/16] 0.0, 128
    %1124 = vxpose.xlu0.b32.end [16/16] 0.0, 128
    %v1125 = vpop.trf.xlu0
    %v1126 = vpop.trf.xlu0
    %v1127 = vpop.trf.xlu0
    %v1128 = vpop.trf.xlu0
    %v1129 = vpop.trf.xlu0
    %v1130 = vpop.trf.xlu0
    %v1131 = vpop.trf.xlu0
    %v1132 = vpop.trf.xlu0
    %v1133 = vpop.trf.xlu0
    %v1134 = vpop.trf.xlu0
    %v1135 = vpop.trf.xlu0
    %v1136 = vpop.trf.xlu0
    %v1137 = vpop.trf.xlu0
    %v1138 = vpop.trf.xlu0
    %v1139 = vpop.trf.xlu0
    %v1140 = vpop.trf.xlu0
    %v1141 = vlaneseq
    %v1142 = vshrl.u32 %v1141, 7
    %v1143 = vsub.s32 0, %v1142
    %v1144 = vrot.slane %v1125, %v1143
    %v1145 = vmul.f32 %v264, %v1144
    %v1146 = vsel %vm702, %v1145, 0.0
    %1147 = vadd.xlane.f32.xlu0 %v1146
    %v1148 = vpop.xlane.xlu0 %1147
    %v1149 = vpack.c.bf16 %v1145, %v1145
    %v1150 = vpack.c.bf16 %v1108, %v1107
    %v1152 = vsel %vm334, %v1149, 0
    %1154 = vmatprep.subr.bf16.mxu0 0
    %1155 = vmatpush1.bf16.msra.mxu0 %v1150
    %1156 = vmatprep.subr.bf16.mxu0 0
    %1157 = vmatpush1.bf16.msra.mxu0 0
    %1158 = vmatprep.subr.bf16.mxu0 0
    %1159 = vmatpush1.bf16.msra.mxu0 0
    %1160 = vmatprep.subr.bf16.mxu0 0
    %1161 = vmatpush1.bf16.msra.mxu0 0
    %1162 = vmatprep.subr.bf16.mxu0 0
    %1163 = vmatpush1.bf16.msra.mxu0 0
    %1164 = vmatprep.subr.bf16.mxu0 0
    %1165 = vmatpush1.bf16.msra.mxu0 0
    %1166 = vmatprep.subr.bf16.mxu0 0
    %1167 = vmatpush1.bf16.msra.mxu0 0
    %1168 = vmatprep.subr.bf16.mxu0 0
    %1169 = vmatpush1.bf16.msra.mxu0 0
    %1170 = vmatprep.subr.bf16.mxu0 0
    %1171 = vmatpush1.bf16.msra.mxu0 0
    %1172 = vmatprep.subr.bf16.mxu0 0
    %1173 = vmatpush1.bf16.msra.mxu0 0
    %1174 = vmatprep.subr.bf16.mxu0 0
    %1175 = vmatpush1.bf16.msra.mxu0 0
    %1176 = vmatprep.subr.bf16.mxu0 0
    %1177 = vmatpush1.bf16.msra.mxu0 0
    %1178 = vmatprep.subr.bf16.mxu0 0
    %1179 = vmatpush1.bf16.msra.mxu0 0
    %1180 = vmatprep.subr.bf16.mxu0 0
    %1181 = vmatpush1.bf16.msra.mxu0 0
    %1182 = vmatprep.subr.bf16.mxu0 0
    %1183 = vmatpush1.bf16.msra.mxu0 0
    %1184 = vmatprep.subr.bf16.mxu0 0
    %1185 = vmatpush1.bf16.msra.mxu0 0
    %1186 = vmatprep.mubr.bf16.mxu0 0
    %1187 = vmatmul.mubr.bf16.gmra.mrb[0].mxu0 %v1152
    %v1188 = vpop.f32.mrb[0].mxu0
    %v1189 = vadd.f32 0.0, %v1188
    %v1190 = vpop.f32.mrb[0].mxu0
    %v1191 = vpop.f32.mrb[0].mxu0
    %v1192 = vpop.f32.mrb[0].mxu0
    %1193 = vdwg.mxu0
    %v1194 = vmax.f32 %v1148, 1.0
    %v1195 = vrcp.pop %v1194
    %v1196 = vmul.f32 %v1189, %v1195
    %v1197 = vadd.f32 %v754, %v1196
    %v1198 = vmul.f32 %v265, %v1101
    %v1199 = vmul.f32 %v266, %v1102
    %vm1200 = vcmp.gt.f32.partialorder %v1198, 0.5
    %vm1201 = vcmp.gt.f32.partialorder %v1199, 0.5
    %v1202 = vsel %vm1200, 1, 0
    %v1203 = vsel %vm1201, 1, 0
    %1204 = vset.pattern.permute.xlu0 0
    %1205 = vperm.xlu0 %1204, %v1202
    %v1206 = vpop.permute.xlu0 %1205
    %1207 = vset.pattern.permute.xlu0 0
    %1208 = vperm.xlu0 %1207, %v1203
    %v1209 = vpop.permute.xlu0 %1208
    %vm1210 = vcmp.eq.s32.totalorder %v1206, 1
    %vm1211 = vcmp.eq.s32.totalorder %v1209, 1
    %v1212 = vsel %vm1210, %v1107, -3e+38
    %v1213 = vsel %vm1211, %v1108, -3e+38
    %v1214 = vsel %vm456, %v1212, -inf
    %v1215 = vsel %vm456, %v1213, -inf
    %v1216 = vmax.f32 %v1214, %v1215
    %v1217 = vrot.slane %v1216, 4
    %v1218 = vmax.f32 %v1216, %v1217
    %v1219 = vrot.slane %v1218, 2
    %v1220 = vmax.f32 %v1218, %v1219
    %v1221 = vrot.slane %v1220, 1
    %v1222 = vmax.f32 %v1220, %v1221
    %vm1223 = vcmp.gt.f32.partialorder %v1148, 0.5
    %v1224 = vsel %vm1223, 1, 0
    %vm1225 = vcmp.eq.s32.totalorder %v1224, 1
    %v1226 = vsel %vm1225, %v1222, 0.0
    %v1227 = vlaneseq
    %v1228 = vshrl.u32 %v1227, 7
    %v1229 = vsub.s32 0, %v1228
    %v1230 = vrot.slane %v1226, %v1229
    %v1231 = vmul.f32 %v329, %v1230
    %v1232 = vadd.f32 %v815, %v1231
    %1233 = vset.pattern.permute.xlu0 1
    %1234 = vperm.xlu0 %1233, %v1202
    %v1235 = vpop.permute.xlu0 %1234
    %1236 = vset.pattern.permute.xlu0 1
    %1237 = vperm.xlu0 %1236, %v1203
    %v1238 = vpop.permute.xlu0 %1237
    %vm1239 = vcmp.eq.s32.totalorder %v1235, 1
    %vm1240 = vcmp.eq.s32.totalorder %v1238, 1
    %v1241 = vsel %vm1239, %v1107, -3e+38
    %v1242 = vsel %vm1240, %v1108, -3e+38
    %v1243 = vsel %vm456, %v1241, -inf
    %v1244 = vsel %vm456, %v1242, -inf
    %v1245 = vmax.f32 %v1243, %v1244
    %v1246 = vrot.slane %v1245, 4
    %v1247 = vmax.f32 %v1245, %v1246
    %v1248 = vrot.slane %v1247, 2
    %v1249 = vmax.f32 %v1247, %v1248
    %v1250 = vrot.slane %v1249, 1
    %v1251 = vmax.f32 %v1249, %v1250
    %v1252 = vsel %vm1225, %v1251, 0.0
    %v1253 = vlaneseq
    %v1254 = vshrl.u32 %v1253, 7
    %v1255 = vsub.s32 1, %v1254
    %v1256 = vrot.slane %v1252, %v1255
    %v1257 = vmul.f32 %v332, %v1256
    %v1258 = vadd.f32 %v1232, %v1257
    %1259 = vmatprep.subr.bf16.mxu0 0
    %1260 = vmatpush1.bf16.msra.mxu0 %v1150
    %1261 = vmatprep.subr.bf16.mxu0 0
    %1262 = vmatpush1.bf16.msra.mxu0 0
    %1263 = vmatprep.subr.bf16.mxu0 0
    %1264 = vmatpush1.bf16.msra.mxu0 0
    %1265 = vmatprep.subr.bf16.mxu0 0
    %1266 = vmatpush1.bf16.msra.mxu0 0
    %1267 = vmatprep.subr.bf16.mxu0 0
    %1268 = vmatpush1.bf16.msra.mxu0 0
    %1269 = vmatprep.subr.bf16.mxu0 0
    %1270 = vmatpush1.bf16.msra.mxu0 0
    %1271 = vmatprep.subr.bf16.mxu0 0
    %1272 = vmatpush1.bf16.msra.mxu0 0
    %1273 = vmatprep.subr.bf16.mxu0 0
    %1274 = vmatpush1.bf16.msra.mxu0 0
    %1275 = vmatprep.subr.bf16.mxu0 0
    %1276 = vmatpush1.bf16.msra.mxu0 0
    %1277 = vmatprep.subr.bf16.mxu0 0
    %1278 = vmatpush1.bf16.msra.mxu0 0
    %1279 = vmatprep.subr.bf16.mxu0 0
    %1280 = vmatpush1.bf16.msra.mxu0 0
    %1281 = vmatprep.subr.bf16.mxu0 0
    %1282 = vmatpush1.bf16.msra.mxu0 0
    %1283 = vmatprep.subr.bf16.mxu0 0
    %1284 = vmatpush1.bf16.msra.mxu0 0
    %1285 = vmatprep.subr.bf16.mxu0 0
    %1286 = vmatpush1.bf16.msra.mxu0 0
    %1287 = vmatprep.subr.bf16.mxu0 0
    %1288 = vmatpush1.bf16.msra.mxu0 0
    %1289 = vmatprep.subr.bf16.mxu0 0
    %1290 = vmatpush1.bf16.msra.mxu0 0
    %1291 = vmatprep.mubr.bf16.mxu0 0
    %1292 = vmatmul.mubr.bf16.gmra.mrb[0].mxu0 %v336
    %v1293 = vpop.f32.mrb[0].mxu0
    %v1294 = vadd.f32 0.0, %v1293
    %v1295 = vpop.f32.mrb[0].mxu0
    %v1296 = vpop.f32.mrb[0].mxu0
    %v1297 = vadd.f32 0.0, %v1296
    %v1298 = vpop.f32.mrb[0].mxu0
    %1299 = vdwg.mxu0
    %v1300 = vadd.f32 %v1107, %v1294
    %v1301 = vadd.f32 %v1108, %v1297
    %v1302 = vld [vmem:[%s25] sm:$0xff]
    %v1303 = vld [vmem:[%s25 + $0x8] sm:$0xff]
    %v1304 = vld [vmem:[%s25 + $0x10] sm:$0xff]
    %v1305 = vld [vmem:[%s25 + $0x18] sm:$0xff]
    %v1306 = vpack.c.bf16 %v1301, %v1300
    %v1307 = vpack.c.bf16 %v1303, %v1302
    %v1308 = vpack.c.bf16 %v1305, %v1304
    %v1309 = vld [vmem:[#allocation13] sm:$0x1]
    %v1311 = vlaneseq
    %v1312 = vshrl.u32 %v1311, 7
    %v1313 = vsub.s32 0, %v1312
    %v1314 = vrot.slane %v1309, %v1313
    %v1317 = vsel %vm456, %v1306, 0
    %1319 = vmatprep.subr.bf16.mxu0 0
    %1320 = vmatpush1.bf16.msra.mxu0 %v1307
    %1321 = vmatprep.subr.bf16.mxu0 0
    %1322 = vmatpush1.bf16.msra.mxu0 %v1308
    %1323 = vmatprep.subr.bf16.mxu0 0
    %1324 = vmatpush1.bf16.msra.mxu0 0
    %1325 = vmatprep.subr.bf16.mxu0 0
    %1326 = vmatpush1.bf16.msra.mxu0 0
    %1327 = vmatprep.subr.bf16.mxu0 0
    %1328 = vmatpush1.bf16.msra.mxu0 0
    %1329 = vmatprep.subr.bf16.mxu0 0
    %1330 = vmatpush1.bf16.msra.mxu0 0
    %1331 = vmatprep.subr.bf16.mxu0 0
    %1332 = vmatpush1.bf16.msra.mxu0 0
    %1333 = vmatprep.subr.bf16.mxu0 0
    %1334 = vmatpush1.bf16.msra.mxu0 0
    %1335 = vmatprep.subr.bf16.mxu0 0
    %1336 = vmatpush1.bf16.msra.mxu0 0
    %1337 = vmatprep.subr.bf16.mxu0 0
    %1338 = vmatpush1.bf16.msra.mxu0 0
    %1339 = vmatprep.subr.bf16.mxu0 0
    %1340 = vmatpush1.bf16.msra.mxu0 0
    %1341 = vmatprep.subr.bf16.mxu0 0
    %1342 = vmatpush1.bf16.msra.mxu0 0
    %1343 = vmatprep.subr.bf16.mxu0 0
    %1344 = vmatpush1.bf16.msra.mxu0 0
    %1345 = vmatprep.subr.bf16.mxu0 0
    %1346 = vmatpush1.bf16.msra.mxu0 0
    %1347 = vmatprep.subr.bf16.mxu0 0
    %1348 = vmatpush1.bf16.msra.mxu0 0
    %1349 = vmatprep.subr.bf16.mxu0 0
    %1350 = vmatpush1.bf16.msra.mxu0 0
    %1351 = vmatprep.mubr.bf16.mxu0 0
    %1352 = vmatmul.mubr.bf16.gmra.mrb[0].mxu0 %v1317
    %v1353 = vpop.f32.mrb[0].mxu0
    %v1354 = vadd.f32 %v1314, %v1353
    %v1355 = vpop.f32.mrb[0].mxu0
    %v1356 = vpop.f32.mrb[0].mxu0
    %v1357 = vadd.f32 %v1314, %v1356
    %v1358 = vpop.f32.mrb[0].mxu0
    %1359 = vdwg.mxu0
    %v1360 = vmax.f32 %v1354, 0.0
    %v1361 = vmax.f32 %v1357, 0.0
    %v1362 = vld [vmem:[%s29] sm:$0xff]
    %v1363 = vld [vmem:[%s29 + $0x8] sm:$0xff]
    %v1364 = vld [vmem:[%s29 + $0x10] sm:$0xff]
    %v1365 = vld [vmem:[%s29 + $0x18] sm:$0xff]
    %v1366 = vpack.c.bf16 %v1361, %v1360
    %v1367 = vpack.c.bf16 %v1363, %v1362
    %v1368 = vpack.c.bf16 %v1365, %v1364
    %v1369 = vld [vmem:[#allocation14] sm:$0x1]
    %v1371 = vlaneseq
    %v1372 = vshrl.u32 %v1371, 7
    %v1373 = vsub.s32 0, %v1372
    %v1374 = vrot.slane %v1369, %v1373
    %v1377 = vsel %vm456, %v1366, 0
    %1379 = vmatprep.subr.bf16.mxu0 0
    %1380 = vmatpush1.bf16.msra.mxu0 %v1367
    %1381 = vmatprep.subr.bf16.mxu0 0
    %1382 = vmatpush1.bf16.msra.mxu0 %v1368
    %1383 = vmatprep.subr.bf16.mxu0 0
    %1384 = vmatpush1.bf16.msra.mxu0 0
    %1385 = vmatprep.subr.bf16.mxu0 0
    %1386 = vmatpush1.bf16.msra.mxu0 0
    %1387 = vmatprep.subr.bf16.mxu0 0
    %1388 = vmatpush1.bf16.msra.mxu0 0
    %1389 = vmatprep.subr.bf16.mxu0 0
    %1390 = vmatpush1.bf16.msra.mxu0 0
    %1391 = vmatprep.subr.bf16.mxu0 0
    %1392 = vmatpush1.bf16.msra.mxu0 0
    %1393 = vmatprep.subr.bf16.mxu0 0
    %1394 = vmatpush1.bf16.msra.mxu0 0
    %1395 = vmatprep.subr.bf16.mxu0 0
    %1396 = vmatpush1.bf16.msra.mxu0 0
    %1397 = vmatprep.subr.bf16.mxu0 0
    %1398 = vmatpush1.bf16.msra.mxu0 0
    %1399 = vmatprep.subr.bf16.mxu0 0
    %1400 = vmatpush1.bf16.msra.mxu0 0
    %1401 = vmatprep.subr.bf16.mxu0 0
    %1402 = vmatpush1.bf16.msra.mxu0 0
    %1403 = vmatprep.subr.bf16.mxu0 0
    %1404 = vmatpush1.bf16.msra.mxu0 0
    %1405 = vmatprep.subr.bf16.mxu0 0
    %1406 = vmatpush1.bf16.msra.mxu0 0
    %1407 = vmatprep.subr.bf16.mxu0 0
    %1408 = vmatpush1.bf16.msra.mxu0 0
    %1409 = vmatprep.subr.bf16.mxu0 0
    %1410 = vmatpush1.bf16.msra.mxu0 0
    %1411 = vmatprep.mubr.bf16.mxu0 0
    %1412 = vmatmul.mubr.bf16.gmra.mrb[0].mxu0 %v1377
    %v1413 = vpop.f32.mrb[0].mxu0
    %v1414 = vadd.f32 %v1374, %v1413
    %v1415 = vpop.f32.mrb[0].mxu0
    %v1416 = vpop.f32.mrb[0].mxu0
    %v1417 = vadd.f32 %v1374, %v1416
    %v1418 = vpop.f32.mrb[0].mxu0
    %1419 = vdwg.mxu0
    %v1420 = vmax.f32 %v1414, 0.0
    %v1421 = vmax.f32 %v1417, 0.0
    %v1422 = vld [vmem:[%s45] sm:$0x1]
    %v1423 = vmul.f32 %v1422, %v1422
    %v1424 = vsel %vm505, %v1423, 0.0
    %1425 = vadd.xlane.f32.xlu0 %v1424
    %v1426 = vpop.xlane.xlu0 %1425
    %v1427 = vrot.slane %v1426, 4
    %v1428 = vadd.f32 %v1426, %v1427
    %v1429 = vrot.slane %v1428, 2
    %v1430 = vadd.f32 %v1428, %v1429
    %v1431 = vrot.slane %v1430, 1
    %v1432 = vadd.f32 %v1430, %v1431
    %s1433 = vtos %v1432
    %v1434 = vstv %s1433
    %v1435 = vrsqrt.pop %v1434
    %v1436 = vmul.f32 %v1434, %v1435
    %vm1437 = vcmp.eq.f32.partialorder %v1434, inf
    %v1438 = vsel %vm1437, %v1434, %v1436
    %vm1439 = vcmp.eq.f32.partialorder %v1434, 0.0
    %v1440 = vand.u32 %v1434, 2147483648
    %v1441 = vsel %vm1439, %v1440, %v1438
    %s1442 = vtos %v1441
    %v1444 = vlaneseq
    %v1445 = vshrl.u32 %v1444, 7
    %v1446 = vsub.s32 0, %v1445
    %v1447 = vrot.slane %v1422, %v1446
    %v1449 = vmul.f32 %v1420, %v1447
    %v1450 = vmul.f32 %v1421, %v1447
    %v1451 = vsel %vm456, %v1449, 0.0
    %1452 = vadd.xlane.f32.xlu0 %v1451
    %v1453 = vpop.xlane.xlu0 %1452
    %v1454 = vsel %vm456, %v1450, 0.0
    %1455 = vadd.xlane.f32.xlu0 %v1454
    %v1456 = vpop.xlane.xlu0 %1455
    %v1457 = vstv %s1442
    %v1458 = vrcp.pop %v1457
    %v1459 = vmul.f32 %v1453, %v1458
    %v1460 = vmul.f32 %v1456, %v1458
    %1461 = vxpose.xlu0.b32.start [1/16] %v1459, 128
    %1462 = vxpose.xlu0.b32.cont [2/16] %v1460, 128
    %1463 = vxpose.xlu0.b32.cont [3/16] 0.0, 128
    %1464 = vxpose.xlu0.b32.cont [4/16] 0.0, 128
    %1465 = vxpose.xlu0.b32.cont [5/16] 0.0, 128
    %1466 = vxpose.xlu0.b32.cont [6/16] 0.0, 128
    %1467 = vxpose.xlu0.b32.cont [7/16] 0.0, 128
    %1468 = vxpose.xlu0.b32.cont [8/16] 0.0, 128
    %1469 = vxpose.xlu0.b32.cont [9/16] 0.0, 128
    %1470 = vxpose.xlu0.b32.cont [10/16] 0.0, 128
    %1471 = vxpose.xlu0.b32.cont [11/16] 0.0, 128
    %1472 = vxpose.xlu0.b32.cont [12/16] 0.0, 128
    %1473 = vxpose.xlu0.b32.cont [13/16] 0.0, 128
    %1474 = vxpose.xlu0.b32.cont [14/16] 0.0, 128
    %1475 = vxpose.xlu0.b32.cont [15/16] 0.0, 128
    %1476 = vxpose.xlu0.b32.end [16/16] 0.0, 128
    %v1477 = vpop.trf.xlu0
    %v1478 = vpop.trf.xlu0
    %v1479 = vpop.trf.xlu0
    %v1480 = vpop.trf.xlu0
    %v1481 = vpop.trf.xlu0
    %v1482 = vpop.trf.xlu0
    %v1483 = vpop.trf.xlu0
    %v1484 = vpop.trf.xlu0
    %v1485 = vpop.trf.xlu0
    %v1486 = vpop.trf.xlu0
    %v1487 = vpop.trf.xlu0
    %v1488 = vpop.trf.xlu0
    %v1489 = vpop.trf.xlu0
    %v1490 = vpop.trf.xlu0
    %v1491 = vpop.trf.xlu0
    %v1492 = vpop.trf.xlu0
    %vm1493 = vcmp.gt.f32.partialorder %v1125, 0.5
    %v1494 = vsel %vm1493, 1, 0
    %v1495 = vlaneseq
    %v1496 = vshrl.u32 %v1495, 7
    %v1497 = vsub.s32 0, %v1496
    %v1498 = vrot.slane %v1494, %v1497
    %vm1499 = vcmp.eq.s32.totalorder %v1498, 1
    %vm1500 = vmand %vm318, %vm1499
    %vm1501 = vmand %vm319, %vm1499
    %v1502 = vlaneseq
    %v1503 = vshrl.u32 %v1502, 7
    %v1504 = vsub.s32 0, %v1503
    %v1505 = vrot.slane %v1477, %v1504
    %vm1506 = vcmp.gt.f32.partialorder %v1505, %v1459
    %vm1507 = vcmp.gt.f32.partialorder %v1505, %v1460
    %vm1508 = vcmp.eq.f32.partialorder %v1505, %v1459
    %vm1509 = vcmp.eq.f32.partialorder %v1505, %v1460
    %vm1510 = vmand %vm1508, %vm325
    %vm1511 = vmand %vm1509, %vm326
    %vm1512 = vmor %vm1506, %vm1510
    %vm1513 = vmor %vm1507, %vm1511
    %vm1514 = vmand %vm1500, %vm1512
    %vm1515 = vmand %vm1501, %vm1513
    %v1516 = vsel %vm1514, 1.0, 0.0
    %v1517 = vsel %vm1515, 1.0, 0.0
    %v1518 = vsel %vm334, %v1516, 0.0
    %1519 = vadd.xlane.f32.xlu0 %v1518
    %v1520 = vpop.xlane.xlu0 %1519
    %v1521 = vsel %vm334, %v1517, 0.0
    %1522 = vadd.xlane.f32.xlu0 %v1521
    %v1523 = vpop.xlane.xlu0 %1522
    %v1524 = vsel %vm1500, 1.0, 0.0
    %v1525 = vsel %vm1501, 1.0, 0.0
    %v1526 = vsel %vm334, %v1524, 0.0
    %1527 = vadd.xlane.f32.xlu0 %v1526
    %v1528 = vpop.xlane.xlu0 %1527
    %v1529 = vsel %vm334, %v1525, 0.0
    %1530 = vadd.xlane.f32.xlu0 %v1529
    %v1531 = vpop.xlane.xlu0 %1530
    %v1532 = vmul.f32 %v1528, 0.8
    %v1533 = vmul.f32 %v1531, 0.8
    %v1534 = vceil.f32 %v1532
    %v1535 = vceil.f32 %v1533
    %vm1536 = vcmp.gt.f32.partialorder %v1101, 0.5
    %vm1537 = vcmp.gt.f32.partialorder %v1102, 0.5
    %vm1538 = vcmp.lt.f32.partialorder %v1520, %v1534
    %vm1539 = vcmp.lt.f32.partialorder %v1523, %v1535
    %vm1540 = vmand %vm1536, %vm1538
    %vm1541 = vmand %vm1537, %vm1539
    %v1542 = vsel %vm1540, 1, 0
    %v1543 = vsel %vm1541, 1, 0
    %v1544 = vcvt.s32.f32 %v1542
    %v1545 = vcvt.s32.f32 %v1543
    %v1546 = vtanh.pop %v1459
    %v1547 = vtanh.pop %v1460
    %v1548 = vmul.f32 %v1420, %v1546
    %v1549 = vmul.f32 %v1421, %v1547
    %v1550 = vmul.f32 %v1548, %v1544
    %v1551 = vmul.f32 %v1549, %v1545
    %1552 = vxpose.xlu0.b32.start [1/16] %v1544, 128
    %1553 = vxpose.xlu0.b32.cont [2/16] %v1545, 128
    %1554 = vxpose.xlu0.b32.cont [3/16] 0.0, 128
    %1555 = vxpose.xlu0.b32.cont [4/16] 0.0, 128
    %1556 = vxpose.xlu0.b32.cont [5/16] 0.0, 128
    %1557 = vxpose.xlu0.b32.cont [6/16] 0.0, 128
    %1558 = vxpose.xlu0.b32.cont [7/16] 0.0, 128
    %1559 = vxpose.xlu0.b32.cont [8/16] 0.0, 128
    %1560 = vxpose.xlu0.b32.cont [9/16] 0.0, 128
    %1561 = vxpose.xlu0.b32.cont [10/16] 0.0, 128
    %1562 = vxpose.xlu0.b32.cont [11/16] 0.0, 128
    %1563 = vxpose.xlu0.b32.cont [12/16] 0.0, 128
    %1564 = vxpose.xlu0.b32.cont [13/16] 0.0, 128
    %1565 = vxpose.xlu0.b32.cont [14/16] 0.0, 128
    %1566 = vxpose.xlu0.b32.cont [15/16] 0.0, 128
    %1567 = vxpose.xlu0.b32.end [16/16] 0.0, 128
    %v1568 = vpop.trf.xlu0
    %v1569 = vpop.trf.xlu0
    %v1570 = vpop.trf.xlu0
    %v1571 = vpop.trf.xlu0
    %v1572 = vpop.trf.xlu0
    %v1573 = vpop.trf.xlu0
    %v1574 = vpop.trf.xlu0
    %v1575 = vpop.trf.xlu0
    %v1576 = vpop.trf.xlu0
    %v1577 = vpop.trf.xlu0
    %v1578 = vpop.trf.xlu0
    %v1579 = vpop.trf.xlu0
    %v1580 = vpop.trf.xlu0
    %v1581 = vpop.trf.xlu0
    %v1582 = vpop.trf.xlu0
    %v1583 = vpop.trf.xlu0
    %v1584 = vlaneseq
    %v1585 = vshrl.u32 %v1584, 7
    %v1586 = vsub.s32 0, %v1585
    %v1587 = vrot.slane %v1568, %v1586
    %v1588 = vmul.f32 %v264, %v1587
    %v1589 = vsel %vm702, %v1588, 0.0
    %1590 = vadd.xlane.f32.xlu0 %v1589
    %v1591 = vpop.xlane.xlu0 %1590
    %v1592 = vpack.c.bf16 %v1588, %v1588
    %v1593 = vpack.c.bf16 %v1551, %v1550
    %v1595 = vsel %vm334, %v1592, 0
    %1597 = vmatprep.subr.bf16.mxu0 0
    %1598 = vmatpush1.bf16.msra.mxu0 %v1593
    %1599 = vmatprep.subr.bf16.mxu0 0
    %1600 = vmatpush1.bf16.msra.mxu0 0
    %1601 = vmatprep.subr.bf16.mxu0 0
    %1602 = vmatpush1.bf16.msra.mxu0 0
    %1603 = vmatprep.subr.bf16.mxu0 0
    %1604 = vmatpush1.bf16.msra.mxu0 0
    %1605 = vmatprep.subr.bf16.mxu0 0
    %1606 = vmatpush1.bf16.msra.mxu0 0
    %1607 = vmatprep.subr.bf16.mxu0 0
    %1608 = vmatpush1.bf16.msra.mxu0 0
    %1609 = vmatprep.subr.bf16.mxu0 0
    %1610 = vmatpush1.bf16.msra.mxu0 0
    %1611 = vmatprep.subr.bf16.mxu0 0
    %1612 = vmatpush1.bf16.msra.mxu0 0
    %1613 = vmatprep.subr.bf16.mxu0 0
    %1614 = vmatpush1.bf16.msra.mxu0 0
    %1615 = vmatprep.subr.bf16.mxu0 0
    %1616 = vmatpush1.bf16.msra.mxu0 0
    %1617 = vmatprep.subr.bf16.mxu0 0
    %1618 = vmatpush1.bf16.msra.mxu0 0
    %1619 = vmatprep.subr.bf16.mxu0 0
    %1620 = vmatpush1.bf16.msra.mxu0 0
    %1621 = vmatprep.subr.bf16.mxu0 0
    %1622 = vmatpush1.bf16.msra.mxu0 0
    %1623 = vmatprep.subr.bf16.mxu0 0
    %1624 = vmatpush1.bf16.msra.mxu0 0
    %1625 = vmatprep.subr.bf16.mxu0 0
    %1626 = vmatpush1.bf16.msra.mxu0 0
    %1627 = vmatprep.subr.bf16.mxu0 0
    %1628 = vmatpush1.bf16.msra.mxu0 0
    %1629 = vmatprep.mubr.bf16.mxu0 0
    %1630 = vmatmul.mubr.bf16.gmra.mrb[0].mxu0 %v1595
    %v1631 = vpop.f32.mrb[0].mxu0
    %v1632 = vadd.f32 0.0, %v1631
    %v1633 = vpop.f32.mrb[0].mxu0
    %v1634 = vpop.f32.mrb[0].mxu0
    %v1635 = vpop.f32.mrb[0].mxu0
    %1636 = vdwg.mxu0
    %v1637 = vmax.f32 %v1591, 1.0
    %v1638 = vrcp.pop %v1637
    %v1639 = vmul.f32 %v1632, %v1638
    %v1640 = vadd.f32 %v1197, %v1639
    %v1641 = vmul.f32 %v265, %v1544
    %v1642 = vmul.f32 %v266, %v1545
    %vm1643 = vcmp.gt.f32.partialorder %v1641, 0.5
    %vm1644 = vcmp.gt.f32.partialorder %v1642, 0.5
    %v1645 = vsel %vm1643, 1, 0
    %v1646 = vsel %vm1644, 1, 0
    %1647 = vset.pattern.permute.xlu0 0
    %1648 = vperm.xlu0 %1647, %v1645
    %v1649 = vpop.permute.xlu0 %1648
    %1650 = vset.pattern.permute.xlu0 0
    %1651 = vperm.xlu0 %1650, %v1646
    %v1652 = vpop.permute.xlu0 %1651
    %vm1653 = vcmp.eq.s32.totalorder %v1649, 1
    %vm1654 = vcmp.eq.s32.totalorder %v1652, 1
    %v1655 = vsel %vm1653, %v1550, -3e+38
    %v1656 = vsel %vm1654, %v1551, -3e+38
    %v1657 = vsel %vm456, %v1655, -inf
    %v1658 = vsel %vm456, %v1656, -inf
    %v1659 = vmax.f32 %v1657, %v1658
    %v1660 = vrot.slane %v1659, 4
    %v1661 = vmax.f32 %v1659, %v1660
    %v1662 = vrot.slane %v1661, 2
    %v1663 = vmax.f32 %v1661, %v1662
    %v1664 = vrot.slane %v1663, 1
    %v1665 = vmax.f32 %v1663, %v1664
    %vm1666 = vcmp.gt.f32.partialorder %v1591, 0.5
    %v1667 = vsel %vm1666, 1, 0
    %vm1668 = vcmp.eq.s32.totalorder %v1667, 1
    %v1669 = vsel %vm1668, %v1665, 0.0
    %v1670 = vlaneseq
    %v1671 = vshrl.u32 %v1670, 7
    %v1672 = vsub.s32 0, %v1671
    %v1673 = vrot.slane %v1669, %v1672
    %v1674 = vmul.f32 %v329, %v1673
    %v1675 = vadd.f32 %v1258, %v1674
    %1676 = vset.pattern.permute.xlu0 1
    %1677 = vperm.xlu0 %1676, %v1645
    %v1678 = vpop.permute.xlu0 %1677
    %1679 = vset.pattern.permute.xlu0 1
    %1680 = vperm.xlu0 %1679, %v1646
    %v1681 = vpop.permute.xlu0 %1680
    %vm1682 = vcmp.eq.s32.totalorder %v1678, 1
    %vm1683 = vcmp.eq.s32.totalorder %v1681, 1
    %v1684 = vsel %vm1682, %v1550, -3e+38
    %v1685 = vsel %vm1683, %v1551, -3e+38
    %v1686 = vsel %vm456, %v1684, -inf
    %v1687 = vsel %vm456, %v1685, -inf
    %v1688 = vmax.f32 %v1686, %v1687
    %v1689 = vrot.slane %v1688, 4
    %v1690 = vmax.f32 %v1688, %v1689
    %v1691 = vrot.slane %v1690, 2
    %v1692 = vmax.f32 %v1690, %v1691
    %v1693 = vrot.slane %v1692, 1
    %v1694 = vmax.f32 %v1692, %v1693
    %v1695 = vsel %vm1668, %v1694, 0.0
    %v1696 = vlaneseq
    %v1697 = vshrl.u32 %v1696, 7
    %v1698 = vsub.s32 1, %v1697
    %v1699 = vrot.slane %v1695, %v1698
    %v1700 = vmul.f32 %v332, %v1699
    %v1701 = vadd.f32 %v1675, %v1700
    %1702 = vmatprep.subr.bf16.mxu0 0
    %1703 = vmatpush1.bf16.msra.mxu0 %v1593
    %1704 = vmatprep.subr.bf16.mxu0 0
    %1705 = vmatpush1.bf16.msra.mxu0 0
    %1706 = vmatprep.subr.bf16.mxu0 0
    %1707 = vmatpush1.bf16.msra.mxu0 0
    %1708 = vmatprep.subr.bf16.mxu0 0
    %1709 = vmatpush1.bf16.msra.mxu0 0
    %1710 = vmatprep.subr.bf16.mxu0 0
    %1711 = vmatpush1.bf16.msra.mxu0 0
    %1712 = vmatprep.subr.bf16.mxu0 0
    %1713 = vmatpush1.bf16.msra.mxu0 0
    %1714 = vmatprep.subr.bf16.mxu0 0
    %1715 = vmatpush1.bf16.msra.mxu0 0
    %1716 = vmatprep.subr.bf16.mxu0 0
    %1717 = vmatpush1.bf16.msra.mxu0 0
    %1718 = vmatprep.subr.bf16.mxu0 0
    %1719 = vmatpush1.bf16.msra.mxu0 0
    %1720 = vmatprep.subr.bf16.mxu0 0
    %1721 = vmatpush1.bf16.msra.mxu0 0
    %1722 = vmatprep.subr.bf16.mxu0 0
    %1723 = vmatpush1.bf16.msra.mxu0 0
    %1724 = vmatprep.subr.bf16.mxu0 0
    %1725 = vmatpush1.bf16.msra.mxu0 0
    %1726 = vmatprep.subr.bf16.mxu0 0
    %1727 = vmatpush1.bf16.msra.mxu0 0
    %1728 = vmatprep.subr.bf16.mxu0 0
    %1729 = vmatpush1.bf16.msra.mxu0 0
    %1730 = vmatprep.subr.bf16.mxu0 0
    %1731 = vmatpush1.bf16.msra.mxu0 0
    %1732 = vmatprep.subr.bf16.mxu0 0
    %1733 = vmatpush1.bf16.msra.mxu0 0
    %1734 = vmatprep.mubr.bf16.mxu0 0
    %1735 = vmatmul.mubr.bf16.gmra.mrb[0].mxu0 %v336
    %v1736 = vpop.f32.mrb[0].mxu0
    %v1737 = vadd.f32 0.0, %v1736
    %v1738 = vpop.f32.mrb[0].mxu0
    %v1739 = vpop.f32.mrb[0].mxu0
    %v1740 = vadd.f32 0.0, %v1739
    %v1741 = vpop.f32.mrb[0].mxu0
    %1742 = vdwg.mxu0
    %v1743 = vadd.f32 %v1550, %v1737
    %v1744 = vadd.f32 %v1551, %v1740
    %v1745 = vld [vmem:[%s33] sm:$0xff]
    %v1746 = vld [vmem:[%s33 + $0x8] sm:$0xff]
    %v1747 = vld [vmem:[%s33 + $0x10] sm:$0xff]
    %v1748 = vld [vmem:[%s33 + $0x18] sm:$0xff]
    %v1749 = vpack.c.bf16 %v1744, %v1743
    %v1750 = vpack.c.bf16 %v1746, %v1745
    %v1751 = vpack.c.bf16 %v1748, %v1747
    %v1752 = vld [vmem:[#allocation16] sm:$0x1]
    %v1754 = vlaneseq
    %v1755 = vshrl.u32 %v1754, 7
    %v1756 = vsub.s32 0, %v1755
    %v1757 = vrot.slane %v1752, %v1756
    %v1760 = vsel %vm456, %v1749, 0
    %1762 = vmatprep.subr.bf16.mxu0 0
    %1763 = vmatpush1.bf16.msra.mxu0 %v1750
    %1764 = vmatprep.subr.bf16.mxu0 0
    %1765 = vmatpush1.bf16.msra.mxu0 %v1751
    %1766 = vmatprep.subr.bf16.mxu0 0
    %1767 = vmatpush1.bf16.msra.mxu0 0
    %1768 = vmatprep.subr.bf16.mxu0 0
    %1769 = vmatpush1.bf16.msra.mxu0 0
    %1770 = vmatprep.subr.bf16.mxu0 0
    %1771 = vmatpush1.bf16.msra.mxu0 0
    %1772 = vmatprep.subr.bf16.mxu0 0
    %1773 = vmatpush1.bf16.msra.mxu0 0
    %1774 = vmatprep.subr.bf16.mxu0 0
    %1775 = vmatpush1.bf16.msra.mxu0 0
    %1776 = vmatprep.subr.bf16.mxu0 0
    %1777 = vmatpush1.bf16.msra.mxu0 0
    %1778 = vmatprep.subr.bf16.mxu0 0
    %1779 = vmatpush1.bf16.msra.mxu0 0
    %1780 = vmatprep.subr.bf16.mxu0 0
    %1781 = vmatpush1.bf16.msra.mxu0 0
    %1782 = vmatprep.subr.bf16.mxu0 0
    %1783 = vmatpush1.bf16.msra.mxu0 0
    %1784 = vmatprep.subr.bf16.mxu0 0
    %1785 = vmatpush1.bf16.msra.mxu0 0
    %1786 = vmatprep.subr.bf16.mxu0 0
    %1787 = vmatpush1.bf16.msra.mxu0 0
    %1788 = vmatprep.subr.bf16.mxu0 0
    %1789 = vmatpush1.bf16.msra.mxu0 0
    %1790 = vmatprep.subr.bf16.mxu0 0
    %1791 = vmatpush1.bf16.msra.mxu0 0
    %1792 = vmatprep.subr.bf16.mxu0 0
    %1793 = vmatpush1.bf16.msra.mxu0 0
    %1794 = vmatprep.mubr.bf16.mxu0 0
    %1795 = vmatmul.mubr.bf16.gmra.mrb[0].mxu0 %v1760
    %v1796 = vpop.f32.mrb[0].mxu0
    %v1797 = vadd.f32 %v1757, %v1796
    %v1798 = vpop.f32.mrb[0].mxu0
    %v1799 = vpop.f32.mrb[0].mxu0
    %v1800 = vadd.f32 %v1757, %v1799
    %v1801 = vpop.f32.mrb[0].mxu0
    %1802 = vdwg.mxu0
    %v1803 = vmax.f32 %v1797, 0.0
    %v1804 = vmax.f32 %v1800, 0.0
    %v1805 = vld [vmem:[#allocation17] sm:$0xff]
    %v1806 = vld [vmem:[#allocation17 + $0x8] sm:$0xff]
    %v1807 = vld [vmem:[#allocation17 + $0x10] sm:$0xff]
    %v1808 = vld [vmem:[#allocation17 + $0x18] sm:$0xff]
    %v1809 = vpack.c.bf16 %v1804, %v1803
    %v1810 = vpack.c.bf16 %v1806, %v1805
    %v1811 = vpack.c.bf16 %v1808, %v1807
    %v1812 = vld [vmem:[#allocation19] sm:$0x1]
    %v1814 = vlaneseq
    %v1815 = vshrl.u32 %v1814, 7
    %v1816 = vsub.s32 0, %v1815
    %v1817 = vrot.slane %v1812, %v1816
    %v1820 = vsel %vm456, %v1809, 0
    %1822 = vmatprep.subr.bf16.mxu0 0
    %1823 = vmatpush1.bf16.msra.mxu0 %v1810
    %1824 = vmatprep.subr.bf16.mxu0 0
    %1825 = vmatpush1.bf16.msra.mxu0 %v1811
    %1826 = vmatprep.subr.bf16.mxu0 0
    %1827 = vmatpush1.bf16.msra.mxu0 0
    %1828 = vmatprep.subr.bf16.mxu0 0
    %1829 = vmatpush1.bf16.msra.mxu0 0
    %1830 = vmatprep.subr.bf16.mxu0 0
    %1831 = vmatpush1.bf16.msra.mxu0 0
    %1832 = vmatprep.subr.bf16.mxu0 0
    %1833 = vmatpush1.bf16.msra.mxu0 0
    %1834 = vmatprep.subr.bf16.mxu0 0
    %1835 = vmatpush1.bf16.msra.mxu0 0
    %1836 = vmatprep.subr.bf16.mxu0 0
    %1837 = vmatpush1.bf16.msra.mxu0 0
    %1838 = vmatprep.subr.bf16.mxu0 0
    %1839 = vmatpush1.bf16.msra.mxu0 0
    %1840 = vmatprep.subr.bf16.mxu0 0
    %1841 = vmatpush1.bf16.msra.mxu0 0
    %1842 = vmatprep.subr.bf16.mxu0 0
    %1843 = vmatpush1.bf16.msra.mxu0 0
    %1844 = vmatprep.subr.bf16.mxu0 0
    %1845 = vmatpush1.bf16.msra.mxu0 0
    %1846 = vmatprep.subr.bf16.mxu0 0
    %1847 = vmatpush1.bf16.msra.mxu0 0
    %1848 = vmatprep.subr.bf16.mxu0 0
    %1849 = vmatpush1.bf16.msra.mxu0 0
    %1850 = vmatprep.subr.bf16.mxu0 0
    %1851 = vmatpush1.bf16.msra.mxu0 0
    %1852 = vmatprep.subr.bf16.mxu0 0
    %1853 = vmatpush1.bf16.msra.mxu0 0
    %1854 = vmatprep.mubr.bf16.mxu0 0
    %1855 = vmatmul.mubr.bf16.gmra.mrb[0].mxu0 %v1820
    %v1856 = vpop.f32.mrb[0].mxu0
    %v1857 = vadd.f32 %v1817, %v1856
    %v1858 = vpop.f32.mrb[0].mxu0
    %v1859 = vpop.f32.mrb[0].mxu0
    %v1860 = vadd.f32 %v1817, %v1859
    %v1861 = vpop.f32.mrb[0].mxu0
    %1862 = vdwg.mxu0
    %v1863 = vmax.f32 %v1857, 0.0
    %v1864 = vmax.f32 %v1860, 0.0
    %v1865 = vld [vmem:[%s47] sm:$0x1]
    %v1866 = vmul.f32 %v1865, %v1865
    %v1867 = vsel %vm505, %v1866, 0.0
    %1868 = vadd.xlane.f32.xlu0 %v1867
    %v1869 = vpop.xlane.xlu0 %1868
    %v1870 = vrot.slane %v1869, 4
    %v1871 = vadd.f32 %v1869, %v1870
    %v1872 = vrot.slane %v1871, 2
    %v1873 = vadd.f32 %v1871, %v1872
    %v1874 = vrot.slane %v1873, 1
    %v1875 = vadd.f32 %v1873, %v1874
    %s1876 = vtos %v1875
    %v1877 = vstv %s1876
    %v1878 = vrsqrt.pop %v1877
    %v1879 = vmul.f32 %v1877, %v1878
    %vm1880 = vcmp.eq.f32.partialorder %v1877, inf
    %v1881 = vsel %vm1880, %v1877, %v1879
    %vm1882 = vcmp.eq.f32.partialorder %v1877, 0.0
    %v1883 = vand.u32 %v1877, 2147483648
    %v1884 = vsel %vm1882, %v1883, %v1881
    %s1885 = vtos %v1884
    %v1887 = vlaneseq
    %v1888 = vshrl.u32 %v1887, 7
    %v1889 = vsub.s32 0, %v1888
    %v1890 = vrot.slane %v1865, %v1889
    %v1892 = vmul.f32 %v1863, %v1890
    %v1893 = vmul.f32 %v1864, %v1890
    %v1894 = vsel %vm456, %v1892, 0.0
    %1895 = vadd.xlane.f32.xlu0 %v1894
    %v1896 = vpop.xlane.xlu0 %1895
    %v1897 = vsel %vm456, %v1893, 0.0
    %1898 = vadd.xlane.f32.xlu0 %v1897
    %v1899 = vpop.xlane.xlu0 %1898
    %v1900 = vstv %s1885
    %v1901 = vrcp.pop %v1900
    %v1902 = vmul.f32 %v1896, %v1901
    %v1903 = vmul.f32 %v1899, %v1901
    %1904 = vxpose.xlu0.b32.start [1/16] %v1902, 128
    %1905 = vxpose.xlu0.b32.cont [2/16] %v1903, 128
    %1906 = vxpose.xlu0.b32.cont [3/16] 0.0, 128
    %1907 = vxpose.xlu0.b32.cont [4/16] 0.0, 128
    %1908 = vxpose.xlu0.b32.cont [5/16] 0.0, 128
    %1909 = vxpose.xlu0.b32.cont [6/16] 0.0, 128
    %1910 = vxpose.xlu0.b32.cont [7/16] 0.0, 128
    %1911 = vxpose.xlu0.b32.cont [8/16] 0.0, 128
    %1912 = vxpose.xlu0.b32.cont [9/16] 0.0, 128
    %1913 = vxpose.xlu0.b32.cont [10/16] 0.0, 128
    %1914 = vxpose.xlu0.b32.cont [11/16] 0.0, 128
    %1915 = vxpose.xlu0.b32.cont [12/16] 0.0, 128
    %1916 = vxpose.xlu0.b32.cont [13/16] 0.0, 128
    %1917 = vxpose.xlu0.b32.cont [14/16] 0.0, 128
    %1918 = vxpose.xlu0.b32.cont [15/16] 0.0, 128
    %1919 = vxpose.xlu0.b32.end [16/16] 0.0, 128
    %v1920 = vpop.trf.xlu0
    %v1921 = vpop.trf.xlu0
    %v1922 = vpop.trf.xlu0
    %v1923 = vpop.trf.xlu0
    %v1924 = vpop.trf.xlu0
    %v1925 = vpop.trf.xlu0
    %v1926 = vpop.trf.xlu0
    %v1927 = vpop.trf.xlu0
    %v1928 = vpop.trf.xlu0
    %v1929 = vpop.trf.xlu0
    %v1930 = vpop.trf.xlu0
    %v1931 = vpop.trf.xlu0
    %v1932 = vpop.trf.xlu0
    %v1933 = vpop.trf.xlu0
    %v1934 = vpop.trf.xlu0
    %v1935 = vpop.trf.xlu0
    %vm1936 = vcmp.gt.f32.partialorder %v1568, 0.5
    %v1937 = vsel %vm1936, 1, 0
    %v1938 = vlaneseq
    %v1939 = vshrl.u32 %v1938, 7
    %v1940 = vsub.s32 0, %v1939
    %v1941 = vrot.slane %v1937, %v1940
    %vm1942 = vcmp.eq.s32.totalorder %v1941, 1
    %vm1943 = vmand %vm318, %vm1942
    %vm1944 = vmand %vm319, %vm1942
    %v1945 = vlaneseq
    %v1946 = vshrl.u32 %v1945, 7
    %v1947 = vsub.s32 0, %v1946
    %v1948 = vrot.slane %v1920, %v1947
    %vm1949 = vcmp.gt.f32.partialorder %v1948, %v1902
    %vm1950 = vcmp.gt.f32.partialorder %v1948, %v1903
    %vm1951 = vcmp.eq.f32.partialorder %v1948, %v1902
    %vm1952 = vcmp.eq.f32.partialorder %v1948, %v1903
    %vm1953 = vmand %vm1951, %vm325
    %vm1954 = vmand %vm1952, %vm326
    %vm1955 = vmor %vm1949, %vm1953
    %vm1956 = vmor %vm1950, %vm1954
    %vm1957 = vmand %vm1943, %vm1955
    %vm1958 = vmand %vm1944, %vm1956
    %v1959 = vsel %vm1957, 1.0, 0.0
    %v1960 = vsel %vm1958, 1.0, 0.0
    %v1961 = vsel %vm334, %v1959, 0.0
    %1962 = vadd.xlane.f32.xlu0 %v1961
    %v1963 = vpop.xlane.xlu0 %1962
    %v1964 = vsel %vm334, %v1960, 0.0
    %1965 = vadd.xlane.f32.xlu0 %v1964
    %v1966 = vpop.xlane.xlu0 %1965
    %v1967 = vsel %vm1943, 1.0, 0.0
    %v1968 = vsel %vm1944, 1.0, 0.0
    %v1969 = vsel %vm334, %v1967, 0.0
    %1970 = vadd.xlane.f32.xlu0 %v1969
    %v1971 = vpop.xlane.xlu0 %1970
    %v1972 = vsel %vm334, %v1968, 0.0
    %1973 = vadd.xlane.f32.xlu0 %v1972
    %v1974 = vpop.xlane.xlu0 %1973
    %v1975 = vmul.f32 %v1971, 0.8
    %v1976 = vmul.f32 %v1974, 0.8
    %v1977 = vceil.f32 %v1975
    %v1978 = vceil.f32 %v1976
    %vm1979 = vcmp.gt.f32.partialorder %v1544, 0.5
    %vm1980 = vcmp.gt.f32.partialorder %v1545, 0.5
    %vm1981 = vcmp.lt.f32.partialorder %v1963, %v1977
    %vm1982 = vcmp.lt.f32.partialorder %v1966, %v1978
    %vm1983 = vmand %vm1979, %vm1981
    %vm1984 = vmand %vm1980, %vm1982
    %v1985 = vsel %vm1983, 1, 0
    %v1986 = vsel %vm1984, 1, 0
    %v1987 = vcvt.s32.f32 %v1985
    %v1988 = vcvt.s32.f32 %v1986
    %v1989 = vtanh.pop %v1902
    %v1990 = vtanh.pop %v1903
    %v1991 = vmul.f32 %v1863, %v1989
    %v1992 = vmul.f32 %v1864, %v1990
    %v1993 = vmul.f32 %v1991, %v1987
    %v1994 = vmul.f32 %v1992, %v1988
    %1995 = vxpose.xlu0.b32.start [1/16] %v1987, 128
    %1996 = vxpose.xlu0.b32.cont [2/16] %v1988, 128
    %1997 = vxpose.xlu0.b32.cont [3/16] 0.0, 128
    %1998 = vxpose.xlu0.b32.cont [4/16] 0.0, 128
    %1999 = vxpose.xlu0.b32.cont [5/16] 0.0, 128
    %2000 = vxpose.xlu0.b32.cont [6/16] 0.0, 128
    %2001 = vxpose.xlu0.b32.cont [7/16] 0.0, 128
    %2002 = vxpose.xlu0.b32.cont [8/16] 0.0, 128
    %2003 = vxpose.xlu0.b32.cont [9/16] 0.0, 128
    %2004 = vxpose.xlu0.b32.cont [10/16] 0.0, 128
    %2005 = vxpose.xlu0.b32.cont [11/16] 0.0, 128
    %2006 = vxpose.xlu0.b32.cont [12/16] 0.0, 128
    %2007 = vxpose.xlu0.b32.cont [13/16] 0.0, 128
    %2008 = vxpose.xlu0.b32.cont [14/16] 0.0, 128
    %2009 = vxpose.xlu0.b32.cont [15/16] 0.0, 128
    %2010 = vxpose.xlu0.b32.end [16/16] 0.0, 128
    %v2011 = vpop.trf.xlu0
    %v2012 = vpop.trf.xlu0
    %v2013 = vpop.trf.xlu0
    %v2014 = vpop.trf.xlu0
    %v2015 = vpop.trf.xlu0
    %v2016 = vpop.trf.xlu0
    %v2017 = vpop.trf.xlu0
    %v2018 = vpop.trf.xlu0
    %v2019 = vpop.trf.xlu0
    %v2020 = vpop.trf.xlu0
    %v2021 = vpop.trf.xlu0
    %v2022 = vpop.trf.xlu0
    %v2023 = vpop.trf.xlu0
    %v2024 = vpop.trf.xlu0
    %v2025 = vpop.trf.xlu0
    %v2026 = vpop.trf.xlu0
    %v2027 = vlaneseq
    %v2028 = vshrl.u32 %v2027, 7
    %v2029 = vsub.s32 0, %v2028
    %v2030 = vrot.slane %v2011, %v2029
    %v2031 = vmul.f32 %v264, %v2030
    %v2032 = vsel %vm702, %v2031, 0.0
    %2033 = vadd.xlane.f32.xlu0 %v2032
    %v2034 = vpop.xlane.xlu0 %2033
    %v2035 = vpack.c.bf16 %v2031, %v2031
    %v2036 = vpack.c.bf16 %v1994, %v1993
    %v2038 = vsel %vm334, %v2035, 0
    %2040 = vmatprep.subr.bf16.mxu0 0
    %2041 = vmatpush1.bf16.msra.mxu0 %v2036
    %2042 = vmatprep.subr.bf16.mxu0 0
    %2043 = vmatpush1.bf16.msra.mxu0 0
    %2044 = vmatprep.subr.bf16.mxu0 0
    %2045 = vmatpush1.bf16.msra.mxu0 0
    %2046 = vmatprep.subr.bf16.mxu0 0
    %2047 = vmatpush1.bf16.msra.mxu0 0
    %2048 = vmatprep.subr.bf16.mxu0 0
    %2049 = vmatpush1.bf16.msra.mxu0 0
    %2050 = vmatprep.subr.bf16.mxu0 0
    %2051 = vmatpush1.bf16.msra.mxu0 0
    %2052 = vmatprep.subr.bf16.mxu0 0
    %2053 = vmatpush1.bf16.msra.mxu0 0
    %2054 = vmatprep.subr.bf16.mxu0 0
    %2055 = vmatpush1.bf16.msra.mxu0 0
    %2056 = vmatprep.subr.bf16.mxu0 0
    %2057 = vmatpush1.bf16.msra.mxu0 0
    %2058 = vmatprep.subr.bf16.mxu0 0
    %2059 = vmatpush1.bf16.msra.mxu0 0
    %2060 = vmatprep.subr.bf16.mxu0 0
    %2061 = vmatpush1.bf16.msra.mxu0 0
    %2062 = vmatprep.subr.bf16.mxu0 0
    %2063 = vmatpush1.bf16.msra.mxu0 0
    %2064 = vmatprep.subr.bf16.mxu0 0
    %2065 = vmatpush1.bf16.msra.mxu0 0
    %2066 = vmatprep.subr.bf16.mxu0 0
    %2067 = vmatpush1.bf16.msra.mxu0 0
    %2068 = vmatprep.subr.bf16.mxu0 0
    %2069 = vmatpush1.bf16.msra.mxu0 0
    %2070 = vmatprep.subr.bf16.mxu0 0
    %2071 = vmatpush1.bf16.msra.mxu0 0
    %2072 = vmatprep.mubr.bf16.mxu0 0
    %2073 = vmatmul.mubr.bf16.gmra.mrb[0].mxu0 %v2038
    %v2074 = vpop.f32.mrb[0].mxu0
    %v2075 = vadd.f32 0.0, %v2074
    %v2076 = vpop.f32.mrb[0].mxu0
    %v2077 = vpop.f32.mrb[0].mxu0
    %v2078 = vpop.f32.mrb[0].mxu0
    %2079 = vdwg.mxu0
    %v2080 = vmax.f32 %v2034, 1.0
    %v2081 = vrcp.pop %v2080
    %v2082 = vmul.f32 %v2075, %v2081
    %v2083 = vadd.f32 %v1640, %v2082
    %v2084 = vmul.f32 %v265, %v1987
    %v2085 = vmul.f32 %v266, %v1988
    %vm2086 = vcmp.gt.f32.partialorder %v2084, 0.5
    %vm2087 = vcmp.gt.f32.partialorder %v2085, 0.5
    %v2088 = vsel %vm2086, 1, 0
    %v2089 = vsel %vm2087, 1, 0
    %2090 = vset.pattern.permute.xlu0 0
    %2091 = vperm.xlu0 %2090, %v2088
    %v2092 = vpop.permute.xlu0 %2091
    %2093 = vset.pattern.permute.xlu0 0
    %2094 = vperm.xlu0 %2093, %v2089
    %v2095 = vpop.permute.xlu0 %2094
    %vm2096 = vcmp.eq.s32.totalorder %v2092, 1
    %vm2097 = vcmp.eq.s32.totalorder %v2095, 1
    %v2098 = vsel %vm2096, %v1993, -3e+38
    %v2099 = vsel %vm2097, %v1994, -3e+38
    %v2100 = vsel %vm456, %v2098, -inf
    %v2101 = vsel %vm456, %v2099, -inf
    %v2102 = vmax.f32 %v2100, %v2101
    %v2103 = vrot.slane %v2102, 4
    %v2104 = vmax.f32 %v2102, %v2103
    %v2105 = vrot.slane %v2104, 2
    %v2106 = vmax.f32 %v2104, %v2105
    %v2107 = vrot.slane %v2106, 1
    %v2108 = vmax.f32 %v2106, %v2107
    %vm2109 = vcmp.gt.f32.partialorder %v2034, 0.5
    %v2110 = vsel %vm2109, 1, 0
    %vm2111 = vcmp.eq.s32.totalorder %v2110, 1
    %v2112 = vsel %vm2111, %v2108, 0.0
    %v2113 = vlaneseq
    %v2114 = vshrl.u32 %v2113, 7
    %v2115 = vsub.s32 0, %v2114
    %v2116 = vrot.slane %v2112, %v2115
    %v2117 = vmul.f32 %v329, %v2116
    %v2118 = vadd.f32 %v1701, %v2117
    %2119 = vset.pattern.permute.xlu0 1
    %2120 = vperm.xlu0 %2119, %v2088
    %v2121 = vpop.permute.xlu0 %2120
    %2122 = vset.pattern.permute.xlu0 1
    %2123 = vperm.xlu0 %2122, %v2089
    %v2124 = vpop.permute.xlu0 %2123
    %vm2125 = vcmp.eq.s32.totalorder %v2121, 1
    %vm2126 = vcmp.eq.s32.totalorder %v2124, 1
    %v2127 = vsel %vm2125, %v1993, -3e+38
    %v2128 = vsel %vm2126, %v1994, -3e+38
    %v2129 = vsel %vm456, %v2127, -inf
    %v2130 = vsel %vm456, %v2128, -inf
    %v2131 = vmax.f32 %v2129, %v2130
    %v2132 = vrot.slane %v2131, 4
    %v2133 = vmax.f32 %v2131, %v2132
    %v2134 = vrot.slane %v2133, 2
    %v2135 = vmax.f32 %v2133, %v2134
    %v2136 = vrot.slane %v2135, 1
    %v2137 = vmax.f32 %v2135, %v2136
    %v2138 = vsel %vm2111, %v2137, 0.0
    %v2139 = vlaneseq
    %v2140 = vshrl.u32 %v2139, 7
    %v2141 = vsub.s32 1, %v2140
    %v2142 = vrot.slane %v2138, %v2141
    %v2143 = vmul.f32 %v332, %v2142
    %v2144 = vadd.f32 %v2118, %v2143
    %v2145 = vld [vmem:[%s49] sm:$0xff]
    %v2146 = vld [vmem:[%s49 + $0x8] sm:$0xff]
    %v2147 = vld [vmem:[%s49 + $0x10] sm:$0xff]
    %v2148 = vld [vmem:[%s49 + $0x18] sm:$0xff]
    %v2149 = vld [vmem:[%s49 + $0x20] sm:$0xff]
    %v2150 = vld [vmem:[%s49 + $0x28] sm:$0xff]
    %v2151 = vld [vmem:[%s49 + $0x30] sm:$0xff]
    %v2152 = vld [vmem:[%s49 + $0x38] sm:$0xff]
    %v2153 = vpack.c.bf16 %v2144, %v2144
    %v2154 = vpack.c.bf16 %v2146, %v2145
    %v2155 = vpack.c.bf16 %v2148, %v2147
    %v2156 = vpack.c.bf16 %v2083, %v2083
    %v2157 = vpack.c.bf16 %v2150, %v2149
    %v2158 = vpack.c.bf16 %v2152, %v2151
    %v2160 = vsel %vm456, %v2156, 0
    %2162 = vmatprep.subr.bf16.mxu0 0
    %2163 = vmatpush1.bf16.msra.mxu0 %v2157
    %2164 = vmatprep.subr.bf16.mxu0 0
    %2165 = vmatpush1.bf16.msra.mxu0 %v2158
    %2166 = vmatprep.subr.bf16.mxu0 0
    %2167 = vmatpush1.bf16.msra.mxu0 0
    %2168 = vmatprep.subr.bf16.mxu0 0
    %2169 = vmatpush1.bf16.msra.mxu0 0
    %2170 = vmatprep.subr.bf16.mxu0 0
    %2171 = vmatpush1.bf16.msra.mxu0 0
    %2172 = vmatprep.subr.bf16.mxu0 0
    %2173 = vmatpush1.bf16.msra.mxu0 0
    %2174 = vmatprep.subr.bf16.mxu0 0
    %2175 = vmatpush1.bf16.msra.mxu0 0
    %2176 = vmatprep.subr.bf16.mxu0 0
    %2177 = vmatpush1.bf16.msra.mxu0 0
    %2178 = vmatprep.subr.bf16.mxu0 0
    %2179 = vmatpush1.bf16.msra.mxu0 0
    %2180 = vmatprep.subr.bf16.mxu0 0
    %2181 = vmatpush1.bf16.msra.mxu0 0
    %2182 = vmatprep.subr.bf16.mxu0 0
    %2183 = vmatpush1.bf16.msra.mxu0 0
    %2184 = vmatprep.subr.bf16.mxu0 0
    %2185 = vmatpush1.bf16.msra.mxu0 0
    %2186 = vmatprep.subr.bf16.mxu0 0
    %2187 = vmatpush1.bf16.msra.mxu0 0
    %2188 = vmatprep.subr.bf16.mxu0 0
    %2189 = vmatpush1.bf16.msra.mxu0 0
    %2190 = vmatprep.subr.bf16.mxu0 0
    %2191 = vmatpush1.bf16.msra.mxu0 0
    %2192 = vmatprep.subr.bf16.mxu0 0
    %2193 = vmatpush1.bf16.msra.mxu0 0
    %2194 = vmatprep.mubr.bf16.mxu0 0
    %2195 = vmatmul.mubr.bf16.gmra.mrb[0].mxu0 %v2160
    %v2196 = vpop.f32.mrb[0].mxu0
    %v2197 = vadd.f32 0.0, %v2196
    %v2198 = vpop.f32.mrb[0].mxu0
    %v2199 = vpop.f32.mrb[0].mxu0
    %v2200 = vpop.f32.mrb[0].mxu0
    %2201 = vdwg.mxu0
    %v2203 = vsel %vm456, %v2153, 0
    %2205 = vmatprep.subr.bf16.mxu0 0
    %2206 = vmatpush1.bf16.msra.mxu0 %v2154
    %2207 = vmatprep.subr.bf16.mxu0 0
    %2208 = vmatpush1.bf16.msra.mxu0 %v2155
    %2209 = vmatprep.subr.bf16.mxu0 0
    %2210 = vmatpush1.bf16.msra.mxu0 0
    %2211 = vmatprep.subr.bf16.mxu0 0
    %2212 = vmatpush1.bf16.msra.mxu0 0
    %2213 = vmatprep.subr.bf16.mxu0 0
    %2214 = vmatpush1.bf16.msra.mxu0 0
    %2215 = vmatprep.subr.bf16.mxu0 0
    %2216 = vmatpush1.bf16.msra.mxu0 0
    %2217 = vmatprep.subr.bf16.mxu0 0
    %2218 = vmatpush1.bf16.msra.mxu0 0
    %2219 = vmatprep.subr.bf16.mxu0 0
    %2220 = vmatpush1.bf16.msra.mxu0 0
    %2221 = vmatprep.subr.bf16.mxu0 0
    %2222 = vmatpush1.bf16.msra.mxu0 0
    %2223 = vmatprep.subr.bf16.mxu0 0
    %2224 = vmatpush1.bf16.msra.mxu0 0
    %2225 = vmatprep.subr.bf16.mxu0 0
    %2226 = vmatpush1.bf16.msra.mxu0 0
    %2227 = vmatprep.subr.bf16.mxu0 0
    %2228 = vmatpush1.bf16.msra.mxu0 0
    %2229 = vmatprep.subr.bf16.mxu0 0
    %2230 = vmatpush1.bf16.msra.mxu0 0
    %2231 = vmatprep.subr.bf16.mxu0 0
    %2232 = vmatpush1.bf16.msra.mxu0 0
    %2233 = vmatprep.subr.bf16.mxu0 0
    %2234 = vmatpush1.bf16.msra.mxu0 0
    %2235 = vmatprep.subr.bf16.mxu0 0
    %2236 = vmatpush1.bf16.msra.mxu0 0
    %2237 = vmatprep.mubr.bf16.mxu0 0
    %2238 = vmatmul.mubr.bf16.gmra.mrb[0].mxu0 %v2203
    %v2239 = vpop.f32.mrb[0].mxu0
    %v2240 = vadd.f32 %v2197, %v2239
    %v2241 = vpop.f32.mrb[0].mxu0
    %v2242 = vpop.f32.mrb[0].mxu0
    %v2243 = vpop.f32.mrb[0].mxu0
    %2244 = vdwg.mxu0
    %v2245 = vld [vmem:[%s51] sm:$0x1]
    %v2247 = vlaneseq
    %v2248 = vshrl.u32 %v2247, 7
    %v2249 = vsub.s32 0, %v2248
    %v2250 = vrot.slane %v2245, %v2249
    %v2252 = vadd.f32 %v2240, %v2250
    %v2253 = vmax.f32 %v2252, 0.0
    %v2254 = vld [vmem:[%s53] sm:$0xff]
    %v2255 = vld [vmem:[%s53 + $0x8] sm:$0xff]
    %v2256 = vld [vmem:[%s53 + $0x10] sm:$0xff]
    %v2257 = vld [vmem:[%s53 + $0x18] sm:$0xff]
    %v2258 = vpack.c.bf16 %v2253, %v2253
    %v2259 = vpack.c.bf16 %v2255, %v2254
    %v2260 = vpack.c.bf16 %v2257, %v2256
    %v2261 = vld [vmem:[%s55] sm:$0x1]
    %v2263 = vlaneseq
    %v2264 = vshrl.u32 %v2263, 7
    %v2265 = vsub.s32 0, %v2264
    %v2266 = vrot.slane %v2261, %v2265
    %v2269 = vsel %vm456, %v2258, 0
    %2271 = vmatprep.subr.bf16.mxu0 0
    %2272 = vmatpush1.bf16.msra.mxu0 %v2259
    %2273 = vmatprep.subr.bf16.mxu0 0
    %2274 = vmatpush1.bf16.msra.mxu0 %v2260
    %2275 = vmatprep.subr.bf16.mxu0 0
    %2276 = vmatpush1.bf16.msra.mxu0 0
    %2277 = vmatprep.subr.bf16.mxu0 0
    %2278 = vmatpush1.bf16.msra.mxu0 0
    %2279 = vmatprep.subr.bf16.mxu0 0
    %2280 = vmatpush1.bf16.msra.mxu0 0
    %2281 = vmatprep.subr.bf16.mxu0 0
    %2282 = vmatpush1.bf16.msra.mxu0 0
    %2283 = vmatprep.subr.bf16.mxu0 0
    %2284 = vmatpush1.bf16.msra.mxu0 0
    %2285 = vmatprep.subr.bf16.mxu0 0
    %2286 = vmatpush1.bf16.msra.mxu0 0
    %2287 = vmatprep.subr.bf16.mxu0 0
    %2288 = vmatpush1.bf16.msra.mxu0 0
    %2289 = vmatprep.subr.bf16.mxu0 0
    %2290 = vmatpush1.bf16.msra.mxu0 0
    %2291 = vmatprep.subr.bf16.mxu0 0
    %2292 = vmatpush1.bf16.msra.mxu0 0
    %2293 = vmatprep.subr.bf16.mxu0 0
    %2294 = vmatpush1.bf16.msra.mxu0 0
    %2295 = vmatprep.subr.bf16.mxu0 0
    %2296 = vmatpush1.bf16.msra.mxu0 0
    %2297 = vmatprep.subr.bf16.mxu0 0
    %2298 = vmatpush1.bf16.msra.mxu0 0
    %2299 = vmatprep.subr.bf16.mxu0 0
    %2300 = vmatpush1.bf16.msra.mxu0 0
    %2301 = vmatprep.subr.bf16.mxu0 0
    %2302 = vmatpush1.bf16.msra.mxu0 0
    %2303 = vmatprep.mubr.bf16.mxu0 0
    %2304 = vmatmul.mubr.bf16.gmra.mrb[0].mxu0 %v2269
    %v2305 = vpop.f32.mrb[0].mxu0
    %v2306 = vadd.f32 %v2266, %v2305
    %v2307 = vpop.f32.mrb[0].mxu0
    %v2308 = vpop.f32.mrb[0].mxu0
    %v2309 = vpop.f32.mrb[0].mxu0
    %2310 = vdwg.mxu0
    %v2311 = vmax.f32 %v2306, 0.0
    %v2312 = vld [vmem:[%s57] sm:$0xff]
    %v2313 = vld [vmem:[%s57 + $0x8] sm:$0xff]
    %v2314 = vpack.c.bf16 %v2311, %v2311
    %v2315 = vpack.c.bf16 %v2313, %v2312
    %v2316 = vld [vmem:[%s59] sm:$0x1]
    %v2318 = vlaneseq
    %v2319 = vshrl.u32 %v2318, 7
    %v2320 = vsub.s32 0, %v2319
    %v2321 = vrot.slane %v2316, %v2320
    %v2324 = vsel %vm334, %v2314, 0
    %2326 = vmatprep.subr.bf16.mxu0 0
    %2327 = vmatpush1.bf16.msra.mxu0 %v2315
    %2328 = vmatprep.subr.bf16.mxu0 0
    %2329 = vmatpush1.bf16.msra.mxu0 0
    %2330 = vmatprep.subr.bf16.mxu0 0
    %2331 = vmatpush1.bf16.msra.mxu0 0
    %2332 = vmatprep.subr.bf16.mxu0 0
    %2333 = vmatpush1.bf16.msra.mxu0 0
    %2334 = vmatprep.subr.bf16.mxu0 0
    %2335 = vmatpush1.bf16.msra.mxu0 0
    %2336 = vmatprep.subr.bf16.mxu0 0
    %2337 = vmatpush1.bf16.msra.mxu0 0
    %2338 = vmatprep.subr.bf16.mxu0 0
    %2339 = vmatpush1.bf16.msra.mxu0 0
    %2340 = vmatprep.subr.bf16.mxu0 0
    %2341 = vmatpush1.bf16.msra.mxu0 0
    %2342 = vmatprep.subr.bf16.mxu0 0
    %2343 = vmatpush1.bf16.msra.mxu0 0
    %2344 = vmatprep.subr.bf16.mxu0 0
    %2345 = vmatpush1.bf16.msra.mxu0 0
    %2346 = vmatprep.subr.bf16.mxu0 0
    %2347 = vmatpush1.bf16.msra.mxu0 0
    %2348 = vmatprep.subr.bf16.mxu0 0
    %2349 = vmatpush1.bf16.msra.mxu0 0
    %2350 = vmatprep.subr.bf16.mxu0 0
    %2351 = vmatpush1.bf16.msra.mxu0 0
    %2352 = vmatprep.subr.bf16.mxu0 0
    %2353 = vmatpush1.bf16.msra.mxu0 0
    %2354 = vmatprep.subr.bf16.mxu0 0
    %2355 = vmatpush1.bf16.msra.mxu0 0
    %2356 = vmatprep.subr.bf16.mxu0 0
    %2357 = vmatpush1.bf16.msra.mxu0 0
    %2358 = vmatprep.mubr.bf16.mxu0 0
    %2359 = vmatmul.mubr.bf16.gmra.mrb[0].mxu0 %v2324
    %v2360 = vpop.f32.mrb[0].mxu0
    %v2361 = vadd.f32 %v2321, %v2360
    %v2362 = vpop.f32.mrb[0].mxu0
    %v2363 = vpop.f32.mrb[0].mxu0
    %v2364 = vpop.f32.mrb[0].mxu0
    %2365 = vdwg.mxu0
    %2366 = vst [vmem:[#allocation20] sm:$0x3] %v2361
    // Predicated region
    $region166: #{tpu_custom_call.1} parent=1 // pred_check
      _
    $region167: #{tpu_custom_call.1} parent=1 // pred_check_branch
      %2368 = sbr.rel (0) target = $region169
    $region168: #{tpu_custom_call.1} parent=1 // pred_region
      %s2370 = ssub.s32 32, 32
      %2371 = vsyncadd [#allocation4], %s2370
      %s2373 = sshll.u32 [#allocation20], 4
      %s2374 = int_to_ptr.vmem [resolvable:$true] %s2373
      %2376 = dma.vmem_to_hbm [thread:$0]  %s2374, 32, %s61, [#allocation4]
    $region169: #{tpu_custom_call.1} parent=1 // pred_fallthru
      _
    // Predicated region
    $region170: #{tpu_custom_call.1} parent=1 // pred_check
      _
    $region171: #{tpu_custom_call.1} parent=1 // pred_check_branch
      %2378 = sbr.rel (0) target = $region173
    $region172: #{tpu_custom_call.1} parent=1 // pred_region
      %2379 = dma.done [#allocation4], 32
    $region173: #{tpu_custom_call.1} parent=1 // pred_fallthru
      _
    %2380 = vsyncpa [#allocation3], 1
    %2381 = vsyncpa [#allocation6], 1
    %2382 = vsyncpa [#allocation9], 1
    %2383 = vsyncpa [#allocation12], 1
    %2384 = vsyncpa [#allocation15], 1
    %2385 = vsyncpa [#allocation18], 1
    %2386 = vsyncpa [#allocation4], 1

</llo_original>
